<compile_context>
chip_gen: v7x
topology: tpu7x:2x2x1
jax: 0.10.0
libtpu: 0.0.40
codegen_flags: <defaults>
</compile_context>

<pallas_src>
import math

import jax
import jax.numpy as jnp
from jax.experimental import pallas as pl
from jax.experimental.pallas import tpu as pltpu

# ----------------------------- hyperparameters (hp) -----------------------------
HIDDEN = 32        # hp.hidden
HEADS = 4
HEAD_DIM = HIDDEN // HEADS
FF = 4 * HIDDEN
LAYERS = 2
VOCAB = 50
MAX_LEN = 16
NUM_LABELS = 2
SEQ = 8
BATCH = 2
LN_EPS = 1e-12

# small-parameter pack layout: one padded 128-lane row per vector
_ROW_EMB_G = 0
_ROW_EMB_B = 1
_ROWS_PER_LAYER = 8          # bqkv, bo, ln1g, ln1b, b1, b2, ln2g, ln2b
_ROW_LAYER_BASE = 2
_ROW_FC_B = _ROW_LAYER_BASE + _ROWS_PER_LAYER * LAYERS
_ROW_CLS_B = _ROW_FC_B + 1
NUM_SMALL_ROWS = _ROW_CLS_B + 1        # = 20


# ----------------------------- fused Pallas kernel -----------------------------
def _bert_fused_kernel(
    x_ref, posadd_ref, tok_emb_ref, small_ref,
    wqkv_ref, wo_ref, w1_ref, w2_ref, fcw_ref, clsw_ref,
    out_ref,
):
    M = BATCH * SEQ
    bf16 = jnp.bfloat16

    small = small_ref[...]                       # (NUM_SMALL_ROWS, 128) f32

    def srow(i, n):
        return small[i:i + 1, 0:n]               # (1, n) static slice, stays in vregs

    def layernorm(x, g, b):
        mean = jnp.mean(x, axis=-1, keepdims=True)
        xc = x - mean
        var = jnp.mean(xc * xc, axis=-1, keepdims=True)
        return xc * jax.lax.rsqrt(var + LN_EPS) * g + b

    def gelu(y):
        # tanh-approx GELU (BERT feed-forward activation), kept in f32
        c = math.sqrt(2.0 / math.pi)
        return 0.5 * y * (1.0 + jnp.tanh(c * (y + 0.044715 * y * y * y)))

    # ---- embeddings: token gather as a one-hot bf16 MXU matmul; the positional
    # gather was done in the wrapper and arrives as a dense (M, HIDDEN) add ----
    tok_oh = (x_ref[...] ==
              jax.lax.broadcasted_iota(jnp.int32, (M, VOCAB), 1)).astype(bf16)
    emb = (jnp.dot(tok_oh, tok_emb_ref[...], preferred_element_type=jnp.float32) +
           posadd_ref[...])
    h = layernorm(emb, srow(_ROW_EMB_G, HIDDEN), srow(_ROW_EMB_B, HIDDEN))

    scale = 1.0 / math.sqrt(HEAD_DIM)

    for l in range(LAYERS):                      # static unroll: LAYERS = 2
        base = _ROW_LAYER_BASE + l * _ROWS_PER_LAYER
        bqkv = srow(base + 0, 3 * HIDDEN)
        bo   = srow(base + 1, HIDDEN)
        ln1g = srow(base + 2, HIDDEN)
        ln1b = srow(base + 3, HIDDEN)
        b1   = srow(base + 4, FF)
        b2   = srow(base + 5, HIDDEN)
        ln2g = srow(base + 6, HIDDEN)
        ln2b = srow(base + 7, HIDDEN)

        # --- multi-head self-attention (fused QKV projection, bf16 MXU) ---
        qkv = jnp.dot(h.astype(bf16), wqkv_ref[l],
                      preferred_element_type=jnp.float32) + bqkv
        q16 = qkv[:, 0:HIDDEN].astype(bf16)
        k16 = qkv[:, HIDDEN:2 * HIDDEN].astype(bf16)
        v16 = qkv[:, 2 * HIDDEN:3 * HIDDEN].astype(bf16)

        # all B*HEADS score tiles first, stacked, then ONE softmax chain (f32)
        score_tiles = []
        for b in range(BATCH):
            r0 = b * SEQ
            for hh in range(HEADS):
                c0 = hh * HEAD_DIM
                qh = q16[r0:r0 + SEQ, c0:c0 + HEAD_DIM]
                kh = k16[r0:r0 + SEQ, c0:c0 + HEAD_DIM]
                # contract last dims directly: no explicit K transpose
                score_tiles.append(jax.lax.dot_general(
                    qh, kh, (((1,), (1,)), ((), ())),
                    preferred_element_type=jnp.float32))
        s_all = jnp.concatenate(score_tiles, axis=0) * scale   # (B*HEADS*SEQ, SEQ)
        s_all = s_all - jnp.max(s_all, axis=-1, keepdims=True)
        p_all = jnp.exp(s_all)
        p_all = p_all * pl.reciprocal(jnp.sum(p_all, axis=-1, keepdims=True),
                                      approx=True)
        p16 = p_all.astype(bf16)

        # per-head p @ v; head/batch merge happens as value concatenation
        # (stays in vregs — no scratch, no masked partial stores)
        ctx_rows = []
        idx = 0
        for b in range(BATCH):
            r0 = b * SEQ
            head_tiles = []
            for hh in range(HEADS):
                c0 = hh * HEAD_DIM
                ph = p16[idx * SEQ:(idx + 1) * SEQ, :]
                vh = v16[r0:r0 + SEQ, c0:c0 + HEAD_DIM]
                head_tiles.append(jnp.dot(ph, vh,
                                          preferred_element_type=jnp.float32))
                idx += 1
            ctx_rows.append(jnp.concatenate(head_tiles, axis=1))   # (SEQ, HIDDEN)
        ctx = jnp.concatenate(ctx_rows, axis=0)                    # (M, HIDDEN)

        attn_out = jnp.dot(ctx.astype(bf16), wo_ref[l],
                           preferred_element_type=jnp.float32) + bo
        h = layernorm(h + attn_out, ln1g, ln1b)          # dropout = identity

        # --- feed-forward ---
        ff = gelu(jnp.dot(h.astype(bf16), w1_ref[l],
                          preferred_element_type=jnp.float32) + b1)
        ff = jnp.dot(ff.astype(bf16), w2_ref[l],
                     preferred_element_type=jnp.float32) + b2
        h = layernorm(h + ff, ln2g, ln2b)                # dropout = identity

    # --- pooled [CLS] head: rows gathered as a value, tanh(fc), classifier ---
    pooled_in = jnp.concatenate(
        [h[b * SEQ:b * SEQ + 1, :] for b in range(BATCH)], axis=0)   # (B, HIDDEN)
    pooled = jnp.tanh(jnp.dot(pooled_in.astype(bf16), fcw_ref[...],
                              preferred_element_type=jnp.float32)
                      + srow(_ROW_FC_B, HIDDEN))
    logits = jnp.dot(pooled.astype(bf16), clsw_ref[...],
                     preferred_element_type=jnp.float32) + srow(_ROW_CLS_B, NUM_LABELS)
    out_ref[...] = logits.astype(out_ref.dtype)


def _full_spec(shape):
    zeros = (0,) * len(shape)
    return pl.BlockSpec(shape, lambda i, _z=zeros: _z)


def _pack_small_params(params):
    """Pack all tiny vectors (LN gammas/betas, biases) into one (20, 128) array."""
    def pad_row(v, width=128):
        v = jnp.asarray(v, jnp.float32).reshape(1, -1)
        return jnp.pad(v, ((0, 0), (0, width - v.shape[1])))

    rows = [pad_row(params["emb_ln_g"]), pad_row(params["emb_ln_b"])]
    for l in range(LAYERS):
        rows += [
            pad_row(params["bqkv"][l]), pad_row(params["bo"][l]),
            pad_row(params["ln1_g"][l]), pad_row(params["ln1_b"][l]),
            pad_row(params["b1"][l]), pad_row(params["b2"][l]),
            pad_row(params["ln2_g"][l]), pad_row(params["ln2_b"][l]),
        ]
    rows += [pad_row(params["fc_b"]), pad_row(params["cls_b"])]
    packed = jnp.concatenate(rows, axis=0)
    assert packed.shape == (NUM_SMALL_ROWS, 128)
    return packed


def bert_for_sa_forward(params, x_ids, pos_ids):
    B, S = x_ids.shape
    M = B * S
    bf16 = jnp.bfloat16

    x_flat = x_ids.reshape(M, 1).astype(jnp.int32)
    # positional gather done in the wrapper (pos is a plain index array); the
    # dense (M, HIDDEN) result is added in-kernel — no in-kernel one-hot matmul.
    pos_add = jnp.take(params["pos_embed"], pos_ids.reshape(M), axis=0
                       ).astype(jnp.float32)

    inputs = [
        x_flat,
        pos_add,
        params["tok_embed"].astype(bf16),
        _pack_small_params(params),
        params["wqkv"].astype(bf16),
        params["wo"].astype(bf16),
        params["w1"].astype(bf16),
        params["w2"].astype(bf16),
        params["fc_w"].astype(bf16),
        params["cls_w"].astype(bf16),
    ]

    return pl.pallas_call(
        _bert_fused_kernel,
        out_shape=jax.ShapeDtypeStruct((B, NUM_LABELS), jnp.float32),
        grid=(1,),
        in_specs=[_full_spec(a.shape) for a in inputs],
        out_specs=_full_spec((B, NUM_LABELS)),
        compiler_params=pltpu.CompilerParams(dimension_semantics=("arbitrary",)),
    )(*inputs)


# ----------------------------- parameter init -----------------------------
def _xavier_uniform(key, shape):
    fan_in, fan_out = shape[0], shape[1]
    a = math.sqrt(6.0 / (fan_in + fan_out))
    return jax.random.uniform(key, shape, jnp.float32, -a, a)


def init_params(key):
    keys = iter(jax.random.split(key, 8 + LAYERS * 16))
    p = {}
    p["tok_embed"] = 0.02 * jax.random.normal(next(keys), (VOCAB, HIDDEN), jnp.float32)
    p["pos_embed"] = 0.02 * jax.random.normal(next(keys), (MAX_LEN, HIDDEN), jnp.float32)
    p["emb_ln_g"] = jnp.ones((1, HIDDEN), jnp.float32)
    p["emb_ln_b"] = jnp.zeros((1, HIDDEN), jnp.float32)

    wqkv, bqkv, wo, bo = [], [], [], []
    ln1g, ln1b, w1, b1, w2, b2, ln2g, ln2b = [], [], [], [], [], [], [], []
    for _ in range(LAYERS):
        wq = _xavier_uniform(next(keys), (HIDDEN, HIDDEN))
        wk = _xavier_uniform(next(keys), (HIDDEN, HIDDEN))
        wv = _xavier_uniform(next(keys), (HIDDEN, HIDDEN))
        wqkv.append(jnp.concatenate([wq, wk, wv], axis=1))            # (H, 3H)
        bqkv.append(jnp.zeros((1, 3 * HIDDEN), jnp.float32))
        wo.append(_xavier_uniform(next(keys), (HIDDEN, HIDDEN)))
        bo.append(jnp.zeros((1, HIDDEN), jnp.float32))
        ln1g.append(jnp.ones((1, HIDDEN), jnp.float32))
        ln1b.append(jnp.zeros((1, HIDDEN), jnp.float32))
        w1.append(_xavier_uniform(next(keys), (HIDDEN, FF)))
        b1.append(jnp.zeros((1, FF), jnp.float32))
        w2.append(_xavier_uniform(next(keys), (FF, HIDDEN)))
        b2.append(jnp.zeros((1, HIDDEN), jnp.float32))
        ln2g.append(jnp.ones((1, HIDDEN), jnp.float32))
        ln2b.append(jnp.zeros((1, HIDDEN), jnp.float32))

    p["wqkv"] = jnp.stack(wqkv)
    p["bqkv"] = jnp.stack(bqkv)
    p["wo"] = jnp.stack(wo)
    p["bo"] = jnp.stack(bo)
    p["ln1_g"] = jnp.stack(ln1g)
    p["ln1_b"] = jnp.stack(ln1b)
    p["w1"] = jnp.stack(w1)
    p["b1"] = jnp.stack(b1)
    p["w2"] = jnp.stack(w2)
    p["b2"] = jnp.stack(b2)
    p["ln2_g"] = jnp.stack(ln2g)
    p["ln2_b"] = jnp.stack(ln2b)

    # pooler fc (hidden -> hidden) and classifier (hidden -> num_labels, xavier init)
    p["fc_w"] = _xavier_uniform(next(keys), (HIDDEN, HIDDEN))
    p["fc_b"] = jnp.zeros((1, HIDDEN), jnp.float32)
    p["cls_w"] = _xavier_uniform(next(keys), (HIDDEN, NUM_LABELS))
    p["cls_b"] = jnp.zeros((1, NUM_LABELS), jnp.float32)
    return p


# ----------------------------- main -----------------------------
if __name__ == "__main__":
    key = jax.random.PRNGKey(0)
    k_param, k_ids = jax.random.split(key)

    params = init_params(k_param)
    x_ids = jax.random.randint(k_ids, (BATCH, SEQ), 0, VOCAB, dtype=jnp.int32)
    pos_ids = jnp.broadcast_to(jnp.arange(SEQ, dtype=jnp.int32), (BATCH, SEQ))

    fwd = jax.jit(bert_for_sa_forward)
    logits = jax.block_until_ready(fwd(params, x_ids, pos_ids))

    assert logits.shape == (BATCH, NUM_LABELS) and logits.dtype == jnp.float32
    assert bool(jnp.all(jnp.isfinite(logits)))
    print("KERNEL_OK")
</pallas_src>

<mosaic_0001>
module attributes {stable_mosaic.version = 11 : i64} {
  func.func @_bert_fused_kernel(%arg0: i32, %arg1: memref<16x1xi32, #tpu.memory_space<vmem>>, %arg2: memref<16x32xf32, #tpu.memory_space<vmem>>, %arg3: memref<50x32xbf16, #tpu.memory_space<vmem>>, %arg4: memref<20x128xf32, #tpu.memory_space<vmem>>, %arg5: memref<2x32x96xbf16, #tpu.memory_space<vmem>>, %arg6: memref<2x32x32xbf16, #tpu.memory_space<vmem>>, %arg7: memref<2x32x128xbf16, #tpu.memory_space<vmem>>, %arg8: memref<2x128x32xbf16, #tpu.memory_space<vmem>>, %arg9: memref<32x32xbf16, #tpu.memory_space<vmem>>, %arg10: memref<32x2xbf16, #tpu.memory_space<vmem>>, %arg11: memref<2x2xf32, #tpu.memory_space<vmem>>) attributes {dimension_semantics = [#tpu.dimension_semantics<arbitrary>], iteration_bounds = array<i64: 1>, scalar_prefetch = 0 : i64, scratch_operands = 0 : i64, tpu.core_type = #tpu.core_type<tc>, window_params = [{pipeline_mode = #tpu.pipeline_mode<synchronous>, transform_indices = @transform_0, window_bounds = array<i64: 16, 1>}, {pipeline_mode = #tpu.pipeline_mode<synchronous>, transform_indices = @transform_1, window_bounds = array<i64: 16, 32>}, {pipeline_mode = #tpu.pipeline_mode<synchronous>, transform_indices = @transform_2, window_bounds = array<i64: 50, 32>}, {pipeline_mode = #tpu.pipeline_mode<synchronous>, transform_indices = @transform_3, window_bounds = array<i64: 20, 128>}, {pipeline_mode = #tpu.pipeline_mode<synchronous>, transform_indices = @transform_4, window_bounds = array<i64: 2, 32, 96>}, {pipeline_mode = #tpu.pipeline_mode<synchronous>, transform_indices = @transform_5, window_bounds = array<i64: 2, 32, 32>}, {pipeline_mode = #tpu.pipeline_mode<synchronous>, transform_indices = @transform_6, window_bounds = array<i64: 2, 32, 128>}, {pipeline_mode = #tpu.pipeline_mode<synchronous>, transform_indices = @transform_7, window_bounds = array<i64: 2, 128, 32>}, {pipeline_mode = #tpu.pipeline_mode<synchronous>, transform_indices = @transform_8, window_bounds = array<i64: 32, 32>}, {pipeline_mode = #tpu.pipeline_mode<synchronous>, transform_indices = @transform_9, window_bounds = array<i64: 32, 2>}, {pipeline_mode = #tpu.pipeline_mode<synchronous>, transform_indices = @transform_10, window_bounds = array<i64: 2, 2>}]} {
    %c0 = arith.constant 0 : index
    %c0_0 = arith.constant 0 : index
    %0 = vector.load %arg4[%c0, %c0_0] : memref<20x128xf32, #tpu.memory_space<vmem>>, vector<20x128xf32>
    %c0_1 = arith.constant 0 : index
    %c0_2 = arith.constant 0 : index
    %1 = vector.load %arg1[%c0_1, %c0_2] : memref<16x1xi32, #tpu.memory_space<vmem>>, vector<16x1xi32>
    %2 = tpu.iota {dimensions = array<i32: 1>} : vector<16x50xi32>
    %3 = vector.broadcast %1 : vector<16x1xi32> to vector<16x50xi32>
    %4 = arith.cmpi eq, %3, %2 : vector<16x50xi32>
    %5 = arith.extui %4 : vector<16x50xi1> to vector<16x50xi32>
    %6 = arith.sitofp %5 : vector<16x50xi32> to vector<16x50xf32>
    %7 = arith.truncf %6 : vector<16x50xf32> to vector<16x50xbf16>
    %c0_3 = arith.constant 0 : index
    %c0_4 = arith.constant 0 : index
    %8 = vector.load %arg3[%c0_3, %c0_4] : memref<50x32xbf16, #tpu.memory_space<vmem>>, vector<50x32xbf16>
    %cst = arith.constant dense<0.000000e+00> : vector<16x32xf32>
    %9 = tpu.matmul %7, %8, %cst {dimension_numbers = #tpu.dot_dimension_numbers<[1], [0], [0], [1], [0, 0, 1, 1], [], []>} : vector<16x50xbf16>, vector<50x32xbf16>, vector<16x32xf32> -> vector<16x32xf32>
    %c0_5 = arith.constant 0 : index
    %c0_6 = arith.constant 0 : index
    %10 = vector.load %arg2[%c0_5, %c0_6] : memref<16x32xf32, #tpu.memory_space<vmem>>, vector<16x32xf32>
    %11 = arith.addf %9, %10 : vector<16x32xf32>
    %12 = vector.extract_strided_slice %0 {offsets = [0, 0], sizes = [1, 32], strides = [1, 1]} : vector<20x128xf32> to vector<1x32xf32>
    %13 = vector.extract_strided_slice %0 {offsets = [1, 0], sizes = [1, 32], strides = [1, 1]} : vector<20x128xf32> to vector<1x32xf32>
    %cst_7 = arith.constant dense<0.000000e+00> : vector<16xf32>
    %14 = vector.multi_reduction <add>, %11, %cst_7 [1] : vector<16x32xf32> to vector<16xf32>
    %15 = vector.shape_cast %14 : vector<16xf32> to vector<16x1xf32>
    %cst_8 = arith.constant 3.200000e+01 : f32
    %16 = vector.broadcast %cst_8 : f32 to vector<16x1xf32>
    %17 = arith.divf %15, %16 : vector<16x1xf32>
    %18 = vector.broadcast %17 : vector<16x1xf32> to vector<16x32xf32>
    %19 = arith.subf %11, %18 : vector<16x32xf32>
    %20 = arith.mulf %19, %19 : vector<16x32xf32>
    %cst_9 = arith.constant dense<0.000000e+00> : vector<16xf32>
    %21 = vector.multi_reduction <add>, %20, %cst_9 [1] : vector<16x32xf32> to vector<16xf32>
    %22 = vector.shape_cast %21 : vector<16xf32> to vector<16x1xf32>
    %cst_10 = arith.constant 3.200000e+01 : f32
    %23 = vector.broadcast %cst_10 : f32 to vector<16x1xf32>
    %24 = arith.divf %22, %23 : vector<16x1xf32>
    %cst_11 = arith.constant 9.99999996E-13 : f32
    %25 = vector.broadcast %cst_11 : f32 to vector<16x1xf32>
    %26 = arith.addf %24, %25 : vector<16x1xf32>
    %27 = math.rsqrt %26 : vector<16x1xf32>
    %28 = vector.broadcast %27 : vector<16x1xf32> to vector<16x32xf32>
    %29 = arith.mulf %19, %28 : vector<16x32xf32>
    %30 = vector.broadcast %12 : vector<1x32xf32> to vector<16x32xf32>
    %31 = arith.mulf %29, %30 : vector<16x32xf32>
    %32 = vector.broadcast %13 : vector<1x32xf32> to vector<16x32xf32>
    %33 = arith.addf %31, %32 : vector<16x32xf32>
    %34 = vector.extract_strided_slice %0 {offsets = [2, 0], sizes = [1, 96], strides = [1, 1]} : vector<20x128xf32> to vector<1x96xf32>
    %35 = vector.extract_strided_slice %0 {offsets = [3, 0], sizes = [1, 32], strides = [1, 1]} : vector<20x128xf32> to vector<1x32xf32>
    %36 = vector.extract_strided_slice %0 {offsets = [4, 0], sizes = [1, 32], strides = [1, 1]} : vector<20x128xf32> to vector<1x32xf32>
    %37 = vector.extract_strided_slice %0 {offsets = [5, 0], sizes = [1, 32], strides = [1, 1]} : vector<20x128xf32> to vector<1x32xf32>
    %38 = vector.extract_strided_slice %0 {offsets = [6, 0], sizes = [1, 128], strides = [1, 1]} : vector<20x128xf32> to vector<1x128xf32>
    %39 = vector.extract_strided_slice %0 {offsets = [7, 0], sizes = [1, 32], strides = [1, 1]} : vector<20x128xf32> to vector<1x32xf32>
    %40 = vector.extract_strided_slice %0 {offsets = [8, 0], sizes = [1, 32], strides = [1, 1]} : vector<20x128xf32> to vector<1x32xf32>
    %41 = vector.extract_strided_slice %0 {offsets = [9, 0], sizes = [1, 32], strides = [1, 1]} : vector<20x128xf32> to vector<1x32xf32>
    %42 = arith.truncf %33 : vector<16x32xf32> to vector<16x32xbf16>
    %c0_12 = arith.constant 0 : index
    %c0_13 = arith.constant 0 : index
    %c0_14 = arith.constant 0 : index
    %43 = vector.load %arg5[%c0_12, %c0_13, %c0_14] : memref<2x32x96xbf16, #tpu.memory_space<vmem>>, vector<1x32x96xbf16>
    %44 = vector.shape_cast %43 : vector<1x32x96xbf16> to vector<32x96xbf16>
    %cst_15 = arith.constant dense<0.000000e+00> : vector<16x96xf32>
    %45 = tpu.matmul %42, %44, %cst_15 {dimension_numbers = #tpu.dot_dimension_numbers<[1], [0], [0], [1], [0, 0, 1, 1], [], []>} : vector<16x32xbf16>, vector<32x96xbf16>, vector<16x96xf32> -> vector<16x96xf32>
    %46 = vector.broadcast %34 : vector<1x96xf32> to vector<16x96xf32>
    %47 = arith.addf %45, %46 : vector<16x96xf32>
    %48 = vector.extract_strided_slice %47 {offsets = [0, 0], sizes = [16, 32], strides = [1, 1]} : vector<16x96xf32> to vector<16x32xf32>
    %49 = arith.truncf %48 : vector<16x32xf32> to vector<16x32xbf16>
    %50 = vector.extract_strided_slice %47 {offsets = [0, 32], sizes = [16, 32], strides = [1, 1]} : vector<16x96xf32> to vector<16x32xf32>
    %51 = arith.truncf %50 : vector<16x32xf32> to vector<16x32xbf16>
    %52 = vector.extract_strided_slice %47 {offsets = [0, 64], sizes = [16, 32], strides = [1, 1]} : vector<16x96xf32> to vector<16x32xf32>
    %53 = arith.truncf %52 : vector<16x32xf32> to vector<16x32xbf16>
    %54 = vector.extract_strided_slice %49 {offsets = [0, 0], sizes = [8, 8], strides = [1, 1]} : vector<16x32xbf16> to vector<8x8xbf16>
    %55 = vector.extract_strided_slice %51 {offsets = [0, 0], sizes = [8, 8], strides = [1, 1]} : vector<16x32xbf16> to vector<8x8xbf16>
    %cst_16 = arith.constant dense<0.000000e+00> : vector<8x8xf32>
    %56 = tpu.matmul %54, %55, %cst_16 {dimension_numbers = #tpu.dot_dimension_numbers<[1], [1], [0], [0], [0, 0, 1, 0], [], []>} : vector<8x8xbf16>, vector<8x8xbf16>, vector<8x8xf32> -> vector<8x8xf32>
    %57 = vector.extract_strided_slice %49 {offsets = [0, 8], sizes = [8, 8], strides = [1, 1]} : vector<16x32xbf16> to vector<8x8xbf16>
    %58 = vector.extract_strided_slice %51 {offsets = [0, 8], sizes = [8, 8], strides = [1, 1]} : vector<16x32xbf16> to vector<8x8xbf16>
    %cst_17 = arith.constant dense<0.000000e+00> : vector<8x8xf32>
    %59 = tpu.matmul %57, %58, %cst_17 {dimension_numbers = #tpu.dot_dimension_numbers<[1], [1], [0], [0], [0, 0, 1, 0], [], []>} : vector<8x8xbf16>, vector<8x8xbf16>, vector<8x8xf32> -> vector<8x8xf32>
    %60 = vector.extract_strided_slice %49 {offsets = [0, 16], sizes = [8, 8], strides = [1, 1]} : vector<16x32xbf16> to vector<8x8xbf16>
    %61 = vector.extract_strided_slice %51 {offsets = [0, 16], sizes = [8, 8], strides = [1, 1]} : vector<16x32xbf16> to vector<8x8xbf16>
    %cst_18 = arith.constant dense<0.000000e+00> : vector<8x8xf32>
    %62 = tpu.matmul %60, %61, %cst_18 {dimension_numbers = #tpu.dot_dimension_numbers<[1], [1], [0], [0], [0, 0, 1, 0], [], []>} : vector<8x8xbf16>, vector<8x8xbf16>, vector<8x8xf32> -> vector<8x8xf32>
    %63 = vector.extract_strided_slice %49 {offsets = [0, 24], sizes = [8, 8], strides = [1, 1]} : vector<16x32xbf16> to vector<8x8xbf16>
    %64 = vector.extract_strided_slice %51 {offsets = [0, 24], sizes = [8, 8], strides = [1, 1]} : vector<16x32xbf16> to vector<8x8xbf16>
    %cst_19 = arith.constant dense<0.000000e+00> : vector<8x8xf32>
    %65 = tpu.matmul %63, %64, %cst_19 {dimension_numbers = #tpu.dot_dimension_numbers<[1], [1], [0], [0], [0, 0, 1, 0], [], []>} : vector<8x8xbf16>, vector<8x8xbf16>, vector<8x8xf32> -> vector<8x8xf32>
    %66 = vector.extract_strided_slice %49 {offsets = [8, 0], sizes = [8, 8], strides = [1, 1]} : vector<16x32xbf16> to vector<8x8xbf16>
    %67 = vector.extract_strided_slice %51 {offsets = [8, 0], sizes = [8, 8], strides = [1, 1]} : vector<16x32xbf16> to vector<8x8xbf16>
    %cst_20 = arith.constant dense<0.000000e+00> : vector<8x8xf32>
    %68 = tpu.matmul %66, %67, %cst_20 {dimension_numbers = #tpu.dot_dimension_numbers<[1], [1], [0], [0], [0, 0, 1, 0], [], []>} : vector<8x8xbf16>, vector<8x8xbf16>, vector<8x8xf32> -> vector<8x8xf32>
    %69 = vector.extract_strided_slice %49 {offsets = [8, 8], sizes = [8, 8], strides = [1, 1]} : vector<16x32xbf16> to vector<8x8xbf16>
    %70 = vector.extract_strided_slice %51 {offsets = [8, 8], sizes = [8, 8], strides = [1, 1]} : vector<16x32xbf16> to vector<8x8xbf16>
    %cst_21 = arith.constant dense<0.000000e+00> : vector<8x8xf32>
    %71 = tpu.matmul %69, %70, %cst_21 {dimension_numbers = #tpu.dot_dimension_numbers<[1], [1], [0], [0], [0, 0, 1, 0], [], []>} : vector<8x8xbf16>, vector<8x8xbf16>, vector<8x8xf32> -> vector<8x8xf32>
    %72 = vector.extract_strided_slice %49 {offsets = [8, 16], sizes = [8, 8], strides = [1, 1]} : vector<16x32xbf16> to vector<8x8xbf16>
    %73 = vector.extract_strided_slice %51 {offsets = [8, 16], sizes = [8, 8], strides = [1, 1]} : vector<16x32xbf16> to vector<8x8xbf16>
    %cst_22 = arith.constant dense<0.000000e+00> : vector<8x8xf32>
    %74 = tpu.matmul %72, %73, %cst_22 {dimension_numbers = #tpu.dot_dimension_numbers<[1], [1], [0], [0], [0, 0, 1, 0], [], []>} : vector<8x8xbf16>, vector<8x8xbf16>, vector<8x8xf32> -> vector<8x8xf32>
    %75 = vector.extract_strided_slice %49 {offsets = [8, 24], sizes = [8, 8], strides = [1, 1]} : vector<16x32xbf16> to vector<8x8xbf16>
    %76 = vector.extract_strided_slice %51 {offsets = [8, 24], sizes = [8, 8], strides = [1, 1]} : vector<16x32xbf16> to vector<8x8xbf16>
    %cst_23 = arith.constant dense<0.000000e+00> : vector<8x8xf32>
    %77 = tpu.matmul %75, %76, %cst_23 {dimension_numbers = #tpu.dot_dimension_numbers<[1], [1], [0], [0], [0, 0, 1, 0], [], []>} : vector<8x8xbf16>, vector<8x8xbf16>, vector<8x8xf32> -> vector<8x8xf32>
    %78 = tpu.concatenate %56, %59, %62, %65, %68, %71, %74, %77 in 0 : vector<8x8xf32>, vector<8x8xf32>, vector<8x8xf32>, vector<8x8xf32>, vector<8x8xf32>, vector<8x8xf32>, vector<8x8xf32>, vector<8x8xf32> -> vector<64x8xf32>
    %cst_24 = arith.constant 0.353553385 : f32
    %79 = vector.broadcast %cst_24 : f32 to vector<64x8xf32>
    %80 = arith.mulf %78, %79 : vector<64x8xf32>
    %cst_25 = arith.constant dense<0xFF800000> : vector<64xf32>
    %81 = vector.multi_reduction <maximumf>, %80, %cst_25 [1] : vector<64x8xf32> to vector<64xf32>
    %82 = vector.shape_cast %81 : vector<64xf32> to vector<64x1xf32>
    %83 = vector.broadcast %82 : vector<64x1xf32> to vector<64x8xf32>
    %84 = arith.subf %80, %83 : vector<64x8xf32>
    %85 = math.exp %84 : vector<64x8xf32>
    %cst_26 = arith.constant dense<0.000000e+00> : vector<64xf32>
    %86 = vector.multi_reduction <add>, %85, %cst_26 [1] : vector<64x8xf32> to vector<64xf32>
    %87 = vector.shape_cast %86 : vector<64xf32> to vector<64x1xf32>
    %88 = tpu.reciprocal %87 {approx = true} : vector<64x1xf32> -> vector<64x1xf32>
    %89 = vector.broadcast %88 : vector<64x1xf32> to vector<64x8xf32>
    %90 = arith.mulf %85, %89 : vector<64x8xf32>
    %91 = arith.truncf %90 : vector<64x8xf32> to vector<64x8xbf16>
    %92 = vector.extract_strided_slice %91 {offsets = [0, 0], sizes = [8, 8], strides = [1, 1]} : vector<64x8xbf16> to vector<8x8xbf16>
    %93 = vector.extract_strided_slice %53 {offsets = [0, 0], sizes = [8, 8], strides = [1, 1]} : vector<16x32xbf16> to vector<8x8xbf16>
    %cst_27 = arith.constant dense<0.000000e+00> : vector<8x8xf32>
    %94 = tpu.matmul %92, %93, %cst_27 {dimension_numbers = #tpu.dot_dimension_numbers<[1], [0], [0], [1], [0, 0, 1, 1], [], []>} : vector<8x8xbf16>, vector<8x8xbf16>, vector<8x8xf32> -> vector<8x8xf32>
    %95 = vector.extract_strided_slice %91 {offsets = [8, 0], sizes = [8, 8], strides = [1, 1]} : vector<64x8xbf16> to vector<8x8xbf16>
    %96 = vector.extract_strided_slice %53 {offsets = [0, 8], sizes = [8, 8], strides = [1, 1]} : vector<16x32xbf16> to vector<8x8xbf16>
    %cst_28 = arith.constant dense<0.000000e+00> : vector<8x8xf32>
    %97 = tpu.matmul %95, %96, %cst_28 {dimension_numbers = #tpu.dot_dimension_numbers<[1], [0], [0], [1], [0, 0, 1, 1], [], []>} : vector<8x8xbf16>, vector<8x8xbf16>, vector<8x8xf32> -> vector<8x8xf32>
    %98 = vector.extract_strided_slice %91 {offsets = [16, 0], sizes = [8, 8], strides = [1, 1]} : vector<64x8xbf16> to vector<8x8xbf16>
    %99 = vector.extract_strided_slice %53 {offsets = [0, 16], sizes = [8, 8], strides = [1, 1]} : vector<16x32xbf16> to vector<8x8xbf16>
    %cst_29 = arith.constant dense<0.000000e+00> : vector<8x8xf32>
    %100 = tpu.matmul %98, %99, %cst_29 {dimension_numbers = #tpu.dot_dimension_numbers<[1], [0], [0], [1], [0, 0, 1, 1], [], []>} : vector<8x8xbf16>, vector<8x8xbf16>, vector<8x8xf32> -> vector<8x8xf32>
    %101 = vector.extract_strided_slice %91 {offsets = [24, 0], sizes = [8, 8], strides = [1, 1]} : vector<64x8xbf16> to vector<8x8xbf16>
    %102 = vector.extract_strided_slice %53 {offsets = [0, 24], sizes = [8, 8], strides = [1, 1]} : vector<16x32xbf16> to vector<8x8xbf16>
    %cst_30 = arith.constant dense<0.000000e+00> : vector<8x8xf32>
    %103 = tpu.matmul %101, %102, %cst_30 {dimension_numbers = #tpu.dot_dimension_numbers<[1], [0], [0], [1], [0, 0, 1, 1], [], []>} : vector<8x8xbf16>, vector<8x8xbf16>, vector<8x8xf32> -> vector<8x8xf32>
    %104 = tpu.concatenate %94, %97, %100, %103 in 1 : vector<8x8xf32>, vector<8x8xf32>, vector<8x8xf32>, vector<8x8xf32> -> vector<8x32xf32>
    %105 = vector.extract_strided_slice %91 {offsets = [32, 0], sizes = [8, 8], strides = [1, 1]} : vector<64x8xbf16> to vector<8x8xbf16>
    %106 = vector.extract_strided_slice %53 {offsets = [8, 0], sizes = [8, 8], strides = [1, 1]} : vector<16x32xbf16> to vector<8x8xbf16>
    %cst_31 = arith.constant dense<0.000000e+00> : vector<8x8xf32>
    %107 = tpu.matmul %105, %106, %cst_31 {dimension_numbers = #tpu.dot_dimension_numbers<[1], [0], [0], [1], [0, 0, 1, 1], [], []>} : vector<8x8xbf16>, vector<8x8xbf16>, vector<8x8xf32> -> vector<8x8xf32>
    %108 = vector.extract_strided_slice %91 {offsets = [40, 0], sizes = [8, 8], strides = [1, 1]} : vector<64x8xbf16> to vector<8x8xbf16>
    %109 = vector.extract_strided_slice %53 {offsets = [8, 8], sizes = [8, 8], strides = [1, 1]} : vector<16x32xbf16> to vector<8x8xbf16>
    %cst_32 = arith.constant dense<0.000000e+00> : vector<8x8xf32>
    %110 = tpu.matmul %108, %109, %cst_32 {dimension_numbers = #tpu.dot_dimension_numbers<[1], [0], [0], [1], [0, 0, 1, 1], [], []>} : vector<8x8xbf16>, vector<8x8xbf16>, vector<8x8xf32> -> vector<8x8xf32>
    %111 = vector.extract_strided_slice %91 {offsets = [48, 0], sizes = [8, 8], strides = [1, 1]} : vector<64x8xbf16> to vector<8x8xbf16>
    %112 = vector.extract_strided_slice %53 {offsets = [8, 16], sizes = [8, 8], strides = [1, 1]} : vector<16x32xbf16> to vector<8x8xbf16>
    %cst_33 = arith.constant dense<0.000000e+00> : vector<8x8xf32>
    %113 = tpu.matmul %111, %112, %cst_33 {dimension_numbers = #tpu.dot_dimension_numbers<[1], [0], [0], [1], [0, 0, 1, 1], [], []>} : vector<8x8xbf16>, vector<8x8xbf16>, vector<8x8xf32> -> vector<8x8xf32>
    %114 = vector.extract_strided_slice %91 {offsets = [56, 0], sizes = [8, 8], strides = [1, 1]} : vector<64x8xbf16> to vector<8x8xbf16>
    %115 = vector.extract_strided_slice %53 {offsets = [8, 24], sizes = [8, 8], strides = [1, 1]} : vector<16x32xbf16> to vector<8x8xbf16>
    %cst_34 = arith.constant dense<0.000000e+00> : vector<8x8xf32>
    %116 = tpu.matmul %114, %115, %cst_34 {dimension_numbers = #tpu.dot_dimension_numbers<[1], [0], [0], [1], [0, 0, 1, 1], [], []>} : vector<8x8xbf16>, vector<8x8xbf16>, vector<8x8xf32> -> vector<8x8xf32>
    %117 = tpu.concatenate %107, %110, %113, %116 in 1 : vector<8x8xf32>, vector<8x8xf32>, vector<8x8xf32>, vector<8x8xf32> -> vector<8x32xf32>
    %118 = tpu.concatenate %104, %117 in 0 : vector<8x32xf32>, vector<8x32xf32> -> vector<16x32xf32>
    %119 = arith.truncf %118 : vector<16x32xf32> to vector<16x32xbf16>
    %c0_35 = arith.constant 0 : index
    %c0_36 = arith.constant 0 : index
    %c0_37 = arith.constant 0 : index
    %120 = vector.load %arg6[%c0_35, %c0_36, %c0_37] : memref<2x32x32xbf16, #tpu.memory_space<vmem>>, vector<1x32x32xbf16>
    %121 = vector.shape_cast %120 : vector<1x32x32xbf16> to vector<32x32xbf16>
    %cst_38 = arith.constant dense<0.000000e+00> : vector<16x32xf32>
    %122 = tpu.matmul %119, %121, %cst_38 {dimension_numbers = #tpu.dot_dimension_numbers<[1], [0], [0], [1], [0, 0, 1, 1], [], []>} : vector<16x32xbf16>, vector<32x32xbf16>, vector<16x32xf32> -> vector<16x32xf32>
    %123 = vector.broadcast %35 : vector<1x32xf32> to vector<16x32xf32>
    %124 = arith.addf %122, %123 : vector<16x32xf32>
    %125 = arith.addf %33, %124 : vector<16x32xf32>
    %cst_39 = arith.constant dense<0.000000e+00> : vector<16xf32>
    %126 = vector.multi_reduction <add>, %125, %cst_39 [1] : vector<16x32xf32> to vector<16xf32>
    %127 = vector.shape_cast %126 : vector<16xf32> to vector<16x1xf32>
    %cst_40 = arith.constant 3.200000e+01 : f32
    %128 = vector.broadcast %cst_40 : f32 to vector<16x1xf32>
    %129 = arith.divf %127, %128 : vector<16x1xf32>
    %130 = vector.broadcast %129 : vector<16x1xf32> to vector<16x32xf32>
    %131 = arith.subf %125, %130 : vector<16x32xf32>
    %132 = arith.mulf %131, %131 : vector<16x32xf32>
    %cst_41 = arith.constant dense<0.000000e+00> : vector<16xf32>
    %133 = vector.multi_reduction <add>, %132, %cst_41 [1] : vector<16x32xf32> to vector<16xf32>
    %134 = vector.shape_cast %133 : vector<16xf32> to vector<16x1xf32>
    %cst_42 = arith.constant 3.200000e+01 : f32
    %135 = vector.broadcast %cst_42 : f32 to vector<16x1xf32>
    %136 = arith.divf %134, %135 : vector<16x1xf32>
    %cst_43 = arith.constant 9.99999996E-13 : f32
    %137 = vector.broadcast %cst_43 : f32 to vector<16x1xf32>
    %138 = arith.addf %136, %137 : vector<16x1xf32>
    %139 = math.rsqrt %138 : vector<16x1xf32>
    %140 = vector.broadcast %139 : vector<16x1xf32> to vector<16x32xf32>
    %141 = arith.mulf %131, %140 : vector<16x32xf32>
    %142 = vector.broadcast %36 : vector<1x32xf32> to vector<16x32xf32>
    %143 = arith.mulf %141, %142 : vector<16x32xf32>
    %144 = vector.broadcast %37 : vector<1x32xf32> to vector<16x32xf32>
    %145 = arith.addf %143, %144 : vector<16x32xf32>
    %146 = arith.truncf %145 : vector<16x32xf32> to vector<16x32xbf16>
    %c0_44 = arith.constant 0 : index
    %c0_45 = arith.constant 0 : index
    %c0_46 = arith.constant 0 : index
    %147 = vector.load %arg7[%c0_44, %c0_45, %c0_46] : memref<2x32x128xbf16, #tpu.memory_space<vmem>>, vector<1x32x128xbf16>
    %148 = vector.shape_cast %147 : vector<1x32x128xbf16> to vector<32x128xbf16>
    %cst_47 = arith.constant dense<0.000000e+00> : vector<16x128xf32>
    %149 = tpu.matmul %146, %148, %cst_47 {dimension_numbers = #tpu.dot_dimension_numbers<[1], [0], [0], [1], [0, 0, 1, 1], [], []>} : vector<16x32xbf16>, vector<32x128xbf16>, vector<16x128xf32> -> vector<16x128xf32>
    %150 = vector.broadcast %38 : vector<1x128xf32> to vector<16x128xf32>
    %151 = arith.addf %149, %150 : vector<16x128xf32>
    %cst_48 = arith.constant 5.000000e-01 : f32
    %152 = vector.broadcast %cst_48 : f32 to vector<16x128xf32>
    %153 = arith.mulf %152, %151 : vector<16x128xf32>
    %cst_49 = arith.constant 4.471500e-02 : f32
    %154 = vector.broadcast %cst_49 : f32 to vector<16x128xf32>
    %155 = arith.mulf %154, %151 : vector<16x128xf32>
    %156 = arith.mulf %155, %151 : vector<16x128xf32>
    %157 = arith.mulf %156, %151 : vector<16x128xf32>
    %158 = arith.addf %151, %157 : vector<16x128xf32>
    %cst_50 = arith.constant 0.797884583 : f32
    %159 = vector.broadcast %cst_50 : f32 to vector<16x128xf32>
    %160 = arith.mulf %159, %158 : vector<16x128xf32>
    %161 = math.tanh %160 : vector<16x128xf32>
    %cst_51 = arith.constant 1.000000e+00 : f32
    %162 = vector.broadcast %cst_51 : f32 to vector<16x128xf32>
    %163 = arith.addf %162, %161 : vector<16x128xf32>
    %164 = arith.mulf %153, %163 : vector<16x128xf32>
    %165 = arith.truncf %164 : vector<16x128xf32> to vector<16x128xbf16>
    %c0_52 = arith.constant 0 : index
    %c0_53 = arith.constant 0 : index
    %c0_54 = arith.constant 0 : index
    %166 = vector.load %arg8[%c0_52, %c0_53, %c0_54] : memref<2x128x32xbf16, #tpu.memory_space<vmem>>, vector<1x128x32xbf16>
    %167 = vector.shape_cast %166 : vector<1x128x32xbf16> to vector<128x32xbf16>
    %cst_55 = arith.constant dense<0.000000e+00> : vector<16x32xf32>
    %168 = tpu.matmul %165, %167, %cst_55 {dimension_numbers = #tpu.dot_dimension_numbers<[1], [0], [0], [1], [0, 0, 1, 1], [], []>} : vector<16x128xbf16>, vector<128x32xbf16>, vector<16x32xf32> -> vector<16x32xf32>
    %169 = vector.broadcast %39 : vector<1x32xf32> to vector<16x32xf32>
    %170 = arith.addf %168, %169 : vector<16x32xf32>
    %171 = arith.addf %145, %170 : vector<16x32xf32>
    %cst_56 = arith.constant dense<0.000000e+00> : vector<16xf32>
    %172 = vector.multi_reduction <add>, %171, %cst_56 [1] : vector<16x32xf32> to vector<16xf32>
    %173 = vector.shape_cast %172 : vector<16xf32> to vector<16x1xf32>
    %cst_57 = arith.constant 3.200000e+01 : f32
    %174 = vector.broadcast %cst_57 : f32 to vector<16x1xf32>
    %175 = arith.divf %173, %174 : vector<16x1xf32>
    %176 = vector.broadcast %175 : vector<16x1xf32> to vector<16x32xf32>
    %177 = arith.subf %171, %176 : vector<16x32xf32>
    %178 = arith.mulf %177, %177 : vector<16x32xf32>
    %cst_58 = arith.constant dense<0.000000e+00> : vector<16xf32>
    %179 = vector.multi_reduction <add>, %178, %cst_58 [1] : vector<16x32xf32> to vector<16xf32>
    %180 = vector.shape_cast %179 : vector<16xf32> to vector<16x1xf32>
    %cst_59 = arith.constant 3.200000e+01 : f32
    %181 = vector.broadcast %cst_59 : f32 to vector<16x1xf32>
    %182 = arith.divf %180, %181 : vector<16x1xf32>
    %cst_60 = arith.constant 9.99999996E-13 : f32
    %183 = vector.broadcast %cst_60 : f32 to vector<16x1xf32>
    %184 = arith.addf %182, %183 : vector<16x1xf32>
    %185 = math.rsqrt %184 : vector<16x1xf32>
    %186 = vector.broadcast %185 : vector<16x1xf32> to vector<16x32xf32>
    %187 = arith.mulf %177, %186 : vector<16x32xf32>
    %188 = vector.broadcast %40 : vector<1x32xf32> to vector<16x32xf32>
    %189 = arith.mulf %187, %188 : vector<16x32xf32>
    %190 = vector.broadcast %41 : vector<1x32xf32> to vector<16x32xf32>
    %191 = arith.addf %189, %190 : vector<16x32xf32>
    %192 = vector.extract_strided_slice %0 {offsets = [10, 0], sizes = [1, 96], strides = [1, 1]} : vector<20x128xf32> to vector<1x96xf32>
    %193 = vector.extract_strided_slice %0 {offsets = [11, 0], sizes = [1, 32], strides = [1, 1]} : vector<20x128xf32> to vector<1x32xf32>
    %194 = vector.extract_strided_slice %0 {offsets = [12, 0], sizes = [1, 32], strides = [1, 1]} : vector<20x128xf32> to vector<1x32xf32>
    %195 = vector.extract_strided_slice %0 {offsets = [13, 0], sizes = [1, 32], strides = [1, 1]} : vector<20x128xf32> to vector<1x32xf32>
    %196 = vector.extract_strided_slice %0 {offsets = [14, 0], sizes = [1, 128], strides = [1, 1]} : vector<20x128xf32> to vector<1x128xf32>
    %197 = vector.extract_strided_slice %0 {offsets = [15, 0], sizes = [1, 32], strides = [1, 1]} : vector<20x128xf32> to vector<1x32xf32>
    %198 = vector.extract_strided_slice %0 {offsets = [16, 0], sizes = [1, 32], strides = [1, 1]} : vector<20x128xf32> to vector<1x32xf32>
    %199 = vector.extract_strided_slice %0 {offsets = [17, 0], sizes = [1, 32], strides = [1, 1]} : vector<20x128xf32> to vector<1x32xf32>
    %200 = arith.truncf %191 : vector<16x32xf32> to vector<16x32xbf16>
    %c1 = arith.constant 1 : index
    %c0_61 = arith.constant 0 : index
    %c0_62 = arith.constant 0 : index
    %201 = vector.load %arg5[%c1, %c0_61, %c0_62] : memref<2x32x96xbf16, #tpu.memory_space<vmem>>, vector<1x32x96xbf16>
    %202 = vector.shape_cast %201 : vector<1x32x96xbf16> to vector<32x96xbf16>
    %cst_63 = arith.constant dense<0.000000e+00> : vector<16x96xf32>
    %203 = tpu.matmul %200, %202, %cst_63 {dimension_numbers = #tpu.dot_dimension_numbers<[1], [0], [0], [1], [0, 0, 1, 1], [], []>} : vector<16x32xbf16>, vector<32x96xbf16>, vector<16x96xf32> -> vector<16x96xf32>
    %204 = vector.broadcast %192 : vector<1x96xf32> to vector<16x96xf32>
    %205 = arith.addf %203, %204 : vector<16x96xf32>
    %206 = vector.extract_strided_slice %205 {offsets = [0, 0], sizes = [16, 32], strides = [1, 1]} : vector<16x96xf32> to vector<16x32xf32>
    %207 = arith.truncf %206 : vector<16x32xf32> to vector<16x32xbf16>
    %208 = vector.extract_strided_slice %205 {offsets = [0, 32], sizes = [16, 32], strides = [1, 1]} : vector<16x96xf32> to vector<16x32xf32>
    %209 = arith.truncf %208 : vector<16x32xf32> to vector<16x32xbf16>
    %210 = vector.extract_strided_slice %205 {offsets = [0, 64], sizes = [16, 32], strides = [1, 1]} : vector<16x96xf32> to vector<16x32xf32>
    %211 = arith.truncf %210 : vector<16x32xf32> to vector<16x32xbf16>
    %212 = vector.extract_strided_slice %207 {offsets = [0, 0], sizes = [8, 8], strides = [1, 1]} : vector<16x32xbf16> to vector<8x8xbf16>
    %213 = vector.extract_strided_slice %209 {offsets = [0, 0], sizes = [8, 8], strides = [1, 1]} : vector<16x32xbf16> to vector<8x8xbf16>
    %cst_64 = arith.constant dense<0.000000e+00> : vector<8x8xf32>
    %214 = tpu.matmul %212, %213, %cst_64 {dimension_numbers = #tpu.dot_dimension_numbers<[1], [1], [0], [0], [0, 0, 1, 0], [], []>} : vector<8x8xbf16>, vector<8x8xbf16>, vector<8x8xf32> -> vector<8x8xf32>
    %215 = vector.extract_strided_slice %207 {offsets = [0, 8], sizes = [8, 8], strides = [1, 1]} : vector<16x32xbf16> to vector<8x8xbf16>
    %216 = vector.extract_strided_slice %209 {offsets = [0, 8], sizes = [8, 8], strides = [1, 1]} : vector<16x32xbf16> to vector<8x8xbf16>
    %cst_65 = arith.constant dense<0.000000e+00> : vector<8x8xf32>
    %217 = tpu.matmul %215, %216, %cst_65 {dimension_numbers = #tpu.dot_dimension_numbers<[1], [1], [0], [0], [0, 0, 1, 0], [], []>} : vector<8x8xbf16>, vector<8x8xbf16>, vector<8x8xf32> -> vector<8x8xf32>
    %218 = vector.extract_strided_slice %207 {offsets = [0, 16], sizes = [8, 8], strides = [1, 1]} : vector<16x32xbf16> to vector<8x8xbf16>
    %219 = vector.extract_strided_slice %209 {offsets = [0, 16], sizes = [8, 8], strides = [1, 1]} : vector<16x32xbf16> to vector<8x8xbf16>
    %cst_66 = arith.constant dense<0.000000e+00> : vector<8x8xf32>
    %220 = tpu.matmul %218, %219, %cst_66 {dimension_numbers = #tpu.dot_dimension_numbers<[1], [1], [0], [0], [0, 0, 1, 0], [], []>} : vector<8x8xbf16>, vector<8x8xbf16>, vector<8x8xf32> -> vector<8x8xf32>
    %221 = vector.extract_strided_slice %207 {offsets = [0, 24], sizes = [8, 8], strides = [1, 1]} : vector<16x32xbf16> to vector<8x8xbf16>
    %222 = vector.extract_strided_slice %209 {offsets = [0, 24], sizes = [8, 8], strides = [1, 1]} : vector<16x32xbf16> to vector<8x8xbf16>
    %cst_67 = arith.constant dense<0.000000e+00> : vector<8x8xf32>
    %223 = tpu.matmul %221, %222, %cst_67 {dimension_numbers = #tpu.dot_dimension_numbers<[1], [1], [0], [0], [0, 0, 1, 0], [], []>} : vector<8x8xbf16>, vector<8x8xbf16>, vector<8x8xf32> -> vector<8x8xf32>
    %224 = vector.extract_strided_slice %207 {offsets = [8, 0], sizes = [8, 8], strides = [1, 1]} : vector<16x32xbf16> to vector<8x8xbf16>
    %225 = vector.extract_strided_slice %209 {offsets = [8, 0], sizes = [8, 8], strides = [1, 1]} : vector<16x32xbf16> to vector<8x8xbf16>
    %cst_68 = arith.constant dense<0.000000e+00> : vector<8x8xf32>
    %226 = tpu.matmul %224, %225, %cst_68 {dimension_numbers = #tpu.dot_dimension_numbers<[1], [1], [0], [0], [0, 0, 1, 0], [], []>} : vector<8x8xbf16>, vector<8x8xbf16>, vector<8x8xf32> -> vector<8x8xf32>
    %227 = vector.extract_strided_slice %207 {offsets = [8, 8], sizes = [8, 8], strides = [1, 1]} : vector<16x32xbf16> to vector<8x8xbf16>
    %228 = vector.extract_strided_slice %209 {offsets = [8, 8], sizes = [8, 8], strides = [1, 1]} : vector<16x32xbf16> to vector<8x8xbf16>
    %cst_69 = arith.constant dense<0.000000e+00> : vector<8x8xf32>
    %229 = tpu.matmul %227, %228, %cst_69 {dimension_numbers = #tpu.dot_dimension_numbers<[1], [1], [0], [0], [0, 0, 1, 0], [], []>} : vector<8x8xbf16>, vector<8x8xbf16>, vector<8x8xf32> -> vector<8x8xf32>
    %230 = vector.extract_strided_slice %207 {offsets = [8, 16], sizes = [8, 8], strides = [1, 1]} : vector<16x32xbf16> to vector<8x8xbf16>
    %231 = vector.extract_strided_slice %209 {offsets = [8, 16], sizes = [8, 8], strides = [1, 1]} : vector<16x32xbf16> to vector<8x8xbf16>
    %cst_70 = arith.constant dense<0.000000e+00> : vector<8x8xf32>
    %232 = tpu.matmul %230, %231, %cst_70 {dimension_numbers = #tpu.dot_dimension_numbers<[1], [1], [0], [0], [0, 0, 1, 0], [], []>} : vector<8x8xbf16>, vector<8x8xbf16>, vector<8x8xf32> -> vector<8x8xf32>
    %233 = vector.extract_strided_slice %207 {offsets = [8, 24], sizes = [8, 8], strides = [1, 1]} : vector<16x32xbf16> to vector<8x8xbf16>
    %234 = vector.extract_strided_slice %209 {offsets = [8, 24], sizes = [8, 8], strides = [1, 1]} : vector<16x32xbf16> to vector<8x8xbf16>
    %cst_71 = arith.constant dense<0.000000e+00> : vector<8x8xf32>
    %235 = tpu.matmul %233, %234, %cst_71 {dimension_numbers = #tpu.dot_dimension_numbers<[1], [1], [0], [0], [0, 0, 1, 0], [], []>} : vector<8x8xbf16>, vector<8x8xbf16>, vector<8x8xf32> -> vector<8x8xf32>
    %236 = tpu.concatenate %214, %217, %220, %223, %226, %229, %232, %235 in 0 : vector<8x8xf32>, vector<8x8xf32>, vector<8x8xf32>, vector<8x8xf32>, vector<8x8xf32>, vector<8x8xf32>, vector<8x8xf32>, vector<8x8xf32> -> vector<64x8xf32>
    %cst_72 = arith.constant 0.353553385 : f32
    %237 = vector.broadcast %cst_72 : f32 to vector<64x8xf32>
    %238 = arith.mulf %236, %237 : vector<64x8xf32>
    %cst_73 = arith.constant dense<0xFF800000> : vector<64xf32>
    %239 = vector.multi_reduction <maximumf>, %238, %cst_73 [1] : vector<64x8xf32> to vector<64xf32>
    %240 = vector.shape_cast %239 : vector<64xf32> to vector<64x1xf32>
    %241 = vector.broadcast %240 : vector<64x1xf32> to vector<64x8xf32>
    %242 = arith.subf %238, %241 : vector<64x8xf32>
    %243 = math.exp %242 : vector<64x8xf32>
    %cst_74 = arith.constant dense<0.000000e+00> : vector<64xf32>
    %244 = vector.multi_reduction <add>, %243, %cst_74 [1] : vector<64x8xf32> to vector<64xf32>
    %245 = vector.shape_cast %244 : vector<64xf32> to vector<64x1xf32>
    %246 = tpu.reciprocal %245 {approx = true} : vector<64x1xf32> -> vector<64x1xf32>
    %247 = vector.broadcast %246 : vector<64x1xf32> to vector<64x8xf32>
    %248 = arith.mulf %243, %247 : vector<64x8xf32>
    %249 = arith.truncf %248 : vector<64x8xf32> to vector<64x8xbf16>
    %250 = vector.extract_strided_slice %249 {offsets = [0, 0], sizes = [8, 8], strides = [1, 1]} : vector<64x8xbf16> to vector<8x8xbf16>
    %251 = vector.extract_strided_slice %211 {offsets = [0, 0], sizes = [8, 8], strides = [1, 1]} : vector<16x32xbf16> to vector<8x8xbf16>
    %cst_75 = arith.constant dense<0.000000e+00> : vector<8x8xf32>
    %252 = tpu.matmul %250, %251, %cst_75 {dimension_numbers = #tpu.dot_dimension_numbers<[1], [0], [0], [1], [0, 0, 1, 1], [], []>} : vector<8x8xbf16>, vector<8x8xbf16>, vector<8x8xf32> -> vector<8x8xf32>
    %253 = vector.extract_strided_slice %249 {offsets = [8, 0], sizes = [8, 8], strides = [1, 1]} : vector<64x8xbf16> to vector<8x8xbf16>
    %254 = vector.extract_strided_slice %211 {offsets = [0, 8], sizes = [8, 8], strides = [1, 1]} : vector<16x32xbf16> to vector<8x8xbf16>
    %cst_76 = arith.constant dense<0.000000e+00> : vector<8x8xf32>
    %255 = tpu.matmul %253, %254, %cst_76 {dimension_numbers = #tpu.dot_dimension_numbers<[1], [0], [0], [1], [0, 0, 1, 1], [], []>} : vector<8x8xbf16>, vector<8x8xbf16>, vector<8x8xf32> -> vector<8x8xf32>
    %256 = vector.extract_strided_slice %249 {offsets = [16, 0], sizes = [8, 8], strides = [1, 1]} : vector<64x8xbf16> to vector<8x8xbf16>
    %257 = vector.extract_strided_slice %211 {offsets = [0, 16], sizes = [8, 8], strides = [1, 1]} : vector<16x32xbf16> to vector<8x8xbf16>
    %cst_77 = arith.constant dense<0.000000e+00> : vector<8x8xf32>
    %258 = tpu.matmul %256, %257, %cst_77 {dimension_numbers = #tpu.dot_dimension_numbers<[1], [0], [0], [1], [0, 0, 1, 1], [], []>} : vector<8x8xbf16>, vector<8x8xbf16>, vector<8x8xf32> -> vector<8x8xf32>
    %259 = vector.extract_strided_slice %249 {offsets = [24, 0], sizes = [8, 8], strides = [1, 1]} : vector<64x8xbf16> to vector<8x8xbf16>
    %260 = vector.extract_strided_slice %211 {offsets = [0, 24], sizes = [8, 8], strides = [1, 1]} : vector<16x32xbf16> to vector<8x8xbf16>
    %cst_78 = arith.constant dense<0.000000e+00> : vector<8x8xf32>
    %261 = tpu.matmul %259, %260, %cst_78 {dimension_numbers = #tpu.dot_dimension_numbers<[1], [0], [0], [1], [0, 0, 1, 1], [], []>} : vector<8x8xbf16>, vector<8x8xbf16>, vector<8x8xf32> -> vector<8x8xf32>
    %262 = tpu.concatenate %252, %255, %258, %261 in 1 : vector<8x8xf32>, vector<8x8xf32>, vector<8x8xf32>, vector<8x8xf32> -> vector<8x32xf32>
    %263 = vector.extract_strided_slice %249 {offsets = [32, 0], sizes = [8, 8], strides = [1, 1]} : vector<64x8xbf16> to vector<8x8xbf16>
    %264 = vector.extract_strided_slice %211 {offsets = [8, 0], sizes = [8, 8], strides = [1, 1]} : vector<16x32xbf16> to vector<8x8xbf16>
    %cst_79 = arith.constant dense<0.000000e+00> : vector<8x8xf32>
    %265 = tpu.matmul %263, %264, %cst_79 {dimension_numbers = #tpu.dot_dimension_numbers<[1], [0], [0], [1], [0, 0, 1, 1], [], []>} : vector<8x8xbf16>, vector<8x8xbf16>, vector<8x8xf32> -> vector<8x8xf32>
    %266 = vector.extract_strided_slice %249 {offsets = [40, 0], sizes = [8, 8], strides = [1, 1]} : vector<64x8xbf16> to vector<8x8xbf16>
    %267 = vector.extract_strided_slice %211 {offsets = [8, 8], sizes = [8, 8], strides = [1, 1]} : vector<16x32xbf16> to vector<8x8xbf16>
    %cst_80 = arith.constant dense<0.000000e+00> : vector<8x8xf32>
    %268 = tpu.matmul %266, %267, %cst_80 {dimension_numbers = #tpu.dot_dimension_numbers<[1], [0], [0], [1], [0, 0, 1, 1], [], []>} : vector<8x8xbf16>, vector<8x8xbf16>, vector<8x8xf32> -> vector<8x8xf32>
    %269 = vector.extract_strided_slice %249 {offsets = [48, 0], sizes = [8, 8], strides = [1, 1]} : vector<64x8xbf16> to vector<8x8xbf16>
    %270 = vector.extract_strided_slice %211 {offsets = [8, 16], sizes = [8, 8], strides = [1, 1]} : vector<16x32xbf16> to vector<8x8xbf16>
    %cst_81 = arith.constant dense<0.000000e+00> : vector<8x8xf32>
    %271 = tpu.matmul %269, %270, %cst_81 {dimension_numbers = #tpu.dot_dimension_numbers<[1], [0], [0], [1], [0, 0, 1, 1], [], []>} : vector<8x8xbf16>, vector<8x8xbf16>, vector<8x8xf32> -> vector<8x8xf32>
    %272 = vector.extract_strided_slice %249 {offsets = [56, 0], sizes = [8, 8], strides = [1, 1]} : vector<64x8xbf16> to vector<8x8xbf16>
    %273 = vector.extract_strided_slice %211 {offsets = [8, 24], sizes = [8, 8], strides = [1, 1]} : vector<16x32xbf16> to vector<8x8xbf16>
    %cst_82 = arith.constant dense<0.000000e+00> : vector<8x8xf32>
    %274 = tpu.matmul %272, %273, %cst_82 {dimension_numbers = #tpu.dot_dimension_numbers<[1], [0], [0], [1], [0, 0, 1, 1], [], []>} : vector<8x8xbf16>, vector<8x8xbf16>, vector<8x8xf32> -> vector<8x8xf32>
    %275 = tpu.concatenate %265, %268, %271, %274 in 1 : vector<8x8xf32>, vector<8x8xf32>, vector<8x8xf32>, vector<8x8xf32> -> vector<8x32xf32>
    %276 = tpu.concatenate %262, %275 in 0 : vector<8x32xf32>, vector<8x32xf32> -> vector<16x32xf32>
    %277 = arith.truncf %276 : vector<16x32xf32> to vector<16x32xbf16>
    %c1_83 = arith.constant 1 : index
    %c0_84 = arith.constant 0 : index
    %c0_85 = arith.constant 0 : index
    %278 = vector.load %arg6[%c1_83, %c0_84, %c0_85] : memref<2x32x32xbf16, #tpu.memory_space<vmem>>, vector<1x32x32xbf16>
    %279 = vector.shape_cast %278 : vector<1x32x32xbf16> to vector<32x32xbf16>
    %cst_86 = arith.constant dense<0.000000e+00> : vector<16x32xf32>
    %280 = tpu.matmul %277, %279, %cst_86 {dimension_numbers = #tpu.dot_dimension_numbers<[1], [0], [0], [1], [0, 0, 1, 1], [], []>} : vector<16x32xbf16>, vector<32x32xbf16>, vector<16x32xf32> -> vector<16x32xf32>
    %281 = vector.broadcast %193 : vector<1x32xf32> to vector<16x32xf32>
    %282 = arith.addf %280, %281 : vector<16x32xf32>
    %283 = arith.addf %191, %282 : vector<16x32xf32>
    %cst_87 = arith.constant dense<0.000000e+00> : vector<16xf32>
    %284 = vector.multi_reduction <add>, %283, %cst_87 [1] : vector<16x32xf32> to vector<16xf32>
    %285 = vector.shape_cast %284 : vector<16xf32> to vector<16x1xf32>
    %cst_88 = arith.constant 3.200000e+01 : f32
    %286 = vector.broadcast %cst_88 : f32 to vector<16x1xf32>
    %287 = arith.divf %285, %286 : vector<16x1xf32>
    %288 = vector.broadcast %287 : vector<16x1xf32> to vector<16x32xf32>
    %289 = arith.subf %283, %288 : vector<16x32xf32>
    %290 = arith.mulf %289, %289 : vector<16x32xf32>
    %cst_89 = arith.constant dense<0.000000e+00> : vector<16xf32>
    %291 = vector.multi_reduction <add>, %290, %cst_89 [1] : vector<16x32xf32> to vector<16xf32>
    %292 = vector.shape_cast %291 : vector<16xf32> to vector<16x1xf32>
    %cst_90 = arith.constant 3.200000e+01 : f32
    %293 = vector.broadcast %cst_90 : f32 to vector<16x1xf32>
    %294 = arith.divf %292, %293 : vector<16x1xf32>
    %cst_91 = arith.constant 9.99999996E-13 : f32
    %295 = vector.broadcast %cst_91 : f32 to vector<16x1xf32>
    %296 = arith.addf %294, %295 : vector<16x1xf32>
    %297 = math.rsqrt %296 : vector<16x1xf32>
    %298 = vector.broadcast %297 : vector<16x1xf32> to vector<16x32xf32>
    %299 = arith.mulf %289, %298 : vector<16x32xf32>
    %300 = vector.broadcast %194 : vector<1x32xf32> to vector<16x32xf32>
    %301 = arith.mulf %299, %300 : vector<16x32xf32>
    %302 = vector.broadcast %195 : vector<1x32xf32> to vector<16x32xf32>
    %303 = arith.addf %301, %302 : vector<16x32xf32>
    %304 = arith.truncf %303 : vector<16x32xf32> to vector<16x32xbf16>
    %c1_92 = arith.constant 1 : index
    %c0_93 = arith.constant 0 : index
    %c0_94 = arith.constant 0 : index
    %305 = vector.load %arg7[%c1_92, %c0_93, %c0_94] : memref<2x32x128xbf16, #tpu.memory_space<vmem>>, vector<1x32x128xbf16>
    %306 = vector.shape_cast %305 : vector<1x32x128xbf16> to vector<32x128xbf16>
    %cst_95 = arith.constant dense<0.000000e+00> : vector<16x128xf32>
    %307 = tpu.matmul %304, %306, %cst_95 {dimension_numbers = #tpu.dot_dimension_numbers<[1], [0], [0], [1], [0, 0, 1, 1], [], []>} : vector<16x32xbf16>, vector<32x128xbf16>, vector<16x128xf32> -> vector<16x128xf32>
    %308 = vector.broadcast %196 : vector<1x128xf32> to vector<16x128xf32>
    %309 = arith.addf %307, %308 : vector<16x128xf32>
    %cst_96 = arith.constant 5.000000e-01 : f32
    %310 = vector.broadcast %cst_96 : f32 to vector<16x128xf32>
    %311 = arith.mulf %310, %309 : vector<16x128xf32>
    %cst_97 = arith.constant 4.471500e-02 : f32
    %312 = vector.broadcast %cst_97 : f32 to vector<16x128xf32>
    %313 = arith.mulf %312, %309 : vector<16x128xf32>
    %314 = arith.mulf %313, %309 : vector<16x128xf32>
    %315 = arith.mulf %314, %309 : vector<16x128xf32>
    %316 = arith.addf %309, %315 : vector<16x128xf32>
    %cst_98 = arith.constant 0.797884583 : f32
    %317 = vector.broadcast %cst_98 : f32 to vector<16x128xf32>
    %318 = arith.mulf %317, %316 : vector<16x128xf32>
    %319 = math.tanh %318 : vector<16x128xf32>
    %cst_99 = arith.constant 1.000000e+00 : f32
    %320 = vector.broadcast %cst_99 : f32 to vector<16x128xf32>
    %321 = arith.addf %320, %319 : vector<16x128xf32>
    %322 = arith.mulf %311, %321 : vector<16x128xf32>
    %323 = arith.truncf %322 : vector<16x128xf32> to vector<16x128xbf16>
    %c1_100 = arith.constant 1 : index
    %c0_101 = arith.constant 0 : index
    %c0_102 = arith.constant 0 : index
    %324 = vector.load %arg8[%c1_100, %c0_101, %c0_102] : memref<2x128x32xbf16, #tpu.memory_space<vmem>>, vector<1x128x32xbf16>
    %325 = vector.shape_cast %324 : vector<1x128x32xbf16> to vector<128x32xbf16>
    %cst_103 = arith.constant dense<0.000000e+00> : vector<16x32xf32>
    %326 = tpu.matmul %323, %325, %cst_103 {dimension_numbers = #tpu.dot_dimension_numbers<[1], [0], [0], [1], [0, 0, 1, 1], [], []>} : vector<16x128xbf16>, vector<128x32xbf16>, vector<16x32xf32> -> vector<16x32xf32>
    %327 = vector.broadcast %197 : vector<1x32xf32> to vector<16x32xf32>
    %328 = arith.addf %326, %327 : vector<16x32xf32>
    %329 = arith.addf %303, %328 : vector<16x32xf32>
    %cst_104 = arith.constant dense<0.000000e+00> : vector<16xf32>
    %330 = vector.multi_reduction <add>, %329, %cst_104 [1] : vector<16x32xf32> to vector<16xf32>
    %331 = vector.shape_cast %330 : vector<16xf32> to vector<16x1xf32>
    %cst_105 = arith.constant 3.200000e+01 : f32
    %332 = vector.broadcast %cst_105 : f32 to vector<16x1xf32>
    %333 = arith.divf %331, %332 : vector<16x1xf32>
    %334 = vector.broadcast %333 : vector<16x1xf32> to vector<16x32xf32>
    %335 = arith.subf %329, %334 : vector<16x32xf32>
    %336 = arith.mulf %335, %335 : vector<16x32xf32>
    %cst_106 = arith.constant dense<0.000000e+00> : vector<16xf32>
    %337 = vector.multi_reduction <add>, %336, %cst_106 [1] : vector<16x32xf32> to vector<16xf32>
    %338 = vector.shape_cast %337 : vector<16xf32> to vector<16x1xf32>
    %cst_107 = arith.constant 3.200000e+01 : f32
    %339 = vector.broadcast %cst_107 : f32 to vector<16x1xf32>
    %340 = arith.divf %338, %339 : vector<16x1xf32>
    %cst_108 = arith.constant 9.99999996E-13 : f32
    %341 = vector.broadcast %cst_108 : f32 to vector<16x1xf32>
    %342 = arith.addf %340, %341 : vector<16x1xf32>
    %343 = math.rsqrt %342 : vector<16x1xf32>
    %344 = vector.broadcast %343 : vector<16x1xf32> to vector<16x32xf32>
    %345 = arith.mulf %335, %344 : vector<16x32xf32>
    %346 = vector.broadcast %198 : vector<1x32xf32> to vector<16x32xf32>
    %347 = arith.mulf %345, %346 : vector<16x32xf32>
    %348 = vector.broadcast %199 : vector<1x32xf32> to vector<16x32xf32>
    %349 = arith.addf %347, %348 : vector<16x32xf32>
    %350 = vector.extract_strided_slice %349 {offsets = [0, 0], sizes = [1, 32], strides = [1, 1]} : vector<16x32xf32> to vector<1x32xf32>
    %351 = vector.extract_strided_slice %349 {offsets = [8, 0], sizes = [1, 32], strides = [1, 1]} : vector<16x32xf32> to vector<1x32xf32>
    %352 = tpu.concatenate %350, %351 in 0 : vector<1x32xf32>, vector<1x32xf32> -> vector<2x32xf32>
    %353 = arith.truncf %352 : vector<2x32xf32> to vector<2x32xbf16>
    %c0_109 = arith.constant 0 : index
    %c0_110 = arith.constant 0 : index
    %354 = vector.load %arg9[%c0_109, %c0_110] : memref<32x32xbf16, #tpu.memory_space<vmem>>, vector<32x32xbf16>
    %cst_111 = arith.constant dense<0.000000e+00> : vector<2x32xf32>
    %355 = tpu.matmul %353, %354, %cst_111 {dimension_numbers = #tpu.dot_dimension_numbers<[1], [0], [0], [1], [0, 0, 1, 1], [], []>} : vector<2x32xbf16>, vector<32x32xbf16>, vector<2x32xf32> -> vector<2x32xf32>
    %356 = vector.extract_strided_slice %0 {offsets = [18, 0], sizes = [1, 32], strides = [1, 1]} : vector<20x128xf32> to vector<1x32xf32>
    %357 = vector.broadcast %356 : vector<1x32xf32> to vector<2x32xf32>
    %358 = arith.addf %355, %357 : vector<2x32xf32>
    %359 = math.tanh %358 : vector<2x32xf32>
    %360 = arith.truncf %359 : vector<2x32xf32> to vector<2x32xbf16>
    %c0_112 = arith.constant 0 : index
    %c0_113 = arith.constant 0 : index
    %361 = vector.load %arg10[%c0_112, %c0_113] : memref<32x2xbf16, #tpu.memory_space<vmem>>, vector<32x2xbf16>
    %cst_114 = arith.constant dense<0.000000e+00> : vector<2x2xf32>
    %362 = tpu.matmul %360, %361, %cst_114 {dimension_numbers = #tpu.dot_dimension_numbers<[1], [0], [0], [1], [0, 0, 1, 1], [], []>} : vector<2x32xbf16>, vector<32x2xbf16>, vector<2x2xf32> -> vector<2x2xf32>
    %363 = vector.extract_strided_slice %0 {offsets = [19, 0], sizes = [1, 2], strides = [1, 1]} : vector<20x128xf32> to vector<1x2xf32>
    %364 = vector.broadcast %363 : vector<1x2xf32> to vector<2x2xf32>
    %365 = arith.addf %362, %364 : vector<2x2xf32>
    %c0_115 = arith.constant 0 : index
    %c0_116 = arith.constant 0 : index
    %366 = vector.load %arg11[%c0_115, %c0_116] : memref<2x2xf32, #tpu.memory_space<vmem>>, vector<2x2xf32>
    tpu.vector_store %arg11[%c0_115, %c0_116], %365 {strides = array<i32>} : memref<2x2xf32, #tpu.memory_space<vmem>>, vector<2x2xf32>,
    return
  }
  func.func @transform_0(%arg0: i32) -> (i32, i32) {
    %c0_i32 = arith.constant 0 : i32
    %c0_i32_0 = arith.constant 0 : i32
    %c0_i32_1 = arith.constant 0 : i32
    return %c0_i32, %c0_i32_0 : i32, i32
  }
  func.func @transform_1(%arg0: i32) -> (i32, i32) {
    %c0_i32 = arith.constant 0 : i32
    %c0_i32_0 = arith.constant 0 : i32
    %c0_i32_1 = arith.constant 0 : i32
    return %c0_i32, %c0_i32_0 : i32, i32
  }
  func.func @transform_2(%arg0: i32) -> (i32, i32) {
    %c0_i32 = arith.constant 0 : i32
    %c0_i32_0 = arith.constant 0 : i32
    %c0_i32_1 = arith.constant 0 : i32
    return %c0_i32, %c0_i32_0 : i32, i32
  }
  func.func @transform_3(%arg0: i32) -> (i32, i32) {
    %c0_i32 = arith.constant 0 : i32
    %c0_i32_0 = arith.constant 0 : i32
    %c0_i32_1 = arith.constant 0 : i32
    return %c0_i32, %c0_i32_0 : i32, i32
  }
  func.func @transform_4(%arg0: i32) -> (i32, i32, i32) {
    %c0_i32 = arith.constant 0 : i32
    %c0_i32_0 = arith.constant 0 : i32
    %c0_i32_1 = arith.constant 0 : i32
    %c0_i32_2 = arith.constant 0 : i32
    return %c0_i32, %c0_i32_0, %c0_i32_1 : i32, i32, i32
  }
  func.func @transform_5(%arg0: i32) -> (i32, i32, i32) {
    %c0_i32 = arith.constant 0 : i32
    %c0_i32_0 = arith.constant 0 : i32
    %c0_i32_1 = arith.constant 0 : i32
    %c0_i32_2 = arith.constant 0 : i32
    return %c0_i32, %c0_i32_0, %c0_i32_1 : i32, i32, i32
  }
  func.func @transform_6(%arg0: i32) -> (i32, i32, i32) {
    %c0_i32 = arith.constant 0 : i32
    %c0_i32_0 = arith.constant 0 : i32
    %c0_i32_1 = arith.constant 0 : i32
    %c0_i32_2 = arith.constant 0 : i32
    return %c0_i32, %c0_i32_0, %c0_i32_1 : i32, i32, i32
  }
  func.func @transform_7(%arg0: i32) -> (i32, i32, i32) {
    %c0_i32 = arith.constant 0 : i32
    %c0_i32_0 = arith.constant 0 : i32
    %c0_i32_1 = arith.constant 0 : i32
    %c0_i32_2 = arith.constant 0 : i32
    return %c0_i32, %c0_i32_0, %c0_i32_1 : i32, i32, i32
  }
  func.func @transform_8(%arg0: i32) -> (i32, i32) {
    %c0_i32 = arith.constant 0 : i32
    %c0_i32_0 = arith.constant 0 : i32
    %c0_i32_1 = arith.constant 0 : i32
    return %c0_i32, %c0_i32_0 : i32, i32
  }
  func.func @transform_9(%arg0: i32) -> (i32, i32) {
    %c0_i32 = arith.constant 0 : i32
    %c0_i32_0 = arith.constant 0 : i32
    %c0_i32_1 = arith.constant 0 : i32
    return %c0_i32, %c0_i32_0 : i32, i32
  }
  func.func @transform_10(%arg0: i32) -> (i32, i32) {
    %c0_i32 = arith.constant 0 : i32
    %c0_i32_0 = arith.constant 0 : i32
    %c0_i32_1 = arith.constant 0 : i32
    return %c0_i32, %c0_i32_0 : i32, i32
  }
}

</mosaic_0001>

<llo_original>
// kernel: bert_for_sa_forward.1
$region0: #{bert_for_sa_forward.1}
  #allocation0 [shape = 'u32[]', space=smem, size = 0x4, offset = 0x4, fixed_abs, tag = 'smem constant byte address 0x4 - core index']
  #allocation1 [shape = 'u32[144,128]{1,0:T(1,128)}', space=vmem, size = 0x12000, scoped, tag = 'internal scratch']
  %s0 = inlined_call_operand.vmem [shape: s32[16,1], index: 0, kind: input, shape index: {}]
  %s1 = inlined_call_operand.vmem [shape: f32[16,32], index: 1, kind: input, shape index: {}]
  %s2 = inlined_call_operand.vmem [shape: bf16[50,32], index: 2, kind: input, shape index: {}]
  %s3 = inlined_call_operand.vmem [shape: f32[20,128], index: 3, kind: input, shape index: {}]
  %s4 = inlined_call_operand.vmem [shape: bf16[2,32,96], index: 4, kind: input, shape index: {}]
  %s5 = inlined_call_operand.vmem [shape: bf16[2,32,32], index: 5, kind: input, shape index: {}]
  %s6 = inlined_call_operand.vmem [shape: bf16[2,32,128], index: 6, kind: input, shape index: {}]
  %s7 = inlined_call_operand.vmem [shape: bf16[2,128,32], index: 7, kind: input, shape index: {}]
  %s8 = inlined_call_operand.vmem [shape: bf16[32,32], index: 8, kind: input, shape index: {}]
  %s9 = inlined_call_operand.vmem [shape: bf16[32,2], index: 9, kind: input, shape index: {}]
  %s10 = inlined_call_operand.hbm [shape: f32[2,2], index: 10, kind: output, shape index: {}]
  %s11 = sld [smem:[#allocation0]]
  $region50: #{bert_for_sa_forward.1} parent=0
    _
  %s13 = ssub.s32 1, %s11
  %s14 = scalar_select 0, %s13, %s11
  $region1: #{bert_for_sa_forward.1} parent=0
    #allocation2 [shape = 'u8[1024]{0}', space=vmem, size = 0x400, scoped, tag = 'output window, operand 0, single buffered']
    #allocation3 [shape = 's32[1]{0}', space=sflag, size = 0x4, scoped, tag = 'scoped memory for bert_for_sa_forward.1']
    %15 = vsyncpa [#allocation3], 0
    // Predicated region
    $region2: #{bert_for_sa_forward.1} parent=1 // pred_check
      _
    $region3: #{bert_for_sa_forward.1} parent=1 // pred_check_branch
      %17 = sbr.rel (0) target = $region5
    $region4: #{bert_for_sa_forward.1} parent=1 // pred_region
      _
    $region5: #{bert_for_sa_forward.1} parent=1 // pred_fallthru
      _
    // Predicated region
    $region6: #{bert_for_sa_forward.1} parent=1 // pred_check
      _
    $region7: #{bert_for_sa_forward.1} parent=1 // pred_check_branch
      %19 = sbr.rel (0) target = $region9
    $region8: #{bert_for_sa_forward.1} parent=1 // pred_region
      _
    $region9: #{bert_for_sa_forward.1} parent=1 // pred_fallthru
      _
    // Predicated region
    $region10: #{bert_for_sa_forward.1} parent=1 // pred_check
      _
    $region11: #{bert_for_sa_forward.1} parent=1 // pred_check_branch
      %21 = sbr.rel (0) target = $region13
    $region12: #{bert_for_sa_forward.1} parent=1 // pred_region
      _
    $region13: #{bert_for_sa_forward.1} parent=1 // pred_fallthru
      _
    // Predicated region
    $region14: #{bert_for_sa_forward.1} parent=1 // pred_check
      _
    $region15: #{bert_for_sa_forward.1} parent=1 // pred_check_branch
      %23 = sbr.rel (0) target = $region17
    $region16: #{bert_for_sa_forward.1} parent=1 // pred_region
      _
    $region17: #{bert_for_sa_forward.1} parent=1 // pred_fallthru
      _
    // Predicated region
    $region18: #{bert_for_sa_forward.1} parent=1 // pred_check
      _
    $region19: #{bert_for_sa_forward.1} parent=1 // pred_check_branch
      %25 = sbr.rel (0) target = $region21
    $region20: #{bert_for_sa_forward.1} parent=1 // pred_region
      _
    $region21: #{bert_for_sa_forward.1} parent=1 // pred_fallthru
      _
    // Predicated region
    $region22: #{bert_for_sa_forward.1} parent=1 // pred_check
      _
    $region23: #{bert_for_sa_forward.1} parent=1 // pred_check_branch
      %27 = sbr.rel (0) target = $region25
    $region24: #{bert_for_sa_forward.1} parent=1 // pred_region
      _
    $region25: #{bert_for_sa_forward.1} parent=1 // pred_fallthru
      _
    // Predicated region
    $region26: #{bert_for_sa_forward.1} parent=1 // pred_check
      _
    $region27: #{bert_for_sa_forward.1} parent=1 // pred_check_branch
      %29 = sbr.rel (0) target = $region29
    $region28: #{bert_for_sa_forward.1} parent=1 // pred_region
      _
    $region29: #{bert_for_sa_forward.1} parent=1 // pred_fallthru
      _
    // Predicated region
    $region30: #{bert_for_sa_forward.1} parent=1 // pred_check
      _
    $region31: #{bert_for_sa_forward.1} parent=1 // pred_check_branch
      %31 = sbr.rel (0) target = $region33
    $region32: #{bert_for_sa_forward.1} parent=1 // pred_region
      _
    $region33: #{bert_for_sa_forward.1} parent=1 // pred_fallthru
      _
    // Predicated region
    $region34: #{bert_for_sa_forward.1} parent=1 // pred_check
      _
    $region35: #{bert_for_sa_forward.1} parent=1 // pred_check_branch
      %33 = sbr.rel (0) target = $region37
    $region36: #{bert_for_sa_forward.1} parent=1 // pred_region
      _
    $region37: #{bert_for_sa_forward.1} parent=1 // pred_fallthru
      _
    // Predicated region
    $region38: #{bert_for_sa_forward.1} parent=1 // pred_check
      _
    $region39: #{bert_for_sa_forward.1} parent=1 // pred_check_branch
      %35 = sbr.rel (0) target = $region41
    $region40: #{bert_for_sa_forward.1} parent=1 // pred_region
      _
    $region41: #{bert_for_sa_forward.1} parent=1 // pred_fallthru
      _
    %v37 = vld [vmem:[%s3] sm:$0xff]
    %v38 = vld [vmem:[%s3 + $0x8] sm:$0xff]
    %v39 = vld [vmem:[%s3 + $0x10] sm:$0xf]
    %v40 = vld [vmem:[%s0] sm:$0xff]
    %v41 = vld [vmem:[%s0 + $0x8] sm:$0xff]
    %v42 = vlaneseq
    %v43 = vand.u32 %v42, 127
    %44 = vset.pattern.permute.xlu0 0
    %45 = vperm.xlu0 %44, %v40
    %v46 = vpop.permute.xlu0 %45
    %47 = vset.pattern.permute.xlu0 0
    %48 = vperm.xlu0 %47, %v41
    %v49 = vpop.permute.xlu0 %48
    %vm50 = vcmp.eq.s32.totalorder %v46, %v43
    %vm51 = vcmp.eq.s32.totalorder %v49, %v43
    %v52 = vsel %vm50, 1, 0
    %v53 = vsel %vm51, 1, 0
    %v54 = vcvt.s32.f32 %v52
    %v55 = vcvt.s32.f32 %v53
    %v56 = vpack.c.bf16 %v55, %v54
    %v57 = vld [vmem:[%s2] sm:$0xf]
    %v58 = vld [vmem:[%s2 + $0x4] sm:$0xf]
    %v59 = vld [vmem:[%s2 + $0x8] sm:$0xf]
    %v60 = vld [vmem:[%s2 + $0xc] sm:$0xf]
    %v61 = vld [vmem:[%s2 + $0x10] sm:$0xf]
    %v62 = vld [vmem:[%s2 + $0x14] sm:$0xf]
    %v63 = vld [vmem:[%s2 + $0x18] sm:$0x1]
    %v64 = vld [vmem:[%s1] sm:$0xff]
    %v65 = vld [vmem:[%s1 + $0x8] sm:$0xff]
    %v73 = vunpack.c.l.b16 %v57
    %v74 = vunpack.c.l.b16 %v58
    %v75 = vunpack.c.l.b16 %v59
    %v76 = vunpack.c.l.b16 %v60
    %v77 = vunpack.c.l.b16 %v61
    %v78 = vunpack.c.l.b16 %v62
    %v79 = vunpack.c.l.b16 %v63
    %v80 = vpack.c.b16 %v74, %v73
    %v81 = vpack.c.b16 %v76, %v75
    %v82 = vpack.c.b16 %v78, %v77
    %v83 = vpack.c.b16 %v79, %v79
    %vm87 = vcmask 408576
    %v89 = vsel %vm87, %v56, 0
    %vm91 = vcmask 1040384
    %v93 = vsel %vm91, %v83, 0
    %95 = vmatprep.subr.bf16.mxu0 0
    %96 = vmatpush1.bf16.msra.mxu0 %v80
    %97 = vmatprep.subr.bf16.mxu0 0
    %98 = vmatpush1.bf16.msra.mxu0 %v81
    %99 = vmatprep.subr.bf16.mxu0 0
    %100 = vmatpush1.bf16.msra.mxu0 %v82
    %101 = vmatprep.subr.bf16.mxu0 0
    %102 = vmatpush1.bf16.msra.mxu0 %v93
    %103 = vmatprep.subr.bf16.mxu0 0
    %104 = vmatpush1.bf16.msra.mxu0 0
    %105 = vmatprep.subr.bf16.mxu0 0
    %106 = vmatpush1.bf16.msra.mxu0 0
    %107 = vmatprep.subr.bf16.mxu0 0
    %108 = vmatpush1.bf16.msra.mxu0 0
    %109 = vmatprep.subr.bf16.mxu0 0
    %110 = vmatpush1.bf16.msra.mxu0 0
    %111 = vmatprep.subr.bf16.mxu0 0
    %112 = vmatpush1.bf16.msra.mxu0 0
    %113 = vmatprep.subr.bf16.mxu0 0
    %114 = vmatpush1.bf16.msra.mxu0 0
    %115 = vmatprep.subr.bf16.mxu0 0
    %116 = vmatpush1.bf16.msra.mxu0 0
    %117 = vmatprep.subr.bf16.mxu0 0
    %118 = vmatpush1.bf16.msra.mxu0 0
    %119 = vmatprep.subr.bf16.mxu0 0
    %120 = vmatpush1.bf16.msra.mxu0 0
    %121 = vmatprep.subr.bf16.mxu0 0
    %122 = vmatpush1.bf16.msra.mxu0 0
    %123 = vmatprep.subr.bf16.mxu0 0
    %124 = vmatpush1.bf16.msra.mxu0 0
    %125 = vmatprep.subr.bf16.mxu0 0
    %126 = vmatpush1.bf16.msra.mxu0 0
    %127 = vmatprep.mubr.bf16.mxu0 0
    %128 = vmatmul.mubr.bf16.gmra.mrb[0].mxu0 %v89
    %v129 = vpop.f32.mrb[0].mxu0
    %v130 = vadd.f32 %v64, %v129
    %v131 = vpop.f32.mrb[0].mxu0
    %v132 = vpop.f32.mrb[0].mxu0
    %v133 = vadd.f32 %v65, %v132
    %v134 = vpop.f32.mrb[0].mxu0
    %135 = vdwg.mxu0
    %vm136 = vcmask 261120
    %v137 = vsel %vm136, %v130, 0.0
    %138 = vadd.xlane.f32.xlu0 %v137
    %v139 = vpop.xlane.xlu0 %138
    %v140 = vsel %vm136, %v133, 0.0
    %141 = vadd.xlane.f32.xlu0 %v140
    %v142 = vpop.xlane.xlu0 %141
    %v143 = vrcp.pop 32.0
    %v144 = vmul.f32 %v139, %v143
    %v145 = vmul.f32 %v142, %v143
    %v146 = vsub.f32 %v130, %v144
    %v147 = vsub.f32 %v133, %v145
    %v148 = vmul.f32 %v146, %v146
    %v149 = vmul.f32 %v147, %v147
    %v150 = vsel %vm136, %v148, 0.0
    %151 = vadd.xlane.f32.xlu0 %v150
    %v152 = vpop.xlane.xlu0 %151
    %v153 = vsel %vm136, %v149, 0.0
    %154 = vadd.xlane.f32.xlu0 %v153
    %v155 = vpop.xlane.xlu0 %154
    %v156 = vmul.f32 %v152, %v143
    %v157 = vmul.f32 %v155, %v143
    %v158 = vadd.f32 %v156, 1e-12
    %v159 = vadd.f32 %v157, 1e-12
    %v160 = vrsqrt.pop %v158
    %v161 = vrsqrt.pop %v159
    %v162 = vmul.f32 %v146, %v160
    %v163 = vmul.f32 %v147, %v161
    %v164 = vlaneseq
    %v165 = vshrl.u32 %v164, 7
    %v166 = vsub.s32 0, %v165
    %v167 = vrot.slane %v37, %v166
    %v168 = vmul.f32 %v162, %v167
    %v169 = vmul.f32 %v163, %v167
    %v170 = vlaneseq
    %v171 = vshrl.u32 %v170, 7
    %v172 = vsub.s32 1, %v171
    %v173 = vrot.slane %v37, %v172
    %v174 = vadd.f32 %v168, %v173
    %v175 = vadd.f32 %v169, %v173
    %v176 = vpack.c.bf16 %v175, %v174
    %v177 = vld [vmem:[%s4] sm:$0xf]
    %v178 = vld [vmem:[%s4 + $0x4] sm:$0xf]
    %v179 = vld [vmem:[%s4 + $0x8] sm:$0xf]
    %v180 = vld [vmem:[%s4 + $0xc] sm:$0xf]
    %v181 = vlaneseq
    %v182 = vshrl.u32 %v181, 7
    %v183 = vsub.s32 2, %v182
    %v184 = vrot.slane %v37, %v183
    %v189 = vunpack.c.l.b16 %v177
    %v190 = vunpack.c.l.b16 %v178
    %v191 = vunpack.c.l.b16 %v179
    %v192 = vunpack.c.l.b16 %v180
    %v193 = vpack.c.b16 %v190, %v189
    %v194 = vpack.c.b16 %v192, %v191
    %v198 = vsel %vm136, %v176, 0
    %200 = vmatprep.subr.bf16.mxu0 0
    %201 = vmatpush1.bf16.msra.mxu0 %v193
    %202 = vmatprep.subr.bf16.mxu0 0
    %203 = vmatpush1.bf16.msra.mxu0 %v194
    %204 = vmatprep.subr.bf16.mxu0 0
    %205 = vmatpush1.bf16.msra.mxu0 0
    %206 = vmatprep.subr.bf16.mxu0 0
    %207 = vmatpush1.bf16.msra.mxu0 0
    %208 = vmatprep.subr.bf16.mxu0 0
    %209 = vmatpush1.bf16.msra.mxu0 0
    %210 = vmatprep.subr.bf16.mxu0 0
    %211 = vmatpush1.bf16.msra.mxu0 0
    %212 = vmatprep.subr.bf16.mxu0 0
    %213 = vmatpush1.bf16.msra.mxu0 0
    %214 = vmatprep.subr.bf16.mxu0 0
    %215 = vmatpush1.bf16.msra.mxu0 0
    %216 = vmatprep.subr.bf16.mxu0 0
    %217 = vmatpush1.bf16.msra.mxu0 0
    %218 = vmatprep.subr.bf16.mxu0 0
    %219 = vmatpush1.bf16.msra.mxu0 0
    %220 = vmatprep.subr.bf16.mxu0 0
    %221 = vmatpush1.bf16.msra.mxu0 0
    %222 = vmatprep.subr.bf16.mxu0 0
    %223 = vmatpush1.bf16.msra.mxu0 0
    %224 = vmatprep.subr.bf16.mxu0 0
    %225 = vmatpush1.bf16.msra.mxu0 0
    %226 = vmatprep.subr.bf16.mxu0 0
    %227 = vmatpush1.bf16.msra.mxu0 0
    %228 = vmatprep.subr.bf16.mxu0 0
    %229 = vmatpush1.bf16.msra.mxu0 0
    %230 = vmatprep.subr.bf16.mxu0 0
    %231 = vmatpush1.bf16.msra.mxu0 0
    %232 = vmatprep.mubr.bf16.mxu0 0
    %233 = vmatmul.mubr.bf16.gmra.mrb[0].mxu0 %v198
    %v234 = vpop.f32.mrb[0].mxu0
    %v235 = vadd.f32 %v184, %v234
    %v236 = vpop.f32.mrb[0].mxu0
    %v237 = vpop.f32.mrb[0].mxu0
    %v238 = vadd.f32 %v184, %v237
    %v239 = vpop.f32.mrb[0].mxu0
    %240 = vdwg.mxu0
    %v241 = vpack.c.bf16 %v238, %v235
    %243 = vrot.lane.b32.xlu0 %v241, 96
    %v244 = vpop.permute.xlu0 %243
    %vm245 = vcmask 64512
    %v247 = vsel %vm245, %v241, 0
    %v250 = vsel %vm245, %v244, 0
    %252 = vmatprep.subr.bf16.mxu0 0
    %253 = vmatpush1.bf16.xpose.msra.mxu0 %v250
    %254 = vmatprep.subr.bf16.mxu0 0
    %255 = vmatpush1.bf16.xpose.msra.mxu0 0
    %256 = vmatprep.subr.bf16.mxu0 0
    %257 = vmatpush1.bf16.xpose.msra.mxu0 0
    %258 = vmatprep.subr.bf16.mxu0 0
    %259 = vmatpush1.bf16.xpose.msra.mxu0 0
    %260 = vmatprep.subr.bf16.mxu0 0
    %261 = vmatpush1.bf16.xpose.msra.mxu0 0
    %262 = vmatprep.subr.bf16.mxu0 0
    %263 = vmatpush1.bf16.xpose.msra.mxu0 0
    %264 = vmatprep.subr.bf16.mxu0 0
    %265 = vmatpush1.bf16.xpose.msra.mxu0 0
    %266 = vmatprep.subr.bf16.mxu0 0
    %267 = vmatpush1.bf16.xpose.msra.mxu0 0
    %268 = vmatprep.subr.bf16.mxu0 0
    %269 = vmatpush1.bf16.xpose.msra.mxu0 0
    %270 = vmatprep.subr.bf16.mxu0 0
    %271 = vmatpush1.bf16.xpose.msra.mxu0 0
    %272 = vmatprep.subr.bf16.mxu0 0
    %273 = vmatpush1.bf16.xpose.msra.mxu0 0
    %274 = vmatprep.subr.bf16.mxu0 0
    %275 = vmatpush1.bf16.xpose.msra.mxu0 0
    %276 = vmatprep.subr.bf16.mxu0 0
    %277 = vmatpush1.bf16.xpose.msra.mxu0 0
    %278 = vmatprep.subr.bf16.mxu0 0
    %279 = vmatpush1.bf16.xpose.msra.mxu0 0
    %280 = vmatprep.subr.bf16.mxu0 0
    %281 = vmatpush1.bf16.xpose.msra.mxu0 0
    %282 = vmatprep.subr.bf16.mxu0 0
    %283 = vmatpush1.bf16.xpose.msra.mxu0 0
    %284 = vmatprep.mubr.bf16.mxu0 0
    %285 = vmatmul.mubr.bf16.gmra.mrb[0].mxu0 %v247
    %v286 = vpop.f32.mrb[0].mxu0
    %v287 = vadd.f32 0.0, %v286
    %v288 = vpop.f32.mrb[0].mxu0
    %v289 = vpop.f32.mrb[0].mxu0
    %v290 = vpop.f32.mrb[0].mxu0
    %291 = vdwg.mxu0
    %292 = vrot.lane.b32.xlu0 %v241, 120
    %v293 = vpop.permute.xlu0 %292
    %294 = vrot.lane.b32.xlu0 %v241, 88
    %v295 = vpop.permute.xlu0 %294
    %v297 = vsel %vm245, %v293, 0
    %v300 = vsel %vm245, %v295, 0
    %302 = vmatprep.subr.bf16.mxu0 0
    %303 = vmatpush1.bf16.xpose.msra.mxu0 %v300
    %304 = vmatprep.subr.bf16.mxu0 0
    %305 = vmatpush1.bf16.xpose.msra.mxu0 0
    %306 = vmatprep.subr.bf16.mxu0 0
    %307 = vmatpush1.bf16.xpose.msra.mxu0 0
    %308 = vmatprep.subr.bf16.mxu0 0
    %309 = vmatpush1.bf16.xpose.msra.mxu0 0
    %310 = vmatprep.subr.bf16.mxu0 0
    %311 = vmatpush1.bf16.xpose.msra.mxu0 0
    %312 = vmatprep.subr.bf16.mxu0 0
    %313 = vmatpush1.bf16.xpose.msra.mxu0 0
    %314 = vmatprep.subr.bf16.mxu0 0
    %315 = vmatpush1.bf16.xpose.msra.mxu0 0
    %316 = vmatprep.subr.bf16.mxu0 0
    %317 = vmatpush1.bf16.xpose.msra.mxu0 0
    %318 = vmatprep.subr.bf16.mxu0 0
    %319 = vmatpush1.bf16.xpose.msra.mxu0 0
    %320 = vmatprep.subr.bf16.mxu0 0
    %321 = vmatpush1.bf16.xpose.msra.mxu0 0
    %322 = vmatprep.subr.bf16.mxu0 0
    %323 = vmatpush1.bf16.xpose.msra.mxu0 0
    %324 = vmatprep.subr.bf16.mxu0 0
    %325 = vmatpush1.bf16.xpose.msra.mxu0 0
    %326 = vmatprep.subr.bf16.mxu0 0
    %327 = vmatpush1.bf16.xpose.msra.mxu0 0
    %328 = vmatprep.subr.bf16.mxu0 0
    %329 = vmatpush1.bf16.xpose.msra.mxu0 0
    %330 = vmatprep.subr.bf16.mxu0 0
    %331 = vmatpush1.bf16.xpose.msra.mxu0 0
    %332 = vmatprep.subr.bf16.mxu0 0
    %333 = vmatpush1.bf16.xpose.msra.mxu0 0
    %334 = vmatprep.mubr.bf16.mxu0 0
    %335 = vmatmul.mubr.bf16.gmra.mrb[0].mxu0 %v297
    %v336 = vpop.f32.mrb[0].mxu0
    %v337 = vadd.f32 0.0, %v336
    %v338 = vpop.f32.mrb[0].mxu0
    %v339 = vpop.f32.mrb[0].mxu0
    %v340 = vpop.f32.mrb[0].mxu0
    %341 = vdwg.mxu0
    %342 = vrot.lane.b32.xlu0 %v241, 112
    %v343 = vpop.permute.xlu0 %342
    %344 = vrot.lane.b32.xlu0 %v241, 80
    %v345 = vpop.permute.xlu0 %344
    %v347 = vsel %vm245, %v343, 0
    %v350 = vsel %vm245, %v345, 0
    %352 = vmatprep.subr.bf16.mxu0 0
    %353 = vmatpush1.bf16.xpose.msra.mxu0 %v350
    %354 = vmatprep.subr.bf16.mxu0 0
    %355 = vmatpush1.bf16.xpose.msra.mxu0 0
    %356 = vmatprep.subr.bf16.mxu0 0
    %357 = vmatpush1.bf16.xpose.msra.mxu0 0
    %358 = vmatprep.subr.bf16.mxu0 0
    %359 = vmatpush1.bf16.xpose.msra.mxu0 0
    %360 = vmatprep.subr.bf16.mxu0 0
    %361 = vmatpush1.bf16.xpose.msra.mxu0 0
    %362 = vmatprep.subr.bf16.mxu0 0
    %363 = vmatpush1.bf16.xpose.msra.mxu0 0
    %364 = vmatprep.subr.bf16.mxu0 0
    %365 = vmatpush1.bf16.xpose.msra.mxu0 0
    %366 = vmatprep.subr.bf16.mxu0 0
    %367 = vmatpush1.bf16.xpose.msra.mxu0 0
    %368 = vmatprep.subr.bf16.mxu0 0
    %369 = vmatpush1.bf16.xpose.msra.mxu0 0
    %370 = vmatprep.subr.bf16.mxu0 0
    %371 = vmatpush1.bf16.xpose.msra.mxu0 0
    %372 = vmatprep.subr.bf16.mxu0 0
    %373 = vmatpush1.bf16.xpose.msra.mxu0 0
    %374 = vmatprep.subr.bf16.mxu0 0
    %375 = vmatpush1.bf16.xpose.msra.mxu0 0
    %376 = vmatprep.subr.bf16.mxu0 0
    %377 = vmatpush1.bf16.xpose.msra.mxu0 0
    %378 = vmatprep.subr.bf16.mxu0 0
    %379 = vmatpush1.bf16.xpose.msra.mxu0 0
    %380 = vmatprep.subr.bf16.mxu0 0
    %381 = vmatpush1.bf16.xpose.msra.mxu0 0
    %382 = vmatprep.subr.bf16.mxu0 0
    %383 = vmatpush1.bf16.xpose.msra.mxu0 0
    %384 = vmatprep.mubr.bf16.mxu0 0
    %385 = vmatmul.mubr.bf16.gmra.mrb[0].mxu0 %v347
    %v386 = vpop.f32.mrb[0].mxu0
    %v387 = vadd.f32 0.0, %v386
    %v388 = vpop.f32.mrb[0].mxu0
    %v389 = vpop.f32.mrb[0].mxu0
    %v390 = vpop.f32.mrb[0].mxu0
    %391 = vdwg.mxu0
    %392 = vrot.lane.b32.xlu0 %v241, 104
    %v393 = vpop.permute.xlu0 %392
    %394 = vrot.lane.b32.xlu0 %v241, 72
    %v395 = vpop.permute.xlu0 %394
    %v397 = vsel %vm245, %v393, 0
    %v400 = vsel %vm245, %v395, 0
    %402 = vmatprep.subr.bf16.mxu0 0
    %403 = vmatpush1.bf16.xpose.msra.mxu0 %v400
    %404 = vmatprep.subr.bf16.mxu0 0
    %405 = vmatpush1.bf16.xpose.msra.mxu0 0
    %406 = vmatprep.subr.bf16.mxu0 0
    %407 = vmatpush1.bf16.xpose.msra.mxu0 0
    %408 = vmatprep.subr.bf16.mxu0 0
    %409 = vmatpush1.bf16.xpose.msra.mxu0 0
    %410 = vmatprep.subr.bf16.mxu0 0
    %411 = vmatpush1.bf16.xpose.msra.mxu0 0
    %412 = vmatprep.subr.bf16.mxu0 0
    %413 = vmatpush1.bf16.xpose.msra.mxu0 0
    %414 = vmatprep.subr.bf16.mxu0 0
    %415 = vmatpush1.bf16.xpose.msra.mxu0 0
    %416 = vmatprep.subr.bf16.mxu0 0
    %417 = vmatpush1.bf16.xpose.msra.mxu0 0
    %418 = vmatprep.subr.bf16.mxu0 0
    %419 = vmatpush1.bf16.xpose.msra.mxu0 0
    %420 = vmatprep.subr.bf16.mxu0 0
    %421 = vmatpush1.bf16.xpose.msra.mxu0 0
    %422 = vmatprep.subr.bf16.mxu0 0
    %423 = vmatpush1.bf16.xpose.msra.mxu0 0
    %424 = vmatprep.subr.bf16.mxu0 0
    %425 = vmatpush1.bf16.xpose.msra.mxu0 0
    %426 = vmatprep.subr.bf16.mxu0 0
    %427 = vmatpush1.bf16.xpose.msra.mxu0 0
    %428 = vmatprep.subr.bf16.mxu0 0
    %429 = vmatpush1.bf16.xpose.msra.mxu0 0
    %430 = vmatprep.subr.bf16.mxu0 0
    %431 = vmatpush1.bf16.xpose.msra.mxu0 0
    %432 = vmatprep.subr.bf16.mxu0 0
    %433 = vmatpush1.bf16.xpose.msra.mxu0 0
    %434 = vmatprep.mubr.bf16.mxu0 0
    %435 = vmatmul.mubr.bf16.gmra.mrb[0].mxu0 %v397
    %v436 = vpop.f32.mrb[0].mxu0
    %v437 = vadd.f32 0.0, %v436
    %v438 = vpop.f32.mrb[0].mxu0
    %v439 = vpop.f32.mrb[0].mxu0
    %v440 = vpop.f32.mrb[0].mxu0
    %441 = vdwg.mxu0
    %v442 = vrot.slane %v241, 4
    %443 = vrot.lane.b32.xlu0 %v442, 96
    %v444 = vpop.permute.xlu0 %443
    %v446 = vsel %vm245, %v442, 0
    %v449 = vsel %vm245, %v444, 0
    %451 = vmatprep.subr.bf16.mxu0 0
    %452 = vmatpush1.bf16.xpose.msra.mxu0 %v449
    %453 = vmatprep.subr.bf16.mxu0 0
    %454 = vmatpush1.bf16.xpose.msra.mxu0 0
    %455 = vmatprep.subr.bf16.mxu0 0
    %456 = vmatpush1.bf16.xpose.msra.mxu0 0
    %457 = vmatprep.subr.bf16.mxu0 0
    %458 = vmatpush1.bf16.xpose.msra.mxu0 0
    %459 = vmatprep.subr.bf16.mxu0 0
    %460 = vmatpush1.bf16.xpose.msra.mxu0 0
    %461 = vmatprep.subr.bf16.mxu0 0
    %462 = vmatpush1.bf16.xpose.msra.mxu0 0
    %463 = vmatprep.subr.bf16.mxu0 0
    %464 = vmatpush1.bf16.xpose.msra.mxu0 0
    %465 = vmatprep.subr.bf16.mxu0 0
    %466 = vmatpush1.bf16.xpose.msra.mxu0 0
    %467 = vmatprep.subr.bf16.mxu0 0
    %468 = vmatpush1.bf16.xpose.msra.mxu0 0
    %469 = vmatprep.subr.bf16.mxu0 0
    %470 = vmatpush1.bf16.xpose.msra.mxu0 0
    %471 = vmatprep.subr.bf16.mxu0 0
    %472 = vmatpush1.bf16.xpose.msra.mxu0 0
    %473 = vmatprep.subr.bf16.mxu0 0
    %474 = vmatpush1.bf16.xpose.msra.mxu0 0
    %475 = vmatprep.subr.bf16.mxu0 0
    %476 = vmatpush1.bf16.xpose.msra.mxu0 0
    %477 = vmatprep.subr.bf16.mxu0 0
    %478 = vmatpush1.bf16.xpose.msra.mxu0 0
    %479 = vmatprep.subr.bf16.mxu0 0
    %480 = vmatpush1.bf16.xpose.msra.mxu0 0
    %481 = vmatprep.subr.bf16.mxu0 0
    %482 = vmatpush1.bf16.xpose.msra.mxu0 0
    %483 = vmatprep.mubr.bf16.mxu0 0
    %484 = vmatmul.mubr.bf16.gmra.mrb[0].mxu0 %v446
    %v485 = vpop.f32.mrb[0].mxu0
    %v486 = vadd.f32 0.0, %v485
    %v487 = vpop.f32.mrb[0].mxu0
    %v488 = vpop.f32.mrb[0].mxu0
    %v489 = vpop.f32.mrb[0].mxu0
    %490 = vdwg.mxu0
    %491 = vrot.lane.b32.xlu0 %v442, 120
    %v492 = vpop.permute.xlu0 %491
    %493 = vrot.lane.b32.xlu0 %v442, 88
    %v494 = vpop.permute.xlu0 %493
    %v496 = vsel %vm245, %v492, 0
    %v499 = vsel %vm245, %v494, 0
    %501 = vmatprep.subr.bf16.mxu0 0
    %502 = vmatpush1.bf16.xpose.msra.mxu0 %v499
    %503 = vmatprep.subr.bf16.mxu0 0
    %504 = vmatpush1.bf16.xpose.msra.mxu0 0
    %505 = vmatprep.subr.bf16.mxu0 0
    %506 = vmatpush1.bf16.xpose.msra.mxu0 0
    %507 = vmatprep.subr.bf16.mxu0 0
    %508 = vmatpush1.bf16.xpose.msra.mxu0 0
    %509 = vmatprep.subr.bf16.mxu0 0
    %510 = vmatpush1.bf16.xpose.msra.mxu0 0
    %511 = vmatprep.subr.bf16.mxu0 0
    %512 = vmatpush1.bf16.xpose.msra.mxu0 0
    %513 = vmatprep.subr.bf16.mxu0 0
    %514 = vmatpush1.bf16.xpose.msra.mxu0 0
    %515 = vmatprep.subr.bf16.mxu0 0
    %516 = vmatpush1.bf16.xpose.msra.mxu0 0
    %517 = vmatprep.subr.bf16.mxu0 0
    %518 = vmatpush1.bf16.xpose.msra.mxu0 0
    %519 = vmatprep.subr.bf16.mxu0 0
    %520 = vmatpush1.bf16.xpose.msra.mxu0 0
    %521 = vmatprep.subr.bf16.mxu0 0
    %522 = vmatpush1.bf16.xpose.msra.mxu0 0
    %523 = vmatprep.subr.bf16.mxu0 0
    %524 = vmatpush1.bf16.xpose.msra.mxu0 0
    %525 = vmatprep.subr.bf16.mxu0 0
    %526 = vmatpush1.bf16.xpose.msra.mxu0 0
    %527 = vmatprep.subr.bf16.mxu0 0
    %528 = vmatpush1.bf16.xpose.msra.mxu0 0
    %529 = vmatprep.subr.bf16.mxu0 0
    %530 = vmatpush1.bf16.xpose.msra.mxu0 0
    %531 = vmatprep.subr.bf16.mxu0 0
    %532 = vmatpush1.bf16.xpose.msra.mxu0 0
    %533 = vmatprep.mubr.bf16.mxu0 0
    %534 = vmatmul.mubr.bf16.gmra.mrb[0].mxu0 %v496
    %v535 = vpop.f32.mrb[0].mxu0
    %v536 = vadd.f32 0.0, %v535
    %v537 = vpop.f32.mrb[0].mxu0
    %v538 = vpop.f32.mrb[0].mxu0
    %v539 = vpop.f32.mrb[0].mxu0
    %540 = vdwg.mxu0
    %541 = vrot.lane.b32.xlu0 %v442, 112
    %v542 = vpop.permute.xlu0 %541
    %543 = vrot.lane.b32.xlu0 %v442, 80
    %v544 = vpop.permute.xlu0 %543
    %v546 = vsel %vm245, %v542, 0
    %v549 = vsel %vm245, %v544, 0
    %551 = vmatprep.subr.bf16.mxu0 0
    %552 = vmatpush1.bf16.xpose.msra.mxu0 %v549
    %553 = vmatprep.subr.bf16.mxu0 0
    %554 = vmatpush1.bf16.xpose.msra.mxu0 0
    %555 = vmatprep.subr.bf16.mxu0 0
    %556 = vmatpush1.bf16.xpose.msra.mxu0 0
    %557 = vmatprep.subr.bf16.mxu0 0
    %558 = vmatpush1.bf16.xpose.msra.mxu0 0
    %559 = vmatprep.subr.bf16.mxu0 0
    %560 = vmatpush1.bf16.xpose.msra.mxu0 0
    %561 = vmatprep.subr.bf16.mxu0 0
    %562 = vmatpush1.bf16.xpose.msra.mxu0 0
    %563 = vmatprep.subr.bf16.mxu0 0
    %564 = vmatpush1.bf16.xpose.msra.mxu0 0
    %565 = vmatprep.subr.bf16.mxu0 0
    %566 = vmatpush1.bf16.xpose.msra.mxu0 0
    %567 = vmatprep.subr.bf16.mxu0 0
    %568 = vmatpush1.bf16.xpose.msra.mxu0 0
    %569 = vmatprep.subr.bf16.mxu0 0
    %570 = vmatpush1.bf16.xpose.msra.mxu0 0
    %571 = vmatprep.subr.bf16.mxu0 0
    %572 = vmatpush1.bf16.xpose.msra.mxu0 0
    %573 = vmatprep.subr.bf16.mxu0 0
    %574 = vmatpush1.bf16.xpose.msra.mxu0 0
    %575 = vmatprep.subr.bf16.mxu0 0
    %576 = vmatpush1.bf16.xpose.msra.mxu0 0
    %577 = vmatprep.subr.bf16.mxu0 0
    %578 = vmatpush1.bf16.xpose.msra.mxu0 0
    %579 = vmatprep.subr.bf16.mxu0 0
    %580 = vmatpush1.bf16.xpose.msra.mxu0 0
    %581 = vmatprep.subr.bf16.mxu0 0
    %582 = vmatpush1.bf16.xpose.msra.mxu0 0
    %583 = vmatprep.mubr.bf16.mxu0 0
    %584 = vmatmul.mubr.bf16.gmra.mrb[0].mxu0 %v546
    %v585 = vpop.f32.mrb[0].mxu0
    %v586 = vadd.f32 0.0, %v585
    %v587 = vpop.f32.mrb[0].mxu0
    %v588 = vpop.f32.mrb[0].mxu0
    %v589 = vpop.f32.mrb[0].mxu0
    %590 = vdwg.mxu0
    %591 = vrot.lane.b32.xlu0 %v442, 104
    %v592 = vpop.permute.xlu0 %591
    %593 = vrot.lane.b32.xlu0 %v442, 72
    %v594 = vpop.permute.xlu0 %593
    %v596 = vsel %vm245, %v592, 0
    %v599 = vsel %vm245, %v594, 0
    %601 = vmatprep.subr.bf16.mxu0 0
    %602 = vmatpush1.bf16.xpose.msra.mxu0 %v599
    %603 = vmatprep.subr.bf16.mxu0 0
    %604 = vmatpush1.bf16.xpose.msra.mxu0 0
    %605 = vmatprep.subr.bf16.mxu0 0
    %606 = vmatpush1.bf16.xpose.msra.mxu0 0
    %607 = vmatprep.subr.bf16.mxu0 0
    %608 = vmatpush1.bf16.xpose.msra.mxu0 0
    %609 = vmatprep.subr.bf16.mxu0 0
    %610 = vmatpush1.bf16.xpose.msra.mxu0 0
    %611 = vmatprep.subr.bf16.mxu0 0
    %612 = vmatpush1.bf16.xpose.msra.mxu0 0
    %613 = vmatprep.subr.bf16.mxu0 0
    %614 = vmatpush1.bf16.xpose.msra.mxu0 0
    %615 = vmatprep.subr.bf16.mxu0 0
    %616 = vmatpush1.bf16.xpose.msra.mxu0 0
    %617 = vmatprep.subr.bf16.mxu0 0
    %618 = vmatpush1.bf16.xpose.msra.mxu0 0
    %619 = vmatprep.subr.bf16.mxu0 0
    %620 = vmatpush1.bf16.xpose.msra.mxu0 0
    %621 = vmatprep.subr.bf16.mxu0 0
    %622 = vmatpush1.bf16.xpose.msra.mxu0 0
    %623 = vmatprep.subr.bf16.mxu0 0
    %624 = vmatpush1.bf16.xpose.msra.mxu0 0
    %625 = vmatprep.subr.bf16.mxu0 0
    %626 = vmatpush1.bf16.xpose.msra.mxu0 0
    %627 = vmatprep.subr.bf16.mxu0 0
    %628 = vmatpush1.bf16.xpose.msra.mxu0 0
    %629 = vmatprep.subr.bf16.mxu0 0
    %630 = vmatpush1.bf16.xpose.msra.mxu0 0
    %631 = vmatprep.subr.bf16.mxu0 0
    %632 = vmatpush1.bf16.xpose.msra.mxu0 0
    %633 = vmatprep.mubr.bf16.mxu0 0
    %634 = vmatmul.mubr.bf16.gmra.mrb[0].mxu0 %v596
    %v635 = vpop.f32.mrb[0].mxu0
    %v636 = vadd.f32 0.0, %v635
    %v637 = vpop.f32.mrb[0].mxu0
    %v638 = vpop.f32.mrb[0].mxu0
    %v639 = vpop.f32.mrb[0].mxu0
    %640 = vdwg.mxu0
    %v641 = vmul.f32 %v287, 0.35355338
    %v642 = vmul.f32 %v337, 0.35355338
    %v643 = vmul.f32 %v387, 0.35355338
    %v644 = vmul.f32 %v437, 0.35355338
    %v645 = vmul.f32 %v486, 0.35355338
    %v646 = vmul.f32 %v536, 0.35355338
    %v647 = vmul.f32 %v586, 0.35355338
    %v648 = vmul.f32 %v636, 0.35355338
    %v649 = vsel %vm245, %v641, -inf
    %650 = vmax.xlane.f32.xlu0 %v649
    %v651 = vpop.xlane.xlu0 %650
    %v652 = vsel %vm245, %v642, -inf
    %653 = vmax.xlane.f32.xlu0 %v652
    %v654 = vpop.xlane.xlu0 %653
    %v655 = vsel %vm245, %v643, -inf
    %656 = vmax.xlane.f32.xlu0 %v655
    %v657 = vpop.xlane.xlu0 %656
    %v658 = vsel %vm245, %v644, -inf
    %659 = vmax.xlane.f32.xlu0 %v658
    %v660 = vpop.xlane.xlu0 %659
    %v661 = vsel %vm245, %v645, -inf
    %662 = vmax.xlane.f32.xlu0 %v661
    %v663 = vpop.xlane.xlu0 %662
    %v664 = vsel %vm245, %v646, -inf
    %665 = vmax.xlane.f32.xlu0 %v664
    %v666 = vpop.xlane.xlu0 %665
    %v667 = vsel %vm245, %v647, -inf
    %668 = vmax.xlane.f32.xlu0 %v667
    %v669 = vpop.xlane.xlu0 %668
    %v670 = vsel %vm245, %v648, -inf
    %671 = vmax.xlane.f32.xlu0 %v670
    %v672 = vpop.xlane.xlu0 %671
    %v673 = vsub.f32 %v641, %v651
    %v674 = vsub.f32 %v642, %v654
    %v675 = vsub.f32 %v643, %v657
    %v676 = vsub.f32 %v644, %v660
    %v677 = vsub.f32 %v645, %v663
    %v678 = vsub.f32 %v646, %v666
    %v679 = vsub.f32 %v647, %v669
    %v680 = vsub.f32 %v648, %v672
    %v681 = vmul.f32 %v673, 1.442695
    %v682 = vpow.pop %v681
    %v683 = vmul.f32 %v674, 1.442695
    %v684 = vpow.pop %v683
    %v685 = vmul.f32 %v675, 1.442695
    %v686 = vpow.pop %v685
    %v687 = vmul.f32 %v676, 1.442695
    %v688 = vpow.pop %v687
    %v689 = vmul.f32 %v677, 1.442695
    %v690 = vpow.pop %v689
    %v691 = vmul.f32 %v678, 1.442695
    %v692 = vpow.pop %v691
    %v693 = vmul.f32 %v679, 1.442695
    %v694 = vpow.pop %v693
    %v695 = vmul.f32 %v680, 1.442695
    %v696 = vpow.pop %v695
    %v697 = vsel %vm245, %v682, 0.0
    %698 = vadd.xlane.f32.xlu0 %v697
    %v699 = vpop.xlane.xlu0 %698
    %v700 = vsel %vm245, %v684, 0.0
    %701 = vadd.xlane.f32.xlu0 %v700
    %v702 = vpop.xlane.xlu0 %701
    %v703 = vsel %vm245, %v686, 0.0
    %704 = vadd.xlane.f32.xlu0 %v703
    %v705 = vpop.xlane.xlu0 %704
    %v706 = vsel %vm245, %v688, 0.0
    %707 = vadd.xlane.f32.xlu0 %v706
    %v708 = vpop.xlane.xlu0 %707
    %v709 = vsel %vm245, %v690, 0.0
    %710 = vadd.xlane.f32.xlu0 %v709
    %v711 = vpop.xlane.xlu0 %710
    %v712 = vsel %vm245, %v692, 0.0
    %713 = vadd.xlane.f32.xlu0 %v712
    %v714 = vpop.xlane.xlu0 %713
    %v715 = vsel %vm245, %v694, 0.0
    %716 = vadd.xlane.f32.xlu0 %v715
    %v717 = vpop.xlane.xlu0 %716
    %v718 = vsel %vm245, %v696, 0.0
    %719 = vadd.xlane.f32.xlu0 %v718
    %v720 = vpop.xlane.xlu0 %719
    %v721 = vrcp.pop %v699
    %v722 = vrcp.pop %v702
    %v723 = vrcp.pop %v705
    %v724 = vrcp.pop %v708
    %v725 = vrcp.pop %v711
    %v726 = vrcp.pop %v714
    %v727 = vrcp.pop %v717
    %v728 = vrcp.pop %v720
    %v729 = vmul.f32 %v682, %v721
    %v730 = vmul.f32 %v684, %v722
    %v731 = vmul.f32 %v686, %v723
    %v732 = vmul.f32 %v688, %v724
    %v733 = vmul.f32 %v690, %v725
    %v734 = vmul.f32 %v692, %v726
    %v735 = vmul.f32 %v694, %v727
    %v736 = vmul.f32 %v696, %v728
    %v737 = vpack.c.bf16 %v730, %v729
    %v738 = vpack.c.bf16 %v732, %v731
    %v739 = vpack.c.bf16 %v734, %v733
    %v740 = vpack.c.bf16 %v736, %v735
    %741 = vrot.lane.b32.xlu0 %v241, 64
    %v742 = vpop.permute.xlu0 %741
    %v744 = vsel %vm245, %v737, 0
    %vm746 = vcmask 1043456
    %v748 = vsel %vm746, %v742, 0
    %750 = vmatprep.subr.bf16.mxu0 0
    %751 = vmatpush1.bf16.msra.mxu0 %v748
    %752 = vmatprep.subr.bf16.mxu0 0
    %753 = vmatpush1.bf16.msra.mxu0 0
    %754 = vmatprep.subr.bf16.mxu0 0
    %755 = vmatpush1.bf16.msra.mxu0 0
    %756 = vmatprep.subr.bf16.mxu0 0
    %757 = vmatpush1.bf16.msra.mxu0 0
    %758 = vmatprep.subr.bf16.mxu0 0
    %759 = vmatpush1.bf16.msra.mxu0 0
    %760 = vmatprep.subr.bf16.mxu0 0
    %761 = vmatpush1.bf16.msra.mxu0 0
    %762 = vmatprep.subr.bf16.mxu0 0
    %763 = vmatpush1.bf16.msra.mxu0 0
    %764 = vmatprep.subr.bf16.mxu0 0
    %765 = vmatpush1.bf16.msra.mxu0 0
    %766 = vmatprep.subr.bf16.mxu0 0
    %767 = vmatpush1.bf16.msra.mxu0 0
    %768 = vmatprep.subr.bf16.mxu0 0
    %769 = vmatpush1.bf16.msra.mxu0 0
    %770 = vmatprep.subr.bf16.mxu0 0
    %771 = vmatpush1.bf16.msra.mxu0 0
    %772 = vmatprep.subr.bf16.mxu0 0
    %773 = vmatpush1.bf16.msra.mxu0 0
    %774 = vmatprep.subr.bf16.mxu0 0
    %775 = vmatpush1.bf16.msra.mxu0 0
    %776 = vmatprep.subr.bf16.mxu0 0
    %777 = vmatpush1.bf16.msra.mxu0 0
    %778 = vmatprep.subr.bf16.mxu0 0
    %779 = vmatpush1.bf16.msra.mxu0 0
    %780 = vmatprep.subr.bf16.mxu0 0
    %781 = vmatpush1.bf16.msra.mxu0 0
    %782 = vmatprep.mubr.bf16.mxu0 0
    %783 = vmatmul.mubr.bf16.gmra.mrb[0].mxu0 %v744
    %v784 = vpop.f32.mrb[0].mxu0
    %v785 = vadd.f32 0.0, %v784
    %v786 = vpop.f32.mrb[0].mxu0
    %v787 = vpop.f32.mrb[0].mxu0
    %v788 = vpop.f32.mrb[0].mxu0
    %789 = vdwg.mxu0
    %v791 = vrot.slane %v737, 4
    %792 = vrot.lane.b32.xlu0 %v241, 56
    %v793 = vpop.permute.xlu0 %792
    %v795 = vsel %vm245, %v791, 0
    %v798 = vsel %vm746, %v793, 0
    %800 = vmatprep.subr.bf16.mxu0 0
    %801 = vmatpush1.bf16.msra.mxu0 %v798
    %802 = vmatprep.subr.bf16.mxu0 0
    %803 = vmatpush1.bf16.msra.mxu0 0
    %804 = vmatprep.subr.bf16.mxu0 0
    %805 = vmatpush1.bf16.msra.mxu0 0
    %806 = vmatprep.subr.bf16.mxu0 0
    %807 = vmatpush1.bf16.msra.mxu0 0
    %808 = vmatprep.subr.bf16.mxu0 0
    %809 = vmatpush1.bf16.msra.mxu0 0
    %810 = vmatprep.subr.bf16.mxu0 0
    %811 = vmatpush1.bf16.msra.mxu0 0
    %812 = vmatprep.subr.bf16.mxu0 0
    %813 = vmatpush1.bf16.msra.mxu0 0
    %814 = vmatprep.subr.bf16.mxu0 0
    %815 = vmatpush1.bf16.msra.mxu0 0
    %816 = vmatprep.subr.bf16.mxu0 0
    %817 = vmatpush1.bf16.msra.mxu0 0
    %818 = vmatprep.subr.bf16.mxu0 0
    %819 = vmatpush1.bf16.msra.mxu0 0
    %820 = vmatprep.subr.bf16.mxu0 0
    %821 = vmatpush1.bf16.msra.mxu0 0
    %822 = vmatprep.subr.bf16.mxu0 0
    %823 = vmatpush1.bf16.msra.mxu0 0
    %824 = vmatprep.subr.bf16.mxu0 0
    %825 = vmatpush1.bf16.msra.mxu0 0
    %826 = vmatprep.subr.bf16.mxu0 0
    %827 = vmatpush1.bf16.msra.mxu0 0
    %828 = vmatprep.subr.bf16.mxu0 0
    %829 = vmatpush1.bf16.msra.mxu0 0
    %830 = vmatprep.subr.bf16.mxu0 0
    %831 = vmatpush1.bf16.msra.mxu0 0
    %832 = vmatprep.mubr.bf16.mxu0 0
    %833 = vmatmul.mubr.bf16.gmra.mrb[0].mxu0 %v795
    %v834 = vpop.f32.mrb[0].mxu0
    %v835 = vadd.f32 0.0, %v834
    %v836 = vpop.f32.mrb[0].mxu0
    %v837 = vpop.f32.mrb[0].mxu0
    %v838 = vpop.f32.mrb[0].mxu0
    %839 = vdwg.mxu0
    %840 = vrot.lane.b32.xlu0 %v241, 48
    %v841 = vpop.permute.xlu0 %840
    %v843 = vsel %vm245, %v738, 0
    %v846 = vsel %vm746, %v841, 0
    %848 = vmatprep.subr.bf16.mxu0 0
    %849 = vmatpush1.bf16.msra.mxu0 %v846
    %850 = vmatprep.subr.bf16.mxu0 0
    %851 = vmatpush1.bf16.msra.mxu0 0
    %852 = vmatprep.subr.bf16.mxu0 0
    %853 = vmatpush1.bf16.msra.mxu0 0
    %854 = vmatprep.subr.bf16.mxu0 0
    %855 = vmatpush1.bf16.msra.mxu0 0
    %856 = vmatprep.subr.bf16.mxu0 0
    %857 = vmatpush1.bf16.msra.mxu0 0
    %858 = vmatprep.subr.bf16.mxu0 0
    %859 = vmatpush1.bf16.msra.mxu0 0
    %860 = vmatprep.subr.bf16.mxu0 0
    %861 = vmatpush1.bf16.msra.mxu0 0
    %862 = vmatprep.subr.bf16.mxu0 0
    %863 = vmatpush1.bf16.msra.mxu0 0
    %864 = vmatprep.subr.bf16.mxu0 0
    %865 = vmatpush1.bf16.msra.mxu0 0
    %866 = vmatprep.subr.bf16.mxu0 0
    %867 = vmatpush1.bf16.msra.mxu0 0
    %868 = vmatprep.subr.bf16.mxu0 0
    %869 = vmatpush1.bf16.msra.mxu0 0
    %870 = vmatprep.subr.bf16.mxu0 0
    %871 = vmatpush1.bf16.msra.mxu0 0
    %872 = vmatprep.subr.bf16.mxu0 0
    %873 = vmatpush1.bf16.msra.mxu0 0
    %874 = vmatprep.subr.bf16.mxu0 0
    %875 = vmatpush1.bf16.msra.mxu0 0
    %876 = vmatprep.subr.bf16.mxu0 0
    %877 = vmatpush1.bf16.msra.mxu0 0
    %878 = vmatprep.subr.bf16.mxu0 0
    %879 = vmatpush1.bf16.msra.mxu0 0
    %880 = vmatprep.mubr.bf16.mxu0 0
    %881 = vmatmul.mubr.bf16.gmra.mrb[0].mxu0 %v843
    %v882 = vpop.f32.mrb[0].mxu0
    %v883 = vadd.f32 0.0, %v882
    %v884 = vpop.f32.mrb[0].mxu0
    %v885 = vpop.f32.mrb[0].mxu0
    %v886 = vpop.f32.mrb[0].mxu0
    %887 = vdwg.mxu0
    %v889 = vrot.slane %v738, 4
    %890 = vrot.lane.b32.xlu0 %v241, 40
    %v891 = vpop.permute.xlu0 %890
    %v893 = vsel %vm245, %v889, 0
    %v896 = vsel %vm746, %v891, 0
    %898 = vmatprep.subr.bf16.mxu0 0
    %899 = vmatpush1.bf16.msra.mxu0 %v896
    %900 = vmatprep.subr.bf16.mxu0 0
    %901 = vmatpush1.bf16.msra.mxu0 0
    %902 = vmatprep.subr.bf16.mxu0 0
    %903 = vmatpush1.bf16.msra.mxu0 0
    %904 = vmatprep.subr.bf16.mxu0 0
    %905 = vmatpush1.bf16.msra.mxu0 0
    %906 = vmatprep.subr.bf16.mxu0 0
    %907 = vmatpush1.bf16.msra.mxu0 0
    %908 = vmatprep.subr.bf16.mxu0 0
    %909 = vmatpush1.bf16.msra.mxu0 0
    %910 = vmatprep.subr.bf16.mxu0 0
    %911 = vmatpush1.bf16.msra.mxu0 0
    %912 = vmatprep.subr.bf16.mxu0 0
    %913 = vmatpush1.bf16.msra.mxu0 0
    %914 = vmatprep.subr.bf16.mxu0 0
    %915 = vmatpush1.bf16.msra.mxu0 0
    %916 = vmatprep.subr.bf16.mxu0 0
    %917 = vmatpush1.bf16.msra.mxu0 0
    %918 = vmatprep.subr.bf16.mxu0 0
    %919 = vmatpush1.bf16.msra.mxu0 0
    %920 = vmatprep.subr.bf16.mxu0 0
    %921 = vmatpush1.bf16.msra.mxu0 0
    %922 = vmatprep.subr.bf16.mxu0 0
    %923 = vmatpush1.bf16.msra.mxu0 0
    %924 = vmatprep.subr.bf16.mxu0 0
    %925 = vmatpush1.bf16.msra.mxu0 0
    %926 = vmatprep.subr.bf16.mxu0 0
    %927 = vmatpush1.bf16.msra.mxu0 0
    %928 = vmatprep.subr.bf16.mxu0 0
    %929 = vmatpush1.bf16.msra.mxu0 0
    %930 = vmatprep.mubr.bf16.mxu0 0
    %931 = vmatmul.mubr.bf16.gmra.mrb[0].mxu0 %v893
    %v932 = vpop.f32.mrb[0].mxu0
    %v933 = vadd.f32 0.0, %v932
    %v934 = vpop.f32.mrb[0].mxu0
    %v935 = vpop.f32.mrb[0].mxu0
    %v936 = vpop.f32.mrb[0].mxu0
    %937 = vdwg.mxu0
    %939 = vrot.lane.b32.xlu0 %v835, 8
    %v940 = vpop.permute.xlu0 %939
    %943 = vrot.lane.b32.xlu0 %v883, 16
    %v944 = vpop.permute.xlu0 %943
    %947 = vrot.lane.b32.xlu0 %v933, 24
    %v948 = vpop.permute.xlu0 %947
    %v950 = vsel %vm245, %v785, %v940
    %vm951 = vcmask 130048
    %v952 = vsel %vm951, %v950, %v944
    %vm953 = vcmask 195584
    %v954 = vsel %vm953, %v952, %v948
    %955 = vrot.lane.b32.xlu0 %v442, 64
    %v956 = vpop.permute.xlu0 %955
    %v958 = vsel %vm245, %v739, 0
    %v961 = vsel %vm746, %v956, 0
    %963 = vmatprep.subr.bf16.mxu0 0
    %964 = vmatpush1.bf16.msra.mxu0 %v961
    %965 = vmatprep.subr.bf16.mxu0 0
    %966 = vmatpush1.bf16.msra.mxu0 0
    %967 = vmatprep.subr.bf16.mxu0 0
    %968 = vmatpush1.bf16.msra.mxu0 0
    %969 = vmatprep.subr.bf16.mxu0 0
    %970 = vmatpush1.bf16.msra.mxu0 0
    %971 = vmatprep.subr.bf16.mxu0 0
    %972 = vmatpush1.bf16.msra.mxu0 0
    %973 = vmatprep.subr.bf16.mxu0 0
    %974 = vmatpush1.bf16.msra.mxu0 0
    %975 = vmatprep.subr.bf16.mxu0 0
    %976 = vmatpush1.bf16.msra.mxu0 0
    %977 = vmatprep.subr.bf16.mxu0 0
    %978 = vmatpush1.bf16.msra.mxu0 0
    %979 = vmatprep.subr.bf16.mxu0 0
    %980 = vmatpush1.bf16.msra.mxu0 0
    %981 = vmatprep.subr.bf16.mxu0 0
    %982 = vmatpush1.bf16.msra.mxu0 0
    %983 = vmatprep.subr.bf16.mxu0 0
    %984 = vmatpush1.bf16.msra.mxu0 0
    %985 = vmatprep.subr.bf16.mxu0 0
    %986 = vmatpush1.bf16.msra.mxu0 0
    %987 = vmatprep.subr.bf16.mxu0 0
    %988 = vmatpush1.bf16.msra.mxu0 0
    %989 = vmatprep.subr.bf16.mxu0 0
    %990 = vmatpush1.bf16.msra.mxu0 0
    %991 = vmatprep.subr.bf16.mxu0 0
    %992 = vmatpush1.bf16.msra.mxu0 0
    %993 = vmatprep.subr.bf16.mxu0 0
    %994 = vmatpush1.bf16.msra.mxu0 0
    %995 = vmatprep.mubr.bf16.mxu0 0
    %996 = vmatmul.mubr.bf16.gmra.mrb[0].mxu0 %v958
    %v997 = vpop.f32.mrb[0].mxu0
    %v998 = vadd.f32 0.0, %v997
    %v999 = vpop.f32.mrb[0].mxu0
    %v1000 = vpop.f32.mrb[0].mxu0
    %v1001 = vpop.f32.mrb[0].mxu0
    %1002 = vdwg.mxu0
    %v1004 = vrot.slane %v739, 4
    %1005 = vrot.lane.b32.xlu0 %v442, 56
    %v1006 = vpop.permute.xlu0 %1005
    %v1008 = vsel %vm245, %v1004, 0
    %v1011 = vsel %vm746, %v1006, 0
    %1013 = vmatprep.subr.bf16.mxu0 0
    %1014 = vmatpush1.bf16.msra.mxu0 %v1011
    %1015 = vmatprep.subr.bf16.mxu0 0
    %1016 = vmatpush1.bf16.msra.mxu0 0
    %1017 = vmatprep.subr.bf16.mxu0 0
    %1018 = vmatpush1.bf16.msra.mxu0 0
    %1019 = vmatprep.subr.bf16.mxu0 0
    %1020 = vmatpush1.bf16.msra.mxu0 0
    %1021 = vmatprep.subr.bf16.mxu0 0
    %1022 = vmatpush1.bf16.msra.mxu0 0
    %1023 = vmatprep.subr.bf16.mxu0 0
    %1024 = vmatpush1.bf16.msra.mxu0 0
    %1025 = vmatprep.subr.bf16.mxu0 0
    %1026 = vmatpush1.bf16.msra.mxu0 0
    %1027 = vmatprep.subr.bf16.mxu0 0
    %1028 = vmatpush1.bf16.msra.mxu0 0
    %1029 = vmatprep.subr.bf16.mxu0 0
    %1030 = vmatpush1.bf16.msra.mxu0 0
    %1031 = vmatprep.subr.bf16.mxu0 0
    %1032 = vmatpush1.bf16.msra.mxu0 0
    %1033 = vmatprep.subr.bf16.mxu0 0
    %1034 = vmatpush1.bf16.msra.mxu0 0
    %1035 = vmatprep.subr.bf16.mxu0 0
    %1036 = vmatpush1.bf16.msra.mxu0 0
    %1037 = vmatprep.subr.bf16.mxu0 0
    %1038 = vmatpush1.bf16.msra.mxu0 0
    %1039 = vmatprep.subr.bf16.mxu0 0
    %1040 = vmatpush1.bf16.msra.mxu0 0
    %1041 = vmatprep.subr.bf16.mxu0 0
    %1042 = vmatpush1.bf16.msra.mxu0 0
    %1043 = vmatprep.subr.bf16.mxu0 0
    %1044 = vmatpush1.bf16.msra.mxu0 0
    %1045 = vmatprep.mubr.bf16.mxu0 0
    %1046 = vmatmul.mubr.bf16.gmra.mrb[0].mxu0 %v1008
    %v1047 = vpop.f32.mrb[0].mxu0
    %v1048 = vadd.f32 0.0, %v1047
    %v1049 = vpop.f32.mrb[0].mxu0
    %v1050 = vpop.f32.mrb[0].mxu0
    %v1051 = vpop.f32.mrb[0].mxu0
    %1052 = vdwg.mxu0
    %1053 = vrot.lane.b32.xlu0 %v442, 48
    %v1054 = vpop.permute.xlu0 %1053
    %v1056 = vsel %vm245, %v740, 0
    %v1059 = vsel %vm746, %v1054, 0
    %1061 = vmatprep.subr.bf16.mxu0 0
    %1062 = vmatpush1.bf16.msra.mxu0 %v1059
    %1063 = vmatprep.subr.bf16.mxu0 0
    %1064 = vmatpush1.bf16.msra.mxu0 0
    %1065 = vmatprep.subr.bf16.mxu0 0
    %1066 = vmatpush1.bf16.msra.mxu0 0
    %1067 = vmatprep.subr.bf16.mxu0 0
    %1068 = vmatpush1.bf16.msra.mxu0 0
    %1069 = vmatprep.subr.bf16.mxu0 0
    %1070 = vmatpush1.bf16.msra.mxu0 0
    %1071 = vmatprep.subr.bf16.mxu0 0
    %1072 = vmatpush1.bf16.msra.mxu0 0
    %1073 = vmatprep.subr.bf16.mxu0 0
    %1074 = vmatpush1.bf16.msra.mxu0 0
    %1075 = vmatprep.subr.bf16.mxu0 0
    %1076 = vmatpush1.bf16.msra.mxu0 0
    %1077 = vmatprep.subr.bf16.mxu0 0
    %1078 = vmatpush1.bf16.msra.mxu0 0
    %1079 = vmatprep.subr.bf16.mxu0 0
    %1080 = vmatpush1.bf16.msra.mxu0 0
    %1081 = vmatprep.subr.bf16.mxu0 0
    %1082 = vmatpush1.bf16.msra.mxu0 0
    %1083 = vmatprep.subr.bf16.mxu0 0
    %1084 = vmatpush1.bf16.msra.mxu0 0
    %1085 = vmatprep.subr.bf16.mxu0 0
    %1086 = vmatpush1.bf16.msra.mxu0 0
    %1087 = vmatprep.subr.bf16.mxu0 0
    %1088 = vmatpush1.bf16.msra.mxu0 0
    %1089 = vmatprep.subr.bf16.mxu0 0
    %1090 = vmatpush1.bf16.msra.mxu0 0
    %1091 = vmatprep.subr.bf16.mxu0 0
    %1092 = vmatpush1.bf16.msra.mxu0 0
    %1093 = vmatprep.mubr.bf16.mxu0 0
    %1094 = vmatmul.mubr.bf16.gmra.mrb[0].mxu0 %v1056
    %v1095 = vpop.f32.mrb[0].mxu0
    %v1096 = vadd.f32 0.0, %v1095
    %v1097 = vpop.f32.mrb[0].mxu0
    %v1098 = vpop.f32.mrb[0].mxu0
    %v1099 = vpop.f32.mrb[0].mxu0
    %1100 = vdwg.mxu0
    %v1102 = vrot.slane %v740, 4
    %1103 = vrot.lane.b32.xlu0 %v442, 40
    %v1104 = vpop.permute.xlu0 %1103
    %v1106 = vsel %vm245, %v1102, 0
    %v1109 = vsel %vm746, %v1104, 0
    %1111 = vmatprep.subr.bf16.mxu0 0
    %1112 = vmatpush1.bf16.msra.mxu0 %v1109
    %1113 = vmatprep.subr.bf16.mxu0 0
    %1114 = vmatpush1.bf16.msra.mxu0 0
    %1115 = vmatprep.subr.bf16.mxu0 0
    %1116 = vmatpush1.bf16.msra.mxu0 0
    %1117 = vmatprep.subr.bf16.mxu0 0
    %1118 = vmatpush1.bf16.msra.mxu0 0
    %1119 = vmatprep.subr.bf16.mxu0 0
    %1120 = vmatpush1.bf16.msra.mxu0 0
    %1121 = vmatprep.subr.bf16.mxu0 0
    %1122 = vmatpush1.bf16.msra.mxu0 0
    %1123 = vmatprep.subr.bf16.mxu0 0
    %1124 = vmatpush1.bf16.msra.mxu0 0
    %1125 = vmatprep.subr.bf16.mxu0 0
    %1126 = vmatpush1.bf16.msra.mxu0 0
    %1127 = vmatprep.subr.bf16.mxu0 0
    %1128 = vmatpush1.bf16.msra.mxu0 0
    %1129 = vmatprep.subr.bf16.mxu0 0
    %1130 = vmatpush1.bf16.msra.mxu0 0
    %1131 = vmatprep.subr.bf16.mxu0 0
    %1132 = vmatpush1.bf16.msra.mxu0 0
    %1133 = vmatprep.subr.bf16.mxu0 0
    %1134 = vmatpush1.bf16.msra.mxu0 0
    %1135 = vmatprep.subr.bf16.mxu0 0
    %1136 = vmatpush1.bf16.msra.mxu0 0
    %1137 = vmatprep.subr.bf16.mxu0 0
    %1138 = vmatpush1.bf16.msra.mxu0 0
    %1139 = vmatprep.subr.bf16.mxu0 0
    %1140 = vmatpush1.bf16.msra.mxu0 0
    %1141 = vmatprep.subr.bf16.mxu0 0
    %1142 = vmatpush1.bf16.msra.mxu0 0
    %1143 = vmatprep.mubr.bf16.mxu0 0
    %1144 = vmatmul.mubr.bf16.gmra.mrb[0].mxu0 %v1106
    %v1145 = vpop.f32.mrb[0].mxu0
    %v1146 = vadd.f32 0.0, %v1145
    %v1147 = vpop.f32.mrb[0].mxu0
    %v1148 = vpop.f32.mrb[0].mxu0
    %v1149 = vpop.f32.mrb[0].mxu0
    %1150 = vdwg.mxu0
    %1152 = vrot.lane.b32.xlu0 %v1048, 8
    %v1153 = vpop.permute.xlu0 %1152
    %1156 = vrot.lane.b32.xlu0 %v1096, 16
    %v1157 = vpop.permute.xlu0 %1156
    %1160 = vrot.lane.b32.xlu0 %v1146, 24
    %v1161 = vpop.permute.xlu0 %1160
    %v1163 = vsel %vm245, %v998, %v1153
    %v1164 = vsel %vm951, %v1163, %v1157
    %v1165 = vsel %vm953, %v1164, %v1161
    %v1166 = vpack.c.bf16 %v1165, %v954
    %v1167 = vld [vmem:[%s5] sm:$0xf]
    %v1168 = vld [vmem:[%s5 + $0x4] sm:$0xf]
    %v1169 = vld [vmem:[%s5 + $0x8] sm:$0xf]
    %v1170 = vld [vmem:[%s5 + $0xc] sm:$0xf]
    %v1171 = vlaneseq
    %v1172 = vshrl.u32 %v1171, 7
    %v1173 = vsub.s32 3, %v1172
    %v1174 = vrot.slane %v37, %v1173
    %v1179 = vunpack.c.l.b16 %v1167
    %v1180 = vunpack.c.l.b16 %v1168
    %v1181 = vunpack.c.l.b16 %v1169
    %v1182 = vunpack.c.l.b16 %v1170
    %v1183 = vpack.c.b16 %v1180, %v1179
    %v1184 = vpack.c.b16 %v1182, %v1181
    %v1188 = vsel %vm136, %v1166, 0
    %1190 = vmatprep.subr.bf16.mxu0 0
    %1191 = vmatpush1.bf16.msra.mxu0 %v1183
    %1192 = vmatprep.subr.bf16.mxu0 0
    %1193 = vmatpush1.bf16.msra.mxu0 %v1184
    %1194 = vmatprep.subr.bf16.mxu0 0
    %1195 = vmatpush1.bf16.msra.mxu0 0
    %1196 = vmatprep.subr.bf16.mxu0 0
    %1197 = vmatpush1.bf16.msra.mxu0 0
    %1198 = vmatprep.subr.bf16.mxu0 0
    %1199 = vmatpush1.bf16.msra.mxu0 0
    %1200 = vmatprep.subr.bf16.mxu0 0
    %1201 = vmatpush1.bf16.msra.mxu0 0
    %1202 = vmatprep.subr.bf16.mxu0 0
    %1203 = vmatpush1.bf16.msra.mxu0 0
    %1204 = vmatprep.subr.bf16.mxu0 0
    %1205 = vmatpush1.bf16.msra.mxu0 0
    %1206 = vmatprep.subr.bf16.mxu0 0
    %1207 = vmatpush1.bf16.msra.mxu0 0
    %1208 = vmatprep.subr.bf16.mxu0 0
    %1209 = vmatpush1.bf16.msra.mxu0 0
    %1210 = vmatprep.subr.bf16.mxu0 0
    %1211 = vmatpush1.bf16.msra.mxu0 0
    %1212 = vmatprep.subr.bf16.mxu0 0
    %1213 = vmatpush1.bf16.msra.mxu0 0
    %1214 = vmatprep.subr.bf16.mxu0 0
    %1215 = vmatpush1.bf16.msra.mxu0 0
    %1216 = vmatprep.subr.bf16.mxu0 0
    %1217 = vmatpush1.bf16.msra.mxu0 0
    %1218 = vmatprep.subr.bf16.mxu0 0
    %1219 = vmatpush1.bf16.msra.mxu0 0
    %1220 = vmatprep.subr.bf16.mxu0 0
    %1221 = vmatpush1.bf16.msra.mxu0 0
    %1222 = vmatprep.mubr.bf16.mxu0 0
    %1223 = vmatmul.mubr.bf16.gmra.mrb[0].mxu0 %v1188
    %v1224 = vpop.f32.mrb[0].mxu0
    %v1225 = vadd.f32 %v1174, %v1224
    %v1226 = vpop.f32.mrb[0].mxu0
    %v1227 = vpop.f32.mrb[0].mxu0
    %v1228 = vadd.f32 %v1174, %v1227
    %v1229 = vpop.f32.mrb[0].mxu0
    %1230 = vdwg.mxu0
    %v1231 = vadd.f32 %v174, %v1225
    %v1232 = vadd.f32 %v175, %v1228
    %v1233 = vsel %vm136, %v1231, 0.0
    %1234 = vadd.xlane.f32.xlu0 %v1233
    %v1235 = vpop.xlane.xlu0 %1234
    %v1236 = vsel %vm136, %v1232, 0.0
    %1237 = vadd.xlane.f32.xlu0 %v1236
    %v1238 = vpop.xlane.xlu0 %1237
    %v1239 = vmul.f32 %v1235, %v143
    %v1240 = vmul.f32 %v1238, %v143
    %v1241 = vsub.f32 %v1231, %v1239
    %v1242 = vsub.f32 %v1232, %v1240
    %v1243 = vmul.f32 %v1241, %v1241
    %v1244 = vmul.f32 %v1242, %v1242
    %v1245 = vsel %vm136, %v1243, 0.0
    %1246 = vadd.xlane.f32.xlu0 %v1245
    %v1247 = vpop.xlane.xlu0 %1246
    %v1248 = vsel %vm136, %v1244, 0.0
    %1249 = vadd.xlane.f32.xlu0 %v1248
    %v1250 = vpop.xlane.xlu0 %1249
    %v1251 = vmul.f32 %v1247, %v143
    %v1252 = vmul.f32 %v1250, %v143
    %v1253 = vadd.f32 %v1251, 1e-12
    %v1254 = vadd.f32 %v1252, 1e-12
    %v1255 = vrsqrt.pop %v1253
    %v1256 = vrsqrt.pop %v1254
    %v1257 = vmul.f32 %v1241, %v1255
    %v1258 = vmul.f32 %v1242, %v1256
    %v1259 = vlaneseq
    %v1260 = vshrl.u32 %v1259, 7
    %v1261 = vsub.s32 4, %v1260
    %v1262 = vrot.slane %v37, %v1261
    %v1263 = vmul.f32 %v1257, %v1262
    %v1264 = vmul.f32 %v1258, %v1262
    %v1265 = vlaneseq
    %v1266 = vshrl.u32 %v1265, 7
    %v1267 = vsub.s32 5, %v1266
    %v1268 = vrot.slane %v37, %v1267
    %v1269 = vadd.f32 %v1263, %v1268
    %v1270 = vadd.f32 %v1264, %v1268
    %v1271 = vpack.c.bf16 %v1270, %v1269
    %v1272 = vld [vmem:[%s6] sm:$0xf]
    %v1273 = vld [vmem:[%s6 + $0x4] sm:$0xf]
    %v1274 = vld [vmem:[%s6 + $0x8] sm:$0xf]
    %v1275 = vld [vmem:[%s6 + $0xc] sm:$0xf]
    %v1276 = vlaneseq
    %v1277 = vshrl.u32 %v1276, 7
    %v1278 = vsub.s32 6, %v1277
    %v1279 = vrot.slane %v37, %v1278
    %v1284 = vunpack.c.l.b16 %v1272
    %v1285 = vunpack.c.l.b16 %v1273
    %v1286 = vunpack.c.l.b16 %v1274
    %v1287 = vunpack.c.l.b16 %v1275
    %v1288 = vpack.c.b16 %v1285, %v1284
    %v1289 = vpack.c.b16 %v1287, %v1286
    %v1293 = vsel %vm136, %v1271, 0
    %1295 = vmatprep.subr.bf16.mxu0 0
    %1296 = vmatpush1.bf16.msra.mxu0 %v1288
    %1297 = vmatprep.subr.bf16.mxu0 0
    %1298 = vmatpush1.bf16.msra.mxu0 %v1289
    %1299 = vmatprep.subr.bf16.mxu0 0
    %1300 = vmatpush1.bf16.msra.mxu0 0
    %1301 = vmatprep.subr.bf16.mxu0 0
    %1302 = vmatpush1.bf16.msra.mxu0 0
    %1303 = vmatprep.subr.bf16.mxu0 0
    %1304 = vmatpush1.bf16.msra.mxu0 0
    %1305 = vmatprep.subr.bf16.mxu0 0
    %1306 = vmatpush1.bf16.msra.mxu0 0
    %1307 = vmatprep.subr.bf16.mxu0 0
    %1308 = vmatpush1.bf16.msra.mxu0 0
    %1309 = vmatprep.subr.bf16.mxu0 0
    %1310 = vmatpush1.bf16.msra.mxu0 0
    %1311 = vmatprep.subr.bf16.mxu0 0
    %1312 = vmatpush1.bf16.msra.mxu0 0
    %1313 = vmatprep.subr.bf16.mxu0 0
    %1314 = vmatpush1.bf16.msra.mxu0 0
    %1315 = vmatprep.subr.bf16.mxu0 0
    %1316 = vmatpush1.bf16.msra.mxu0 0
    %1317 = vmatprep.subr.bf16.mxu0 0
    %1318 = vmatpush1.bf16.msra.mxu0 0
    %1319 = vmatprep.subr.bf16.mxu0 0
    %1320 = vmatpush1.bf16.msra.mxu0 0
    %1321 = vmatprep.subr.bf16.mxu0 0
    %1322 = vmatpush1.bf16.msra.mxu0 0
    %1323 = vmatprep.subr.bf16.mxu0 0
    %1324 = vmatpush1.bf16.msra.mxu0 0
    %1325 = vmatprep.subr.bf16.mxu0 0
    %1326 = vmatpush1.bf16.msra.mxu0 0
    %1327 = vmatprep.mubr.bf16.mxu0 0
    %1328 = vmatmul.mubr.bf16.gmra.mrb[0].mxu0 %v1293
    %v1329 = vpop.f32.mrb[0].mxu0
    %v1330 = vadd.f32 %v1279, %v1329
    %v1331 = vpop.f32.mrb[0].mxu0
    %v1332 = vpop.f32.mrb[0].mxu0
    %v1333 = vadd.f32 %v1279, %v1332
    %v1334 = vpop.f32.mrb[0].mxu0
    %1335 = vdwg.mxu0
    %v1336 = vmul.f32 %v1330, 0.5
    %v1337 = vmul.f32 %v1333, 0.5
    %v1338 = vmul.f32 %v1330, 0.044715
    %v1339 = vmul.f32 %v1333, 0.044715
    %v1340 = vmul.f32 %v1338, %v1330
    %v1341 = vmul.f32 %v1339, %v1333
    %v1342 = vmul.f32 %v1340, %v1330
    %v1343 = vmul.f32 %v1341, %v1333
    %v1344 = vadd.f32 %v1330, %v1342
    %v1345 = vadd.f32 %v1333, %v1343
    %v1346 = vmul.f32 %v1344, 0.7978846
    %v1347 = vmul.f32 %v1345, 0.7978846
    %v1348 = vtanh.pop %v1346
    %v1349 = vtanh.pop %v1347
    %v1350 = vadd.f32 %v1348, 1.0
    %v1351 = vadd.f32 %v1349, 1.0
    %v1352 = vmul.f32 %v1336, %v1350
    %v1353 = vmul.f32 %v1337, %v1351
    %v1354 = vpack.c.bf16 %v1353, %v1352
    %v1355 = vld [vmem:[%s7] sm:$0xf]
    %v1356 = vld [vmem:[%s7 + $0x4] sm:$0xf]
    %v1357 = vld [vmem:[%s7 + $0x8] sm:$0xf]
    %v1358 = vld [vmem:[%s7 + $0xc] sm:$0xf]
    %v1359 = vld [vmem:[%s7 + $0x10] sm:$0xf]
    %v1360 = vld [vmem:[%s7 + $0x14] sm:$0xf]
    %v1361 = vld [vmem:[%s7 + $0x18] sm:$0xf]
    %v1362 = vld [vmem:[%s7 + $0x1c] sm:$0xf]
    %v1363 = vld [vmem:[%s7 + $0x20] sm:$0xf]
    %v1364 = vld [vmem:[%s7 + $0x24] sm:$0xf]
    %v1365 = vld [vmem:[%s7 + $0x28] sm:$0xf]
    %v1366 = vld [vmem:[%s7 + $0x2c] sm:$0xf]
    %v1367 = vld [vmem:[%s7 + $0x30] sm:$0xf]
    %v1368 = vld [vmem:[%s7 + $0x34] sm:$0xf]
    %v1369 = vld [vmem:[%s7 + $0x38] sm:$0xf]
    %v1370 = vld [vmem:[%s7 + $0x3c] sm:$0xf]
    %v1371 = vlaneseq
    %v1372 = vshrl.u32 %v1371, 7
    %v1373 = vsub.s32 7, %v1372
    %v1374 = vrot.slane %v37, %v1373
    %v1391 = vunpack.c.l.b16 %v1355
    %v1392 = vunpack.c.l.b16 %v1356
    %v1393 = vunpack.c.l.b16 %v1357
    %v1394 = vunpack.c.l.b16 %v1358
    %v1395 = vunpack.c.l.b16 %v1359
    %v1396 = vunpack.c.l.b16 %v1360
    %v1397 = vunpack.c.l.b16 %v1361
    %v1398 = vunpack.c.l.b16 %v1362
    %v1399 = vunpack.c.l.b16 %v1363
    %v1400 = vunpack.c.l.b16 %v1364
    %v1401 = vunpack.c.l.b16 %v1365
    %v1402 = vunpack.c.l.b16 %v1366
    %v1403 = vunpack.c.l.b16 %v1367
    %v1404 = vunpack.c.l.b16 %v1368
    %v1405 = vunpack.c.l.b16 %v1369
    %v1406 = vunpack.c.l.b16 %v1370
    %v1407 = vpack.c.b16 %v1392, %v1391
    %v1408 = vpack.c.b16 %v1394, %v1393
    %v1409 = vpack.c.b16 %v1396, %v1395
    %v1410 = vpack.c.b16 %v1398, %v1397
    %v1411 = vpack.c.b16 %v1400, %v1399
    %v1412 = vpack.c.b16 %v1402, %v1401
    %v1413 = vpack.c.b16 %v1404, %v1403
    %v1414 = vpack.c.b16 %v1406, %v1405
    %1423 = vmatprep.subr.bf16.mxu0 0
    %1424 = vmatpush1.bf16.msra.mxu0 %v1407
    %1425 = vmatprep.subr.bf16.mxu0 0
    %1426 = vmatpush1.bf16.msra.mxu0 %v1408
    %1427 = vmatprep.subr.bf16.mxu0 0
    %1428 = vmatpush1.bf16.msra.mxu0 %v1409
    %1429 = vmatprep.subr.bf16.mxu0 0
    %1430 = vmatpush1.bf16.msra.mxu0 %v1410
    %1431 = vmatprep.subr.bf16.mxu0 0
    %1432 = vmatpush1.bf16.msra.mxu0 %v1411
    %1433 = vmatprep.subr.bf16.mxu0 0
    %1434 = vmatpush1.bf16.msra.mxu0 %v1412
    %1435 = vmatprep.subr.bf16.mxu0 0
    %1436 = vmatpush1.bf16.msra.mxu0 %v1413
    %1437 = vmatprep.subr.bf16.mxu0 0
    %1438 = vmatpush1.bf16.msra.mxu0 %v1414
    %1439 = vmatprep.subr.bf16.mxu0 0
    %1440 = vmatpush1.bf16.msra.mxu0 0
    %1441 = vmatprep.subr.bf16.mxu0 0
    %1442 = vmatpush1.bf16.msra.mxu0 0
    %1443 = vmatprep.subr.bf16.mxu0 0
    %1444 = vmatpush1.bf16.msra.mxu0 0
    %1445 = vmatprep.subr.bf16.mxu0 0
    %1446 = vmatpush1.bf16.msra.mxu0 0
    %1447 = vmatprep.subr.bf16.mxu0 0
    %1448 = vmatpush1.bf16.msra.mxu0 0
    %1449 = vmatprep.subr.bf16.mxu0 0
    %1450 = vmatpush1.bf16.msra.mxu0 0
    %1451 = vmatprep.subr.bf16.mxu0 0
    %1452 = vmatpush1.bf16.msra.mxu0 0
    %1453 = vmatprep.subr.bf16.mxu0 0
    %1454 = vmatpush1.bf16.msra.mxu0 0
    %1455 = vmatprep.mubr.bf16.mxu0 0
    %1456 = vmatmul.mubr.bf16.gmra.mrb[0].mxu0 %v1354
    %v1457 = vpop.f32.mrb[0].mxu0
    %v1458 = vadd.f32 %v1374, %v1457
    %v1459 = vpop.f32.mrb[0].mxu0
    %v1460 = vpop.f32.mrb[0].mxu0
    %v1461 = vadd.f32 %v1374, %v1460
    %v1462 = vpop.f32.mrb[0].mxu0
    %1463 = vdwg.mxu0
    %v1464 = vadd.f32 %v1269, %v1458
    %v1465 = vadd.f32 %v1270, %v1461
    %v1466 = vsel %vm136, %v1464, 0.0
    %1467 = vadd.xlane.f32.xlu0 %v1466
    %v1468 = vpop.xlane.xlu0 %1467
    %v1469 = vsel %vm136, %v1465, 0.0
    %1470 = vadd.xlane.f32.xlu0 %v1469
    %v1471 = vpop.xlane.xlu0 %1470
    %v1472 = vmul.f32 %v1468, %v143
    %v1473 = vmul.f32 %v1471, %v143
    %v1474 = vsub.f32 %v1464, %v1472
    %v1475 = vsub.f32 %v1465, %v1473
    %v1476 = vmul.f32 %v1474, %v1474
    %v1477 = vmul.f32 %v1475, %v1475
    %v1478 = vsel %vm136, %v1476, 0.0
    %1479 = vadd.xlane.f32.xlu0 %v1478
    %v1480 = vpop.xlane.xlu0 %1479
    %v1481 = vsel %vm136, %v1477, 0.0
    %1482 = vadd.xlane.f32.xlu0 %v1481
    %v1483 = vpop.xlane.xlu0 %1482
    %v1484 = vmul.f32 %v1480, %v143
    %v1485 = vmul.f32 %v1483, %v143
    %v1486 = vadd.f32 %v1484, 1e-12
    %v1487 = vadd.f32 %v1485, 1e-12
    %v1488 = vrsqrt.pop %v1486
    %v1489 = vrsqrt.pop %v1487
    %v1490 = vmul.f32 %v1474, %v1488
    %v1491 = vmul.f32 %v1475, %v1489
    %v1492 = vlaneseq
    %v1493 = vshrl.u32 %v1492, 7
    %v1494 = vsub.s32 0, %v1493
    %v1495 = vrot.slane %v38, %v1494
    %v1496 = vmul.f32 %v1490, %v1495
    %v1497 = vmul.f32 %v1491, %v1495
    %v1498 = vlaneseq
    %v1499 = vshrl.u32 %v1498, 7
    %v1500 = vsub.s32 1, %v1499
    %v1501 = vrot.slane %v38, %v1500
    %v1502 = vadd.f32 %v1496, %v1501
    %v1503 = vadd.f32 %v1497, %v1501
    %v1504 = vpack.c.bf16 %v1503, %v1502
    %s1505 = scalar_lea.vmem %s4, 16
    %v1506 = vld [vmem:[%s1505] sm:$0xf]
    %v1507 = vld [vmem:[%s1505 + $0x4] sm:$0xf]
    %v1508 = vld [vmem:[%s1505 + $0x8] sm:$0xf]
    %v1509 = vld [vmem:[%s1505 + $0xc] sm:$0xf]
    %v1510 = vlaneseq
    %v1511 = vshrl.u32 %v1510, 7
    %v1512 = vsub.s32 2, %v1511
    %v1513 = vrot.slane %v38, %v1512
    %v1518 = vunpack.c.l.b16 %v1506
    %v1519 = vunpack.c.l.b16 %v1507
    %v1520 = vunpack.c.l.b16 %v1508
    %v1521 = vunpack.c.l.b16 %v1509
    %v1522 = vpack.c.b16 %v1519, %v1518
    %v1523 = vpack.c.b16 %v1521, %v1520
    %v1527 = vsel %vm136, %v1504, 0
    %1529 = vmatprep.subr.bf16.mxu0 0
    %1530 = vmatpush1.bf16.msra.mxu0 %v1522
    %1531 = vmatprep.subr.bf16.mxu0 0
    %1532 = vmatpush1.bf16.msra.mxu0 %v1523
    %1533 = vmatprep.subr.bf16.mxu0 0
    %1534 = vmatpush1.bf16.msra.mxu0 0
    %1535 = vmatprep.subr.bf16.mxu0 0
    %1536 = vmatpush1.bf16.msra.mxu0 0
    %1537 = vmatprep.subr.bf16.mxu0 0
    %1538 = vmatpush1.bf16.msra.mxu0 0
    %1539 = vmatprep.subr.bf16.mxu0 0
    %1540 = vmatpush1.bf16.msra.mxu0 0
    %1541 = vmatprep.subr.bf16.mxu0 0
    %1542 = vmatpush1.bf16.msra.mxu0 0
    %1543 = vmatprep.subr.bf16.mxu0 0
    %1544 = vmatpush1.bf16.msra.mxu0 0
    %1545 = vmatprep.subr.bf16.mxu0 0
    %1546 = vmatpush1.bf16.msra.mxu0 0
    %1547 = vmatprep.subr.bf16.mxu0 0
    %1548 = vmatpush1.bf16.msra.mxu0 0
    %1549 = vmatprep.subr.bf16.mxu0 0
    %1550 = vmatpush1.bf16.msra.mxu0 0
    %1551 = vmatprep.subr.bf16.mxu0 0
    %1552 = vmatpush1.bf16.msra.mxu0 0
    %1553 = vmatprep.subr.bf16.mxu0 0
    %1554 = vmatpush1.bf16.msra.mxu0 0
    %1555 = vmatprep.subr.bf16.mxu0 0
    %1556 = vmatpush1.bf16.msra.mxu0 0
    %1557 = vmatprep.subr.bf16.mxu0 0
    %1558 = vmatpush1.bf16.msra.mxu0 0
    %1559 = vmatprep.subr.bf16.mxu0 0
    %1560 = vmatpush1.bf16.msra.mxu0 0
    %1561 = vmatprep.mubr.bf16.mxu0 0
    %1562 = vmatmul.mubr.bf16.gmra.mrb[0].mxu0 %v1527
    %v1563 = vpop.f32.mrb[0].mxu0
    %v1564 = vadd.f32 %v1513, %v1563
    %v1565 = vpop.f32.mrb[0].mxu0
    %v1566 = vpop.f32.mrb[0].mxu0
    %v1567 = vadd.f32 %v1513, %v1566
    %v1568 = vpop.f32.mrb[0].mxu0
    %1569 = vdwg.mxu0
    %v1570 = vpack.c.bf16 %v1567, %v1564
    %1572 = vrot.lane.b32.xlu0 %v1570, 96
    %v1573 = vpop.permute.xlu0 %1572
    %v1575 = vsel %vm245, %v1570, 0
    %v1578 = vsel %vm245, %v1573, 0
    %1580 = vmatprep.subr.bf16.mxu0 0
    %1581 = vmatpush1.bf16.xpose.msra.mxu0 %v1578
    %1582 = vmatprep.subr.bf16.mxu0 0
    %1583 = vmatpush1.bf16.xpose.msra.mxu0 0
    %1584 = vmatprep.subr.bf16.mxu0 0
    %1585 = vmatpush1.bf16.xpose.msra.mxu0 0
    %1586 = vmatprep.subr.bf16.mxu0 0
    %1587 = vmatpush1.bf16.xpose.msra.mxu0 0
    %1588 = vmatprep.subr.bf16.mxu0 0
    %1589 = vmatpush1.bf16.xpose.msra.mxu0 0
    %1590 = vmatprep.subr.bf16.mxu0 0
    %1591 = vmatpush1.bf16.xpose.msra.mxu0 0
    %1592 = vmatprep.subr.bf16.mxu0 0
    %1593 = vmatpush1.bf16.xpose.msra.mxu0 0
    %1594 = vmatprep.subr.bf16.mxu0 0
    %1595 = vmatpush1.bf16.xpose.msra.mxu0 0
    %1596 = vmatprep.subr.bf16.mxu0 0
    %1597 = vmatpush1.bf16.xpose.msra.mxu0 0
    %1598 = vmatprep.subr.bf16.mxu0 0
    %1599 = vmatpush1.bf16.xpose.msra.mxu0 0
    %1600 = vmatprep.subr.bf16.mxu0 0
    %1601 = vmatpush1.bf16.xpose.msra.mxu0 0
    %1602 = vmatprep.subr.bf16.mxu0 0
    %1603 = vmatpush1.bf16.xpose.msra.mxu0 0
    %1604 = vmatprep.subr.bf16.mxu0 0
    %1605 = vmatpush1.bf16.xpose.msra.mxu0 0
    %1606 = vmatprep.subr.bf16.mxu0 0
    %1607 = vmatpush1.bf16.xpose.msra.mxu0 0
    %1608 = vmatprep.subr.bf16.mxu0 0
    %1609 = vmatpush1.bf16.xpose.msra.mxu0 0
    %1610 = vmatprep.subr.bf16.mxu0 0
    %1611 = vmatpush1.bf16.xpose.msra.mxu0 0
    %1612 = vmatprep.mubr.bf16.mxu0 0
    %1613 = vmatmul.mubr.bf16.gmra.mrb[0].mxu0 %v1575
    %v1614 = vpop.f32.mrb[0].mxu0
    %v1615 = vadd.f32 0.0, %v1614
    %v1616 = vpop.f32.mrb[0].mxu0
    %v1617 = vpop.f32.mrb[0].mxu0
    %v1618 = vpop.f32.mrb[0].mxu0
    %1619 = vdwg.mxu0
    %1620 = vrot.lane.b32.xlu0 %v1570, 120
    %v1621 = vpop.permute.xlu0 %1620
    %1622 = vrot.lane.b32.xlu0 %v1570, 88
    %v1623 = vpop.permute.xlu0 %1622
    %v1625 = vsel %vm245, %v1621, 0
    %v1628 = vsel %vm245, %v1623, 0
    %1630 = vmatprep.subr.bf16.mxu0 0
    %1631 = vmatpush1.bf16.xpose.msra.mxu0 %v1628
    %1632 = vmatprep.subr.bf16.mxu0 0
    %1633 = vmatpush1.bf16.xpose.msra.mxu0 0
    %1634 = vmatprep.subr.bf16.mxu0 0
    %1635 = vmatpush1.bf16.xpose.msra.mxu0 0
    %1636 = vmatprep.subr.bf16.mxu0 0
    %1637 = vmatpush1.bf16.xpose.msra.mxu0 0
    %1638 = vmatprep.subr.bf16.mxu0 0
    %1639 = vmatpush1.bf16.xpose.msra.mxu0 0
    %1640 = vmatprep.subr.bf16.mxu0 0
    %1641 = vmatpush1.bf16.xpose.msra.mxu0 0
    %1642 = vmatprep.subr.bf16.mxu0 0
    %1643 = vmatpush1.bf16.xpose.msra.mxu0 0
    %1644 = vmatprep.subr.bf16.mxu0 0
    %1645 = vmatpush1.bf16.xpose.msra.mxu0 0
    %1646 = vmatprep.subr.bf16.mxu0 0
    %1647 = vmatpush1.bf16.xpose.msra.mxu0 0
    %1648 = vmatprep.subr.bf16.mxu0 0
    %1649 = vmatpush1.bf16.xpose.msra.mxu0 0
    %1650 = vmatprep.subr.bf16.mxu0 0
    %1651 = vmatpush1.bf16.xpose.msra.mxu0 0
    %1652 = vmatprep.subr.bf16.mxu0 0
    %1653 = vmatpush1.bf16.xpose.msra.mxu0 0
    %1654 = vmatprep.subr.bf16.mxu0 0
    %1655 = vmatpush1.bf16.xpose.msra.mxu0 0
    %1656 = vmatprep.subr.bf16.mxu0 0
    %1657 = vmatpush1.bf16.xpose.msra.mxu0 0
    %1658 = vmatprep.subr.bf16.mxu0 0
    %1659 = vmatpush1.bf16.xpose.msra.mxu0 0
    %1660 = vmatprep.subr.bf16.mxu0 0
    %1661 = vmatpush1.bf16.xpose.msra.mxu0 0
    %1662 = vmatprep.mubr.bf16.mxu0 0
    %1663 = vmatmul.mubr.bf16.gmra.mrb[0].mxu0 %v1625
    %v1664 = vpop.f32.mrb[0].mxu0
    %v1665 = vadd.f32 0.0, %v1664
    %v1666 = vpop.f32.mrb[0].mxu0
    %v1667 = vpop.f32.mrb[0].mxu0
    %v1668 = vpop.f32.mrb[0].mxu0
    %1669 = vdwg.mxu0
    %1670 = vrot.lane.b32.xlu0 %v1570, 112
    %v1671 = vpop.permute.xlu0 %1670
    %1672 = vrot.lane.b32.xlu0 %v1570, 80
    %v1673 = vpop.permute.xlu0 %1672
    %v1675 = vsel %vm245, %v1671, 0
    %v1678 = vsel %vm245, %v1673, 0
    %1680 = vmatprep.subr.bf16.mxu0 0
    %1681 = vmatpush1.bf16.xpose.msra.mxu0 %v1678
    %1682 = vmatprep.subr.bf16.mxu0 0
    %1683 = vmatpush1.bf16.xpose.msra.mxu0 0
    %1684 = vmatprep.subr.bf16.mxu0 0
    %1685 = vmatpush1.bf16.xpose.msra.mxu0 0
    %1686 = vmatprep.subr.bf16.mxu0 0
    %1687 = vmatpush1.bf16.xpose.msra.mxu0 0
    %1688 = vmatprep.subr.bf16.mxu0 0
    %1689 = vmatpush1.bf16.xpose.msra.mxu0 0
    %1690 = vmatprep.subr.bf16.mxu0 0
    %1691 = vmatpush1.bf16.xpose.msra.mxu0 0
    %1692 = vmatprep.subr.bf16.mxu0 0
    %1693 = vmatpush1.bf16.xpose.msra.mxu0 0
    %1694 = vmatprep.subr.bf16.mxu0 0
    %1695 = vmatpush1.bf16.xpose.msra.mxu0 0
    %1696 = vmatprep.subr.bf16.mxu0 0
    %1697 = vmatpush1.bf16.xpose.msra.mxu0 0
    %1698 = vmatprep.subr.bf16.mxu0 0
    %1699 = vmatpush1.bf16.xpose.msra.mxu0 0
    %1700 = vmatprep.subr.bf16.mxu0 0
    %1701 = vmatpush1.bf16.xpose.msra.mxu0 0
    %1702 = vmatprep.subr.bf16.mxu0 0
    %1703 = vmatpush1.bf16.xpose.msra.mxu0 0
    %1704 = vmatprep.subr.bf16.mxu0 0
    %1705 = vmatpush1.bf16.xpose.msra.mxu0 0
    %1706 = vmatprep.subr.bf16.mxu0 0
    %1707 = vmatpush1.bf16.xpose.msra.mxu0 0
    %1708 = vmatprep.subr.bf16.mxu0 0
    %1709 = vmatpush1.bf16.xpose.msra.mxu0 0
    %1710 = vmatprep.subr.bf16.mxu0 0
    %1711 = vmatpush1.bf16.xpose.msra.mxu0 0
    %1712 = vmatprep.mubr.bf16.mxu0 0
    %1713 = vmatmul.mubr.bf16.gmra.mrb[0].mxu0 %v1675
    %v1714 = vpop.f32.mrb[0].mxu0
    %v1715 = vadd.f32 0.0, %v1714
    %v1716 = vpop.f32.mrb[0].mxu0
    %v1717 = vpop.f32.mrb[0].mxu0
    %v1718 = vpop.f32.mrb[0].mxu0
    %1719 = vdwg.mxu0
    %1720 = vrot.lane.b32.xlu0 %v1570, 104
    %v1721 = vpop.permute.xlu0 %1720
    %1722 = vrot.lane.b32.xlu0 %v1570, 72
    %v1723 = vpop.permute.xlu0 %1722
    %v1725 = vsel %vm245, %v1721, 0
    %v1728 = vsel %vm245, %v1723, 0
    %1730 = vmatprep.subr.bf16.mxu0 0
    %1731 = vmatpush1.bf16.xpose.msra.mxu0 %v1728
    %1732 = vmatprep.subr.bf16.mxu0 0
    %1733 = vmatpush1.bf16.xpose.msra.mxu0 0
    %1734 = vmatprep.subr.bf16.mxu0 0
    %1735 = vmatpush1.bf16.xpose.msra.mxu0 0
    %1736 = vmatprep.subr.bf16.mxu0 0
    %1737 = vmatpush1.bf16.xpose.msra.mxu0 0
    %1738 = vmatprep.subr.bf16.mxu0 0
    %1739 = vmatpush1.bf16.xpose.msra.mxu0 0
    %1740 = vmatprep.subr.bf16.mxu0 0
    %1741 = vmatpush1.bf16.xpose.msra.mxu0 0
    %1742 = vmatprep.subr.bf16.mxu0 0
    %1743 = vmatpush1.bf16.xpose.msra.mxu0 0
    %1744 = vmatprep.subr.bf16.mxu0 0
    %1745 = vmatpush1.bf16.xpose.msra.mxu0 0
    %1746 = vmatprep.subr.bf16.mxu0 0
    %1747 = vmatpush1.bf16.xpose.msra.mxu0 0
    %1748 = vmatprep.subr.bf16.mxu0 0
    %1749 = vmatpush1.bf16.xpose.msra.mxu0 0
    %1750 = vmatprep.subr.bf16.mxu0 0
    %1751 = vmatpush1.bf16.xpose.msra.mxu0 0
    %1752 = vmatprep.subr.bf16.mxu0 0
    %1753 = vmatpush1.bf16.xpose.msra.mxu0 0
    %1754 = vmatprep.subr.bf16.mxu0 0
    %1755 = vmatpush1.bf16.xpose.msra.mxu0 0
    %1756 = vmatprep.subr.bf16.mxu0 0
    %1757 = vmatpush1.bf16.xpose.msra.mxu0 0
    %1758 = vmatprep.subr.bf16.mxu0 0
    %1759 = vmatpush1.bf16.xpose.msra.mxu0 0
    %1760 = vmatprep.subr.bf16.mxu0 0
    %1761 = vmatpush1.bf16.xpose.msra.mxu0 0
    %1762 = vmatprep.mubr.bf16.mxu0 0
    %1763 = vmatmul.mubr.bf16.gmra.mrb[0].mxu0 %v1725
    %v1764 = vpop.f32.mrb[0].mxu0
    %v1765 = vadd.f32 0.0, %v1764
    %v1766 = vpop.f32.mrb[0].mxu0
    %v1767 = vpop.f32.mrb[0].mxu0
    %v1768 = vpop.f32.mrb[0].mxu0
    %1769 = vdwg.mxu0
    %v1770 = vrot.slane %v1570, 4
    %1771 = vrot.lane.b32.xlu0 %v1770, 96
    %v1772 = vpop.permute.xlu0 %1771
    %v1774 = vsel %vm245, %v1770, 0
    %v1777 = vsel %vm245, %v1772, 0
    %1779 = vmatprep.subr.bf16.mxu0 0
    %1780 = vmatpush1.bf16.xpose.msra.mxu0 %v1777
    %1781 = vmatprep.subr.bf16.mxu0 0
    %1782 = vmatpush1.bf16.xpose.msra.mxu0 0
    %1783 = vmatprep.subr.bf16.mxu0 0
    %1784 = vmatpush1.bf16.xpose.msra.mxu0 0
    %1785 = vmatprep.subr.bf16.mxu0 0
    %1786 = vmatpush1.bf16.xpose.msra.mxu0 0
    %1787 = vmatprep.subr.bf16.mxu0 0
    %1788 = vmatpush1.bf16.xpose.msra.mxu0 0
    %1789 = vmatprep.subr.bf16.mxu0 0
    %1790 = vmatpush1.bf16.xpose.msra.mxu0 0
    %1791 = vmatprep.subr.bf16.mxu0 0
    %1792 = vmatpush1.bf16.xpose.msra.mxu0 0
    %1793 = vmatprep.subr.bf16.mxu0 0
    %1794 = vmatpush1.bf16.xpose.msra.mxu0 0
    %1795 = vmatprep.subr.bf16.mxu0 0
    %1796 = vmatpush1.bf16.xpose.msra.mxu0 0
    %1797 = vmatprep.subr.bf16.mxu0 0
    %1798 = vmatpush1.bf16.xpose.msra.mxu0 0
    %1799 = vmatprep.subr.bf16.mxu0 0
    %1800 = vmatpush1.bf16.xpose.msra.mxu0 0
    %1801 = vmatprep.subr.bf16.mxu0 0
    %1802 = vmatpush1.bf16.xpose.msra.mxu0 0
    %1803 = vmatprep.subr.bf16.mxu0 0
    %1804 = vmatpush1.bf16.xpose.msra.mxu0 0
    %1805 = vmatprep.subr.bf16.mxu0 0
    %1806 = vmatpush1.bf16.xpose.msra.mxu0 0
    %1807 = vmatprep.subr.bf16.mxu0 0
    %1808 = vmatpush1.bf16.xpose.msra.mxu0 0
    %1809 = vmatprep.subr.bf16.mxu0 0
    %1810 = vmatpush1.bf16.xpose.msra.mxu0 0
    %1811 = vmatprep.mubr.bf16.mxu0 0
    %1812 = vmatmul.mubr.bf16.gmra.mrb[0].mxu0 %v1774
    %v1813 = vpop.f32.mrb[0].mxu0
    %v1814 = vadd.f32 0.0, %v1813
    %v1815 = vpop.f32.mrb[0].mxu0
    %v1816 = vpop.f32.mrb[0].mxu0
    %v1817 = vpop.f32.mrb[0].mxu0
    %1818 = vdwg.mxu0
    %1819 = vrot.lane.b32.xlu0 %v1770, 120
    %v1820 = vpop.permute.xlu0 %1819
    %1821 = vrot.lane.b32.xlu0 %v1770, 88
    %v1822 = vpop.permute.xlu0 %1821
    %v1824 = vsel %vm245, %v1820, 0
    %v1827 = vsel %vm245, %v1822, 0
    %1829 = vmatprep.subr.bf16.mxu0 0
    %1830 = vmatpush1.bf16.xpose.msra.mxu0 %v1827
    %1831 = vmatprep.subr.bf16.mxu0 0
    %1832 = vmatpush1.bf16.xpose.msra.mxu0 0
    %1833 = vmatprep.subr.bf16.mxu0 0
    %1834 = vmatpush1.bf16.xpose.msra.mxu0 0
    %1835 = vmatprep.subr.bf16.mxu0 0
    %1836 = vmatpush1.bf16.xpose.msra.mxu0 0
    %1837 = vmatprep.subr.bf16.mxu0 0
    %1838 = vmatpush1.bf16.xpose.msra.mxu0 0
    %1839 = vmatprep.subr.bf16.mxu0 0
    %1840 = vmatpush1.bf16.xpose.msra.mxu0 0
    %1841 = vmatprep.subr.bf16.mxu0 0
    %1842 = vmatpush1.bf16.xpose.msra.mxu0 0
    %1843 = vmatprep.subr.bf16.mxu0 0
    %1844 = vmatpush1.bf16.xpose.msra.mxu0 0
    %1845 = vmatprep.subr.bf16.mxu0 0
    %1846 = vmatpush1.bf16.xpose.msra.mxu0 0
    %1847 = vmatprep.subr.bf16.mxu0 0
    %1848 = vmatpush1.bf16.xpose.msra.mxu0 0
    %1849 = vmatprep.subr.bf16.mxu0 0
    %1850 = vmatpush1.bf16.xpose.msra.mxu0 0
    %1851 = vmatprep.subr.bf16.mxu0 0
    %1852 = vmatpush1.bf16.xpose.msra.mxu0 0
    %1853 = vmatprep.subr.bf16.mxu0 0
    %1854 = vmatpush1.bf16.xpose.msra.mxu0 0
    %1855 = vmatprep.subr.bf16.mxu0 0
    %1856 = vmatpush1.bf16.xpose.msra.mxu0 0
    %1857 = vmatprep.subr.bf16.mxu0 0
    %1858 = vmatpush1.bf16.xpose.msra.mxu0 0
    %1859 = vmatprep.subr.bf16.mxu0 0
    %1860 = vmatpush1.bf16.xpose.msra.mxu0 0
    %1861 = vmatprep.mubr.bf16.mxu0 0
    %1862 = vmatmul.mubr.bf16.gmra.mrb[0].mxu0 %v1824
    %v1863 = vpop.f32.mrb[0].mxu0
    %v1864 = vadd.f32 0.0, %v1863
    %v1865 = vpop.f32.mrb[0].mxu0
    %v1866 = vpop.f32.mrb[0].mxu0
    %v1867 = vpop.f32.mrb[0].mxu0
    %1868 = vdwg.mxu0
    %1869 = vrot.lane.b32.xlu0 %v1770, 112
    %v1870 = vpop.permute.xlu0 %1869
    %1871 = vrot.lane.b32.xlu0 %v1770, 80
    %v1872 = vpop.permute.xlu0 %1871
    %v1874 = vsel %vm245, %v1870, 0
    %v1877 = vsel %vm245, %v1872, 0
    %1879 = vmatprep.subr.bf16.mxu0 0
    %1880 = vmatpush1.bf16.xpose.msra.mxu0 %v1877
    %1881 = vmatprep.subr.bf16.mxu0 0
    %1882 = vmatpush1.bf16.xpose.msra.mxu0 0
    %1883 = vmatprep.subr.bf16.mxu0 0
    %1884 = vmatpush1.bf16.xpose.msra.mxu0 0
    %1885 = vmatprep.subr.bf16.mxu0 0
    %1886 = vmatpush1.bf16.xpose.msra.mxu0 0
    %1887 = vmatprep.subr.bf16.mxu0 0
    %1888 = vmatpush1.bf16.xpose.msra.mxu0 0
    %1889 = vmatprep.subr.bf16.mxu0 0
    %1890 = vmatpush1.bf16.xpose.msra.mxu0 0
    %1891 = vmatprep.subr.bf16.mxu0 0
    %1892 = vmatpush1.bf16.xpose.msra.mxu0 0
    %1893 = vmatprep.subr.bf16.mxu0 0
    %1894 = vmatpush1.bf16.xpose.msra.mxu0 0
    %1895 = vmatprep.subr.bf16.mxu0 0
    %1896 = vmatpush1.bf16.xpose.msra.mxu0 0
    %1897 = vmatprep.subr.bf16.mxu0 0
    %1898 = vmatpush1.bf16.xpose.msra.mxu0 0
    %1899 = vmatprep.subr.bf16.mxu0 0
    %1900 = vmatpush1.bf16.xpose.msra.mxu0 0
    %1901 = vmatprep.subr.bf16.mxu0 0
    %1902 = vmatpush1.bf16.xpose.msra.mxu0 0
    %1903 = vmatprep.subr.bf16.mxu0 0
    %1904 = vmatpush1.bf16.xpose.msra.mxu0 0
    %1905 = vmatprep.subr.bf16.mxu0 0
    %1906 = vmatpush1.bf16.xpose.msra.mxu0 0
    %1907 = vmatprep.subr.bf16.mxu0 0
    %1908 = vmatpush1.bf16.xpose.msra.mxu0 0
    %1909 = vmatprep.subr.bf16.mxu0 0
    %1910 = vmatpush1.bf16.xpose.msra.mxu0 0
    %1911 = vmatprep.mubr.bf16.mxu0 0
    %1912 = vmatmul.mubr.bf16.gmra.mrb[0].mxu0 %v1874
    %v1913 = vpop.f32.mrb[0].mxu0
    %v1914 = vadd.f32 0.0, %v1913
    %v1915 = vpop.f32.mrb[0].mxu0
    %v1916 = vpop.f32.mrb[0].mxu0
    %v1917 = vpop.f32.mrb[0].mxu0
    %1918 = vdwg.mxu0
    %1919 = vrot.lane.b32.xlu0 %v1770, 104
    %v1920 = vpop.permute.xlu0 %1919
    %1921 = vrot.lane.b32.xlu0 %v1770, 72
    %v1922 = vpop.permute.xlu0 %1921
    %v1924 = vsel %vm245, %v1920, 0
    %v1927 = vsel %vm245, %v1922, 0
    %1929 = vmatprep.subr.bf16.mxu0 0
    %1930 = vmatpush1.bf16.xpose.msra.mxu0 %v1927
    %1931 = vmatprep.subr.bf16.mxu0 0
    %1932 = vmatpush1.bf16.xpose.msra.mxu0 0
    %1933 = vmatprep.subr.bf16.mxu0 0
    %1934 = vmatpush1.bf16.xpose.msra.mxu0 0
    %1935 = vmatprep.subr.bf16.mxu0 0
    %1936 = vmatpush1.bf16.xpose.msra.mxu0 0
    %1937 = vmatprep.subr.bf16.mxu0 0
    %1938 = vmatpush1.bf16.xpose.msra.mxu0 0
    %1939 = vmatprep.subr.bf16.mxu0 0
    %1940 = vmatpush1.bf16.xpose.msra.mxu0 0
    %1941 = vmatprep.subr.bf16.mxu0 0
    %1942 = vmatpush1.bf16.xpose.msra.mxu0 0
    %1943 = vmatprep.subr.bf16.mxu0 0
    %1944 = vmatpush1.bf16.xpose.msra.mxu0 0
    %1945 = vmatprep.subr.bf16.mxu0 0
    %1946 = vmatpush1.bf16.xpose.msra.mxu0 0
    %1947 = vmatprep.subr.bf16.mxu0 0
    %1948 = vmatpush1.bf16.xpose.msra.mxu0 0
    %1949 = vmatprep.subr.bf16.mxu0 0
    %1950 = vmatpush1.bf16.xpose.msra.mxu0 0
    %1951 = vmatprep.subr.bf16.mxu0 0
    %1952 = vmatpush1.bf16.xpose.msra.mxu0 0
    %1953 = vmatprep.subr.bf16.mxu0 0
    %1954 = vmatpush1.bf16.xpose.msra.mxu0 0
    %1955 = vmatprep.subr.bf16.mxu0 0
    %1956 = vmatpush1.bf16.xpose.msra.mxu0 0
    %1957 = vmatprep.subr.bf16.mxu0 0
    %1958 = vmatpush1.bf16.xpose.msra.mxu0 0
    %1959 = vmatprep.subr.bf16.mxu0 0
    %1960 = vmatpush1.bf16.xpose.msra.mxu0 0
    %1961 = vmatprep.mubr.bf16.mxu0 0
    %1962 = vmatmul.mubr.bf16.gmra.mrb[0].mxu0 %v1924
    %v1963 = vpop.f32.mrb[0].mxu0
    %v1964 = vadd.f32 0.0, %v1963
    %v1965 = vpop.f32.mrb[0].mxu0
    %v1966 = vpop.f32.mrb[0].mxu0
    %v1967 = vpop.f32.mrb[0].mxu0
    %1968 = vdwg.mxu0
    %v1969 = vmul.f32 %v1615, 0.35355338
    %v1970 = vmul.f32 %v1665, 0.35355338
    %v1971 = vmul.f32 %v1715, 0.35355338
    %v1972 = vmul.f32 %v1765, 0.35355338
    %v1973 = vmul.f32 %v1814, 0.35355338
    %v1974 = vmul.f32 %v1864, 0.35355338
    %v1975 = vmul.f32 %v1914, 0.35355338
    %v1976 = vmul.f32 %v1964, 0.35355338
    %v1977 = vsel %vm245, %v1969, -inf
    %1978 = vmax.xlane.f32.xlu0 %v1977
    %v1979 = vpop.xlane.xlu0 %1978
    %v1980 = vsel %vm245, %v1970, -inf
    %1981 = vmax.xlane.f32.xlu0 %v1980
    %v1982 = vpop.xlane.xlu0 %1981
    %v1983 = vsel %vm245, %v1971, -inf
    %1984 = vmax.xlane.f32.xlu0 %v1983
    %v1985 = vpop.xlane.xlu0 %1984
    %v1986 = vsel %vm245, %v1972, -inf
    %1987 = vmax.xlane.f32.xlu0 %v1986
    %v1988 = vpop.xlane.xlu0 %1987
    %v1989 = vsel %vm245, %v1973, -inf
    %1990 = vmax.xlane.f32.xlu0 %v1989
    %v1991 = vpop.xlane.xlu0 %1990
    %v1992 = vsel %vm245, %v1974, -inf
    %1993 = vmax.xlane.f32.xlu0 %v1992
    %v1994 = vpop.xlane.xlu0 %1993
    %v1995 = vsel %vm245, %v1975, -inf
    %1996 = vmax.xlane.f32.xlu0 %v1995
    %v1997 = vpop.xlane.xlu0 %1996
    %v1998 = vsel %vm245, %v1976, -inf
    %1999 = vmax.xlane.f32.xlu0 %v1998
    %v2000 = vpop.xlane.xlu0 %1999
    %v2001 = vsub.f32 %v1969, %v1979
    %v2002 = vsub.f32 %v1970, %v1982
    %v2003 = vsub.f32 %v1971, %v1985
    %v2004 = vsub.f32 %v1972, %v1988
    %v2005 = vsub.f32 %v1973, %v1991
    %v2006 = vsub.f32 %v1974, %v1994
    %v2007 = vsub.f32 %v1975, %v1997
    %v2008 = vsub.f32 %v1976, %v2000
    %v2009 = vmul.f32 %v2001, 1.442695
    %v2010 = vpow.pop %v2009
    %v2011 = vmul.f32 %v2002, 1.442695
    %v2012 = vpow.pop %v2011
    %v2013 = vmul.f32 %v2003, 1.442695
    %v2014 = vpow.pop %v2013
    %v2015 = vmul.f32 %v2004, 1.442695
    %v2016 = vpow.pop %v2015
    %v2017 = vmul.f32 %v2005, 1.442695
    %v2018 = vpow.pop %v2017
    %v2019 = vmul.f32 %v2006, 1.442695
    %v2020 = vpow.pop %v2019
    %v2021 = vmul.f32 %v2007, 1.442695
    %v2022 = vpow.pop %v2021
    %v2023 = vmul.f32 %v2008, 1.442695
    %v2024 = vpow.pop %v2023
    %v2025 = vsel %vm245, %v2010, 0.0
    %2026 = vadd.xlane.f32.xlu0 %v2025
    %v2027 = vpop.xlane.xlu0 %2026
    %v2028 = vsel %vm245, %v2012, 0.0
    %2029 = vadd.xlane.f32.xlu0 %v2028
    %v2030 = vpop.xlane.xlu0 %2029
    %v2031 = vsel %vm245, %v2014, 0.0
    %2032 = vadd.xlane.f32.xlu0 %v2031
    %v2033 = vpop.xlane.xlu0 %2032
    %v2034 = vsel %vm245, %v2016, 0.0
    %2035 = vadd.xlane.f32.xlu0 %v2034
    %v2036 = vpop.xlane.xlu0 %2035
    %v2037 = vsel %vm245, %v2018, 0.0
    %2038 = vadd.xlane.f32.xlu0 %v2037
    %v2039 = vpop.xlane.xlu0 %2038
    %v2040 = vsel %vm245, %v2020, 0.0
    %2041 = vadd.xlane.f32.xlu0 %v2040
    %v2042 = vpop.xlane.xlu0 %2041
    %v2043 = vsel %vm245, %v2022, 0.0
    %2044 = vadd.xlane.f32.xlu0 %v2043
    %v2045 = vpop.xlane.xlu0 %2044
    %v2046 = vsel %vm245, %v2024, 0.0
    %2047 = vadd.xlane.f32.xlu0 %v2046
    %v2048 = vpop.xlane.xlu0 %2047
    %v2049 = vrcp.pop %v2027
    %v2050 = vrcp.pop %v2030
    %v2051 = vrcp.pop %v2033
    %v2052 = vrcp.pop %v2036
    %v2053 = vrcp.pop %v2039
    %v2054 = vrcp.pop %v2042
    %v2055 = vrcp.pop %v2045
    %v2056 = vrcp.pop %v2048
    %v2057 = vmul.f32 %v2010, %v2049
    %v2058 = vmul.f32 %v2012, %v2050
    %v2059 = vmul.f32 %v2014, %v2051
    %v2060 = vmul.f32 %v2016, %v2052
    %v2061 = vmul.f32 %v2018, %v2053
    %v2062 = vmul.f32 %v2020, %v2054
    %v2063 = vmul.f32 %v2022, %v2055
    %v2064 = vmul.f32 %v2024, %v2056
    %v2065 = vpack.c.bf16 %v2058, %v2057
    %v2066 = vpack.c.bf16 %v2060, %v2059
    %v2067 = vpack.c.bf16 %v2062, %v2061
    %v2068 = vpack.c.bf16 %v2064, %v2063
    %2069 = vrot.lane.b32.xlu0 %v1570, 64
    %v2070 = vpop.permute.xlu0 %2069
    %v2072 = vsel %vm245, %v2065, 0
    %v2075 = vsel %vm746, %v2070, 0
    %2077 = vmatprep.subr.bf16.mxu0 0
    %2078 = vmatpush1.bf16.msra.mxu0 %v2075
    %2079 = vmatprep.subr.bf16.mxu0 0
    %2080 = vmatpush1.bf16.msra.mxu0 0
    %2081 = vmatprep.subr.bf16.mxu0 0
    %2082 = vmatpush1.bf16.msra.mxu0 0
    %2083 = vmatprep.subr.bf16.mxu0 0
    %2084 = vmatpush1.bf16.msra.mxu0 0
    %2085 = vmatprep.subr.bf16.mxu0 0
    %2086 = vmatpush1.bf16.msra.mxu0 0
    %2087 = vmatprep.subr.bf16.mxu0 0
    %2088 = vmatpush1.bf16.msra.mxu0 0
    %2089 = vmatprep.subr.bf16.mxu0 0
    %2090 = vmatpush1.bf16.msra.mxu0 0
    %2091 = vmatprep.subr.bf16.mxu0 0
    %2092 = vmatpush1.bf16.msra.mxu0 0
    %2093 = vmatprep.subr.bf16.mxu0 0
    %2094 = vmatpush1.bf16.msra.mxu0 0
    %2095 = vmatprep.subr.bf16.mxu0 0
    %2096 = vmatpush1.bf16.msra.mxu0 0
    %2097 = vmatprep.subr.bf16.mxu0 0
    %2098 = vmatpush1.bf16.msra.mxu0 0
    %2099 = vmatprep.subr.bf16.mxu0 0
    %2100 = vmatpush1.bf16.msra.mxu0 0
    %2101 = vmatprep.subr.bf16.mxu0 0
    %2102 = vmatpush1.bf16.msra.mxu0 0
    %2103 = vmatprep.subr.bf16.mxu0 0
    %2104 = vmatpush1.bf16.msra.mxu0 0
    %2105 = vmatprep.subr.bf16.mxu0 0
    %2106 = vmatpush1.bf16.msra.mxu0 0
    %2107 = vmatprep.subr.bf16.mxu0 0
    %2108 = vmatpush1.bf16.msra.mxu0 0
    %2109 = vmatprep.mubr.bf16.mxu0 0
    %2110 = vmatmul.mubr.bf16.gmra.mrb[0].mxu0 %v2072
    %v2111 = vpop.f32.mrb[0].mxu0
    %v2112 = vadd.f32 0.0, %v2111
    %v2113 = vpop.f32.mrb[0].mxu0
    %v2114 = vpop.f32.mrb[0].mxu0
    %v2115 = vpop.f32.mrb[0].mxu0
    %2116 = vdwg.mxu0
    %v2118 = vrot.slane %v2065, 4
    %2119 = vrot.lane.b32.xlu0 %v1570, 56
    %v2120 = vpop.permute.xlu0 %2119
    %v2122 = vsel %vm245, %v2118, 0
    %v2125 = vsel %vm746, %v2120, 0
    %2127 = vmatprep.subr.bf16.mxu0 0
    %2128 = vmatpush1.bf16.msra.mxu0 %v2125
    %2129 = vmatprep.subr.bf16.mxu0 0
    %2130 = vmatpush1.bf16.msra.mxu0 0
    %2131 = vmatprep.subr.bf16.mxu0 0
    %2132 = vmatpush1.bf16.msra.mxu0 0
    %2133 = vmatprep.subr.bf16.mxu0 0
    %2134 = vmatpush1.bf16.msra.mxu0 0
    %2135 = vmatprep.subr.bf16.mxu0 0
    %2136 = vmatpush1.bf16.msra.mxu0 0
    %2137 = vmatprep.subr.bf16.mxu0 0
    %2138 = vmatpush1.bf16.msra.mxu0 0
    %2139 = vmatprep.subr.bf16.mxu0 0
    %2140 = vmatpush1.bf16.msra.mxu0 0
    %2141 = vmatprep.subr.bf16.mxu0 0
    %2142 = vmatpush1.bf16.msra.mxu0 0
    %2143 = vmatprep.subr.bf16.mxu0 0
    %2144 = vmatpush1.bf16.msra.mxu0 0
    %2145 = vmatprep.subr.bf16.mxu0 0
    %2146 = vmatpush1.bf16.msra.mxu0 0
    %2147 = vmatprep.subr.bf16.mxu0 0
    %2148 = vmatpush1.bf16.msra.mxu0 0
    %2149 = vmatprep.subr.bf16.mxu0 0
    %2150 = vmatpush1.bf16.msra.mxu0 0
    %2151 = vmatprep.subr.bf16.mxu0 0
    %2152 = vmatpush1.bf16.msra.mxu0 0
    %2153 = vmatprep.subr.bf16.mxu0 0
    %2154 = vmatpush1.bf16.msra.mxu0 0
    %2155 = vmatprep.subr.bf16.mxu0 0
    %2156 = vmatpush1.bf16.msra.mxu0 0
    %2157 = vmatprep.subr.bf16.mxu0 0
    %2158 = vmatpush1.bf16.msra.mxu0 0
    %2159 = vmatprep.mubr.bf16.mxu0 0
    %2160 = vmatmul.mubr.bf16.gmra.mrb[0].mxu0 %v2122
    %v2161 = vpop.f32.mrb[0].mxu0
    %v2162 = vadd.f32 0.0, %v2161
    %v2163 = vpop.f32.mrb[0].mxu0
    %v2164 = vpop.f32.mrb[0].mxu0
    %v2165 = vpop.f32.mrb[0].mxu0
    %2166 = vdwg.mxu0
    %2167 = vrot.lane.b32.xlu0 %v1570, 48
    %v2168 = vpop.permute.xlu0 %2167
    %v2170 = vsel %vm245, %v2066, 0
    %v2173 = vsel %vm746, %v2168, 0
    %2175 = vmatprep.subr.bf16.mxu0 0
    %2176 = vmatpush1.bf16.msra.mxu0 %v2173
    %2177 = vmatprep.subr.bf16.mxu0 0
    %2178 = vmatpush1.bf16.msra.mxu0 0
    %2179 = vmatprep.subr.bf16.mxu0 0
    %2180 = vmatpush1.bf16.msra.mxu0 0
    %2181 = vmatprep.subr.bf16.mxu0 0
    %2182 = vmatpush1.bf16.msra.mxu0 0
    %2183 = vmatprep.subr.bf16.mxu0 0
    %2184 = vmatpush1.bf16.msra.mxu0 0
    %2185 = vmatprep.subr.bf16.mxu0 0
    %2186 = vmatpush1.bf16.msra.mxu0 0
    %2187 = vmatprep.subr.bf16.mxu0 0
    %2188 = vmatpush1.bf16.msra.mxu0 0
    %2189 = vmatprep.subr.bf16.mxu0 0
    %2190 = vmatpush1.bf16.msra.mxu0 0
    %2191 = vmatprep.subr.bf16.mxu0 0
    %2192 = vmatpush1.bf16.msra.mxu0 0
    %2193 = vmatprep.subr.bf16.mxu0 0
    %2194 = vmatpush1.bf16.msra.mxu0 0
    %2195 = vmatprep.subr.bf16.mxu0 0
    %2196 = vmatpush1.bf16.msra.mxu0 0
    %2197 = vmatprep.subr.bf16.mxu0 0
    %2198 = vmatpush1.bf16.msra.mxu0 0
    %2199 = vmatprep.subr.bf16.mxu0 0
    %2200 = vmatpush1.bf16.msra.mxu0 0
    %2201 = vmatprep.subr.bf16.mxu0 0
    %2202 = vmatpush1.bf16.msra.mxu0 0
    %2203 = vmatprep.subr.bf16.mxu0 0
    %2204 = vmatpush1.bf16.msra.mxu0 0
    %2205 = vmatprep.subr.bf16.mxu0 0
    %2206 = vmatpush1.bf16.msra.mxu0 0
    %2207 = vmatprep.mubr.bf16.mxu0 0
    %2208 = vmatmul.mubr.bf16.gmra.mrb[0].mxu0 %v2170
    %v2209 = vpop.f32.mrb[0].mxu0
    %v2210 = vadd.f32 0.0, %v2209
    %v2211 = vpop.f32.mrb[0].mxu0
    %v2212 = vpop.f32.mrb[0].mxu0
    %v2213 = vpop.f32.mrb[0].mxu0
    %2214 = vdwg.mxu0
    %v2216 = vrot.slane %v2066, 4
    %2217 = vrot.lane.b32.xlu0 %v1570, 40
    %v2218 = vpop.permute.xlu0 %2217
    %v2220 = vsel %vm245, %v2216, 0
    %v2223 = vsel %vm746, %v2218, 0
    %2225 = vmatprep.subr.bf16.mxu0 0
    %2226 = vmatpush1.bf16.msra.mxu0 %v2223
    %2227 = vmatprep.subr.bf16.mxu0 0
    %2228 = vmatpush1.bf16.msra.mxu0 0
    %2229 = vmatprep.subr.bf16.mxu0 0
    %2230 = vmatpush1.bf16.msra.mxu0 0
    %2231 = vmatprep.subr.bf16.mxu0 0
    %2232 = vmatpush1.bf16.msra.mxu0 0
    %2233 = vmatprep.subr.bf16.mxu0 0
    %2234 = vmatpush1.bf16.msra.mxu0 0
    %2235 = vmatprep.subr.bf16.mxu0 0
    %2236 = vmatpush1.bf16.msra.mxu0 0
    %2237 = vmatprep.subr.bf16.mxu0 0
    %2238 = vmatpush1.bf16.msra.mxu0 0
    %2239 = vmatprep.subr.bf16.mxu0 0
    %2240 = vmatpush1.bf16.msra.mxu0 0
    %2241 = vmatprep.subr.bf16.mxu0 0
    %2242 = vmatpush1.bf16.msra.mxu0 0
    %2243 = vmatprep.subr.bf16.mxu0 0
    %2244 = vmatpush1.bf16.msra.mxu0 0
    %2245 = vmatprep.subr.bf16.mxu0 0
    %2246 = vmatpush1.bf16.msra.mxu0 0
    %2247 = vmatprep.subr.bf16.mxu0 0
    %2248 = vmatpush1.bf16.msra.mxu0 0
    %2249 = vmatprep.subr.bf16.mxu0 0
    %2250 = vmatpush1.bf16.msra.mxu0 0
    %2251 = vmatprep.subr.bf16.mxu0 0
    %2252 = vmatpush1.bf16.msra.mxu0 0
    %2253 = vmatprep.subr.bf16.mxu0 0
    %2254 = vmatpush1.bf16.msra.mxu0 0
    %2255 = vmatprep.subr.bf16.mxu0 0
    %2256 = vmatpush1.bf16.msra.mxu0 0
    %2257 = vmatprep.mubr.bf16.mxu0 0
    %2258 = vmatmul.mubr.bf16.gmra.mrb[0].mxu0 %v2220
    %v2259 = vpop.f32.mrb[0].mxu0
    %v2260 = vadd.f32 0.0, %v2259
    %v2261 = vpop.f32.mrb[0].mxu0
    %v2262 = vpop.f32.mrb[0].mxu0
    %v2263 = vpop.f32.mrb[0].mxu0
    %2264 = vdwg.mxu0
    %2266 = vrot.lane.b32.xlu0 %v2162, 8
    %v2267 = vpop.permute.xlu0 %2266
    %2270 = vrot.lane.b32.xlu0 %v2210, 16
    %v2271 = vpop.permute.xlu0 %2270
    %2274 = vrot.lane.b32.xlu0 %v2260, 24
    %v2275 = vpop.permute.xlu0 %2274
    %v2277 = vsel %vm245, %v2112, %v2267
    %v2278 = vsel %vm951, %v2277, %v2271
    %v2279 = vsel %vm953, %v2278, %v2275
    %2280 = vrot.lane.b32.xlu0 %v1770, 64
    %v2281 = vpop.permute.xlu0 %2280
    %v2283 = vsel %vm245, %v2067, 0
    %v2286 = vsel %vm746, %v2281, 0
    %2288 = vmatprep.subr.bf16.mxu0 0
    %2289 = vmatpush1.bf16.msra.mxu0 %v2286
    %2290 = vmatprep.subr.bf16.mxu0 0
    %2291 = vmatpush1.bf16.msra.mxu0 0
    %2292 = vmatprep.subr.bf16.mxu0 0
    %2293 = vmatpush1.bf16.msra.mxu0 0
    %2294 = vmatprep.subr.bf16.mxu0 0
    %2295 = vmatpush1.bf16.msra.mxu0 0
    %2296 = vmatprep.subr.bf16.mxu0 0
    %2297 = vmatpush1.bf16.msra.mxu0 0
    %2298 = vmatprep.subr.bf16.mxu0 0
    %2299 = vmatpush1.bf16.msra.mxu0 0
    %2300 = vmatprep.subr.bf16.mxu0 0
    %2301 = vmatpush1.bf16.msra.mxu0 0
    %2302 = vmatprep.subr.bf16.mxu0 0
    %2303 = vmatpush1.bf16.msra.mxu0 0
    %2304 = vmatprep.subr.bf16.mxu0 0
    %2305 = vmatpush1.bf16.msra.mxu0 0
    %2306 = vmatprep.subr.bf16.mxu0 0
    %2307 = vmatpush1.bf16.msra.mxu0 0
    %2308 = vmatprep.subr.bf16.mxu0 0
    %2309 = vmatpush1.bf16.msra.mxu0 0
    %2310 = vmatprep.subr.bf16.mxu0 0
    %2311 = vmatpush1.bf16.msra.mxu0 0
    %2312 = vmatprep.subr.bf16.mxu0 0
    %2313 = vmatpush1.bf16.msra.mxu0 0
    %2314 = vmatprep.subr.bf16.mxu0 0
    %2315 = vmatpush1.bf16.msra.mxu0 0
    %2316 = vmatprep.subr.bf16.mxu0 0
    %2317 = vmatpush1.bf16.msra.mxu0 0
    %2318 = vmatprep.subr.bf16.mxu0 0
    %2319 = vmatpush1.bf16.msra.mxu0 0
    %2320 = vmatprep.mubr.bf16.mxu0 0
    %2321 = vmatmul.mubr.bf16.gmra.mrb[0].mxu0 %v2283
    %v2322 = vpop.f32.mrb[0].mxu0
    %v2323 = vadd.f32 0.0, %v2322
    %v2324 = vpop.f32.mrb[0].mxu0
    %v2325 = vpop.f32.mrb[0].mxu0
    %v2326 = vpop.f32.mrb[0].mxu0
    %2327 = vdwg.mxu0
    %v2329 = vrot.slane %v2067, 4
    %2330 = vrot.lane.b32.xlu0 %v1770, 56
    %v2331 = vpop.permute.xlu0 %2330
    %v2333 = vsel %vm245, %v2329, 0
    %v2336 = vsel %vm746, %v2331, 0
    %2338 = vmatprep.subr.bf16.mxu0 0
    %2339 = vmatpush1.bf16.msra.mxu0 %v2336
    %2340 = vmatprep.subr.bf16.mxu0 0
    %2341 = vmatpush1.bf16.msra.mxu0 0
    %2342 = vmatprep.subr.bf16.mxu0 0
    %2343 = vmatpush1.bf16.msra.mxu0 0
    %2344 = vmatprep.subr.bf16.mxu0 0
    %2345 = vmatpush1.bf16.msra.mxu0 0
    %2346 = vmatprep.subr.bf16.mxu0 0
    %2347 = vmatpush1.bf16.msra.mxu0 0
    %2348 = vmatprep.subr.bf16.mxu0 0
    %2349 = vmatpush1.bf16.msra.mxu0 0
    %2350 = vmatprep.subr.bf16.mxu0 0
    %2351 = vmatpush1.bf16.msra.mxu0 0
    %2352 = vmatprep.subr.bf16.mxu0 0
    %2353 = vmatpush1.bf16.msra.mxu0 0
    %2354 = vmatprep.subr.bf16.mxu0 0
    %2355 = vmatpush1.bf16.msra.mxu0 0
    %2356 = vmatprep.subr.bf16.mxu0 0
    %2357 = vmatpush1.bf16.msra.mxu0 0
    %2358 = vmatprep.subr.bf16.mxu0 0
    %2359 = vmatpush1.bf16.msra.mxu0 0
    %2360 = vmatprep.subr.bf16.mxu0 0
    %2361 = vmatpush1.bf16.msra.mxu0 0
    %2362 = vmatprep.subr.bf16.mxu0 0
    %2363 = vmatpush1.bf16.msra.mxu0 0
    %2364 = vmatprep.subr.bf16.mxu0 0
    %2365 = vmatpush1.bf16.msra.mxu0 0
    %2366 = vmatprep.subr.bf16.mxu0 0
    %2367 = vmatpush1.bf16.msra.mxu0 0
    %2368 = vmatprep.subr.bf16.mxu0 0
    %2369 = vmatpush1.bf16.msra.mxu0 0
    %2370 = vmatprep.mubr.bf16.mxu0 0
    %2371 = vmatmul.mubr.bf16.gmra.mrb[0].mxu0 %v2333
    %v2372 = vpop.f32.mrb[0].mxu0
    %v2373 = vadd.f32 0.0, %v2372
    %v2374 = vpop.f32.mrb[0].mxu0
    %v2375 = vpop.f32.mrb[0].mxu0
    %v2376 = vpop.f32.mrb[0].mxu0
    %2377 = vdwg.mxu0
    %2378 = vrot.lane.b32.xlu0 %v1770, 48
    %v2379 = vpop.permute.xlu0 %2378
    %v2381 = vsel %vm245, %v2068, 0
    %v2384 = vsel %vm746, %v2379, 0
    %2386 = vmatprep.subr.bf16.mxu0 0
    %2387 = vmatpush1.bf16.msra.mxu0 %v2384
    %2388 = vmatprep.subr.bf16.mxu0 0
    %2389 = vmatpush1.bf16.msra.mxu0 0
    %2390 = vmatprep.subr.bf16.mxu0 0
    %2391 = vmatpush1.bf16.msra.mxu0 0
    %2392 = vmatprep.subr.bf16.mxu0 0
    %2393 = vmatpush1.bf16.msra.mxu0 0
    %2394 = vmatprep.subr.bf16.mxu0 0
    %2395 = vmatpush1.bf16.msra.mxu0 0
    %2396 = vmatprep.subr.bf16.mxu0 0
    %2397 = vmatpush1.bf16.msra.mxu0 0
    %2398 = vmatprep.subr.bf16.mxu0 0
    %2399 = vmatpush1.bf16.msra.mxu0 0
    %2400 = vmatprep.subr.bf16.mxu0 0
    %2401 = vmatpush1.bf16.msra.mxu0 0
    %2402 = vmatprep.subr.bf16.mxu0 0
    %2403 = vmatpush1.bf16.msra.mxu0 0
    %2404 = vmatprep.subr.bf16.mxu0 0
    %2405 = vmatpush1.bf16.msra.mxu0 0
    %2406 = vmatprep.subr.bf16.mxu0 0
    %2407 = vmatpush1.bf16.msra.mxu0 0
    %2408 = vmatprep.subr.bf16.mxu0 0
    %2409 = vmatpush1.bf16.msra.mxu0 0
    %2410 = vmatprep.subr.bf16.mxu0 0
    %2411 = vmatpush1.bf16.msra.mxu0 0
    %2412 = vmatprep.subr.bf16.mxu0 0
    %2413 = vmatpush1.bf16.msra.mxu0 0
    %2414 = vmatprep.subr.bf16.mxu0 0
    %2415 = vmatpush1.bf16.msra.mxu0 0
    %2416 = vmatprep.subr.bf16.mxu0 0
    %2417 = vmatpush1.bf16.msra.mxu0 0
    %2418 = vmatprep.mubr.bf16.mxu0 0
    %2419 = vmatmul.mubr.bf16.gmra.mrb[0].mxu0 %v2381
    %v2420 = vpop.f32.mrb[0].mxu0
    %v2421 = vadd.f32 0.0, %v2420
    %v2422 = vpop.f32.mrb[0].mxu0
    %v2423 = vpop.f32.mrb[0].mxu0
    %v2424 = vpop.f32.mrb[0].mxu0
    %2425 = vdwg.mxu0
    %v2427 = vrot.slane %v2068, 4
    %2428 = vrot.lane.b32.xlu0 %v1770, 40
    %v2429 = vpop.permute.xlu0 %2428
    %v2431 = vsel %vm245, %v2427, 0
    %v2434 = vsel %vm746, %v2429, 0
    %2436 = vmatprep.subr.bf16.mxu0 0
    %2437 = vmatpush1.bf16.msra.mxu0 %v2434
    %2438 = vmatprep.subr.bf16.mxu0 0
    %2439 = vmatpush1.bf16.msra.mxu0 0
    %2440 = vmatprep.subr.bf16.mxu0 0
    %2441 = vmatpush1.bf16.msra.mxu0 0
    %2442 = vmatprep.subr.bf16.mxu0 0
    %2443 = vmatpush1.bf16.msra.mxu0 0
    %2444 = vmatprep.subr.bf16.mxu0 0
    %2445 = vmatpush1.bf16.msra.mxu0 0
    %2446 = vmatprep.subr.bf16.mxu0 0
    %2447 = vmatpush1.bf16.msra.mxu0 0
    %2448 = vmatprep.subr.bf16.mxu0 0
    %2449 = vmatpush1.bf16.msra.mxu0 0
    %2450 = vmatprep.subr.bf16.mxu0 0
    %2451 = vmatpush1.bf16.msra.mxu0 0
    %2452 = vmatprep.subr.bf16.mxu0 0
    %2453 = vmatpush1.bf16.msra.mxu0 0
    %2454 = vmatprep.subr.bf16.mxu0 0
    %2455 = vmatpush1.bf16.msra.mxu0 0
    %2456 = vmatprep.subr.bf16.mxu0 0
    %2457 = vmatpush1.bf16.msra.mxu0 0
    %2458 = vmatprep.subr.bf16.mxu0 0
    %2459 = vmatpush1.bf16.msra.mxu0 0
    %2460 = vmatprep.subr.bf16.mxu0 0
    %2461 = vmatpush1.bf16.msra.mxu0 0
    %2462 = vmatprep.subr.bf16.mxu0 0
    %2463 = vmatpush1.bf16.msra.mxu0 0
    %2464 = vmatprep.subr.bf16.mxu0 0
    %2465 = vmatpush1.bf16.msra.mxu0 0
    %2466 = vmatprep.subr.bf16.mxu0 0
    %2467 = vmatpush1.bf16.msra.mxu0 0
    %2468 = vmatprep.mubr.bf16.mxu0 0
    %2469 = vmatmul.mubr.bf16.gmra.mrb[0].mxu0 %v2431
    %v2470 = vpop.f32.mrb[0].mxu0
    %v2471 = vadd.f32 0.0, %v2470
    %v2472 = vpop.f32.mrb[0].mxu0
    %v2473 = vpop.f32.mrb[0].mxu0
    %v2474 = vpop.f32.mrb[0].mxu0
    %2475 = vdwg.mxu0
    %2477 = vrot.lane.b32.xlu0 %v2373, 8
    %v2478 = vpop.permute.xlu0 %2477
    %2481 = vrot.lane.b32.xlu0 %v2421, 16
    %v2482 = vpop.permute.xlu0 %2481
    %2485 = vrot.lane.b32.xlu0 %v2471, 24
    %v2486 = vpop.permute.xlu0 %2485
    %v2488 = vsel %vm245, %v2323, %v2478
    %v2489 = vsel %vm951, %v2488, %v2482
    %v2490 = vsel %vm953, %v2489, %v2486
    %v2491 = vpack.c.bf16 %v2490, %v2279
    %s2492 = scalar_lea.vmem %s5, 16
    %v2493 = vld [vmem:[%s2492] sm:$0xf]
    %v2494 = vld [vmem:[%s2492 + $0x4] sm:$0xf]
    %v2495 = vld [vmem:[%s2492 + $0x8] sm:$0xf]
    %v2496 = vld [vmem:[%s2492 + $0xc] sm:$0xf]
    %v2497 = vlaneseq
    %v2498 = vshrl.u32 %v2497, 7
    %v2499 = vsub.s32 3, %v2498
    %v2500 = vrot.slane %v38, %v2499
    %v2505 = vunpack.c.l.b16 %v2493
    %v2506 = vunpack.c.l.b16 %v2494
    %v2507 = vunpack.c.l.b16 %v2495
    %v2508 = vunpack.c.l.b16 %v2496
    %v2509 = vpack.c.b16 %v2506, %v2505
    %v2510 = vpack.c.b16 %v2508, %v2507
    %v2514 = vsel %vm136, %v2491, 0
    %2516 = vmatprep.subr.bf16.mxu0 0
    %2517 = vmatpush1.bf16.msra.mxu0 %v2509
    %2518 = vmatprep.subr.bf16.mxu0 0
    %2519 = vmatpush1.bf16.msra.mxu0 %v2510
    %2520 = vmatprep.subr.bf16.mxu0 0
    %2521 = vmatpush1.bf16.msra.mxu0 0
    %2522 = vmatprep.subr.bf16.mxu0 0
    %2523 = vmatpush1.bf16.msra.mxu0 0
    %2524 = vmatprep.subr.bf16.mxu0 0
    %2525 = vmatpush1.bf16.msra.mxu0 0
    %2526 = vmatprep.subr.bf16.mxu0 0
    %2527 = vmatpush1.bf16.msra.mxu0 0
    %2528 = vmatprep.subr.bf16.mxu0 0
    %2529 = vmatpush1.bf16.msra.mxu0 0
    %2530 = vmatprep.subr.bf16.mxu0 0
    %2531 = vmatpush1.bf16.msra.mxu0 0
    %2532 = vmatprep.subr.bf16.mxu0 0
    %2533 = vmatpush1.bf16.msra.mxu0 0
    %2534 = vmatprep.subr.bf16.mxu0 0
    %2535 = vmatpush1.bf16.msra.mxu0 0
    %2536 = vmatprep.subr.bf16.mxu0 0
    %2537 = vmatpush1.bf16.msra.mxu0 0
    %2538 = vmatprep.subr.bf16.mxu0 0
    %2539 = vmatpush1.bf16.msra.mxu0 0
    %2540 = vmatprep.subr.bf16.mxu0 0
    %2541 = vmatpush1.bf16.msra.mxu0 0
    %2542 = vmatprep.subr.bf16.mxu0 0
    %2543 = vmatpush1.bf16.msra.mxu0 0
    %2544 = vmatprep.subr.bf16.mxu0 0
    %2545 = vmatpush1.bf16.msra.mxu0 0
    %2546 = vmatprep.subr.bf16.mxu0 0
    %2547 = vmatpush1.bf16.msra.mxu0 0
    %2548 = vmatprep.mubr.bf16.mxu0 0
    %2549 = vmatmul.mubr.bf16.gmra.mrb[0].mxu0 %v2514
    %v2550 = vpop.f32.mrb[0].mxu0
    %v2551 = vadd.f32 %v2500, %v2550
    %v2552 = vpop.f32.mrb[0].mxu0
    %v2553 = vpop.f32.mrb[0].mxu0
    %v2554 = vadd.f32 %v2500, %v2553
    %v2555 = vpop.f32.mrb[0].mxu0
    %2556 = vdwg.mxu0
    %v2557 = vadd.f32 %v1502, %v2551
    %v2558 = vadd.f32 %v1503, %v2554
    %v2559 = vsel %vm136, %v2557, 0.0
    %2560 = vadd.xlane.f32.xlu0 %v2559
    %v2561 = vpop.xlane.xlu0 %2560
    %v2562 = vsel %vm136, %v2558, 0.0
    %2563 = vadd.xlane.f32.xlu0 %v2562
    %v2564 = vpop.xlane.xlu0 %2563
    %v2565 = vmul.f32 %v2561, %v143
    %v2566 = vmul.f32 %v2564, %v143
    %v2567 = vsub.f32 %v2557, %v2565
    %v2568 = vsub.f32 %v2558, %v2566
    %v2569 = vmul.f32 %v2567, %v2567
    %v2570 = vmul.f32 %v2568, %v2568
    %v2571 = vsel %vm136, %v2569, 0.0
    %2572 = vadd.xlane.f32.xlu0 %v2571
    %v2573 = vpop.xlane.xlu0 %2572
    %v2574 = vsel %vm136, %v2570, 0.0
    %2575 = vadd.xlane.f32.xlu0 %v2574
    %v2576 = vpop.xlane.xlu0 %2575
    %v2577 = vmul.f32 %v2573, %v143
    %v2578 = vmul.f32 %v2576, %v143
    %v2579 = vadd.f32 %v2577, 1e-12
    %v2580 = vadd.f32 %v2578, 1e-12
    %v2581 = vrsqrt.pop %v2579
    %v2582 = vrsqrt.pop %v2580
    %v2583 = vmul.f32 %v2567, %v2581
    %v2584 = vmul.f32 %v2568, %v2582
    %v2585 = vlaneseq
    %v2586 = vshrl.u32 %v2585, 7
    %v2587 = vsub.s32 4, %v2586
    %v2588 = vrot.slane %v38, %v2587
    %v2589 = vmul.f32 %v2583, %v2588
    %v2590 = vmul.f32 %v2584, %v2588
    %v2591 = vlaneseq
    %v2592 = vshrl.u32 %v2591, 7
    %v2593 = vsub.s32 5, %v2592
    %v2594 = vrot.slane %v38, %v2593
    %v2595 = vadd.f32 %v2589, %v2594
    %v2596 = vadd.f32 %v2590, %v2594
    %v2597 = vpack.c.bf16 %v2596, %v2595
    %s2598 = scalar_lea.vmem %s6, 16
    %v2599 = vld [vmem:[%s2598] sm:$0xf]
    %v2600 = vld [vmem:[%s2598 + $0x4] sm:$0xf]
    %v2601 = vld [vmem:[%s2598 + $0x8] sm:$0xf]
    %v2602 = vld [vmem:[%s2598 + $0xc] sm:$0xf]
    %v2603 = vlaneseq
    %v2604 = vshrl.u32 %v2603, 7
    %v2605 = vsub.s32 6, %v2604
    %v2606 = vrot.slane %v38, %v2605
    %v2611 = vunpack.c.l.b16 %v2599
    %v2612 = vunpack.c.l.b16 %v2600
    %v2613 = vunpack.c.l.b16 %v2601
    %v2614 = vunpack.c.l.b16 %v2602
    %v2615 = vpack.c.b16 %v2612, %v2611
    %v2616 = vpack.c.b16 %v2614, %v2613
    %v2620 = vsel %vm136, %v2597, 0
    %2622 = vmatprep.subr.bf16.mxu0 0
    %2623 = vmatpush1.bf16.msra.mxu0 %v2615
    %2624 = vmatprep.subr.bf16.mxu0 0
    %2625 = vmatpush1.bf16.msra.mxu0 %v2616
    %2626 = vmatprep.subr.bf16.mxu0 0
    %2627 = vmatpush1.bf16.msra.mxu0 0
    %2628 = vmatprep.subr.bf16.mxu0 0
    %2629 = vmatpush1.bf16.msra.mxu0 0
    %2630 = vmatprep.subr.bf16.mxu0 0
    %2631 = vmatpush1.bf16.msra.mxu0 0
    %2632 = vmatprep.subr.bf16.mxu0 0
    %2633 = vmatpush1.bf16.msra.mxu0 0
    %2634 = vmatprep.subr.bf16.mxu0 0
    %2635 = vmatpush1.bf16.msra.mxu0 0
    %2636 = vmatprep.subr.bf16.mxu0 0
    %2637 = vmatpush1.bf16.msra.mxu0 0
    %2638 = vmatprep.subr.bf16.mxu0 0
    %2639 = vmatpush1.bf16.msra.mxu0 0
    %2640 = vmatprep.subr.bf16.mxu0 0
    %2641 = vmatpush1.bf16.msra.mxu0 0
    %2642 = vmatprep.subr.bf16.mxu0 0
    %2643 = vmatpush1.bf16.msra.mxu0 0
    %2644 = vmatprep.subr.bf16.mxu0 0
    %2645 = vmatpush1.bf16.msra.mxu0 0
    %2646 = vmatprep.subr.bf16.mxu0 0
    %2647 = vmatpush1.bf16.msra.mxu0 0
    %2648 = vmatprep.subr.bf16.mxu0 0
    %2649 = vmatpush1.bf16.msra.mxu0 0
    %2650 = vmatprep.subr.bf16.mxu0 0
    %2651 = vmatpush1.bf16.msra.mxu0 0
    %2652 = vmatprep.subr.bf16.mxu0 0
    %2653 = vmatpush1.bf16.msra.mxu0 0
    %2654 = vmatprep.mubr.bf16.mxu0 0
    %2655 = vmatmul.mubr.bf16.gmra.mrb[0].mxu0 %v2620
    %v2656 = vpop.f32.mrb[0].mxu0
    %v2657 = vadd.f32 %v2606, %v2656
    %v2658 = vpop.f32.mrb[0].mxu0
    %v2659 = vpop.f32.mrb[0].mxu0
    %v2660 = vadd.f32 %v2606, %v2659
    %v2661 = vpop.f32.mrb[0].mxu0
    %2662 = vdwg.mxu0
    %v2663 = vmul.f32 %v2657, 0.5
    %v2664 = vmul.f32 %v2660, 0.5
    %v2665 = vmul.f32 %v2657, 0.044715
    %v2666 = vmul.f32 %v2660, 0.044715
    %v2667 = vmul.f32 %v2665, %v2657
    %v2668 = vmul.f32 %v2666, %v2660
    %v2669 = vmul.f32 %v2667, %v2657
    %v2670 = vmul.f32 %v2668, %v2660
    %v2671 = vadd.f32 %v2657, %v2669
    %v2672 = vadd.f32 %v2660, %v2670
    %v2673 = vmul.f32 %v2671, 0.7978846
    %v2674 = vmul.f32 %v2672, 0.7978846
    %v2675 = vtanh.pop %v2673
    %v2676 = vtanh.pop %v2674
    %v2677 = vadd.f32 %v2675, 1.0
    %v2678 = vadd.f32 %v2676, 1.0
    %v2679 = vmul.f32 %v2663, %v2677
    %v2680 = vmul.f32 %v2664, %v2678
    %v2681 = vpack.c.bf16 %v2680, %v2679
    %s2682 = scalar_lea.vmem %s7, 64
    %v2683 = vld [vmem:[%s2682] sm:$0xf]
    %v2684 = vld [vmem:[%s2682 + $0x4] sm:$0xf]
    %v2685 = vld [vmem:[%s2682 + $0x8] sm:$0xf]
    %v2686 = vld [vmem:[%s2682 + $0xc] sm:$0xf]
    %v2687 = vld [vmem:[%s2682 + $0x10] sm:$0xf]
    %v2688 = vld [vmem:[%s2682 + $0x14] sm:$0xf]
    %v2689 = vld [vmem:[%s2682 + $0x18] sm:$0xf]
    %v2690 = vld [vmem:[%s2682 + $0x1c] sm:$0xf]
    %v2691 = vld [vmem:[%s2682 + $0x20] sm:$0xf]
    %v2692 = vld [vmem:[%s2682 + $0x24] sm:$0xf]
    %v2693 = vld [vmem:[%s2682 + $0x28] sm:$0xf]
    %v2694 = vld [vmem:[%s2682 + $0x2c] sm:$0xf]
    %v2695 = vld [vmem:[%s2682 + $0x30] sm:$0xf]
    %v2696 = vld [vmem:[%s2682 + $0x34] sm:$0xf]
    %v2697 = vld [vmem:[%s2682 + $0x38] sm:$0xf]
    %v2698 = vld [vmem:[%s2682 + $0x3c] sm:$0xf]
    %v2699 = vlaneseq
    %v2700 = vshrl.u32 %v2699, 7
    %v2701 = vsub.s32 7, %v2700
    %v2702 = vrot.slane %v38, %v2701
    %v2719 = vunpack.c.l.b16 %v2683
    %v2720 = vunpack.c.l.b16 %v2684
    %v2721 = vunpack.c.l.b16 %v2685
    %v2722 = vunpack.c.l.b16 %v2686
    %v2723 = vunpack.c.l.b16 %v2687
    %v2724 = vunpack.c.l.b16 %v2688
    %v2725 = vunpack.c.l.b16 %v2689
    %v2726 = vunpack.c.l.b16 %v2690
    %v2727 = vunpack.c.l.b16 %v2691
    %v2728 = vunpack.c.l.b16 %v2692
    %v2729 = vunpack.c.l.b16 %v2693
    %v2730 = vunpack.c.l.b16 %v2694
    %v2731 = vunpack.c.l.b16 %v2695
    %v2732 = vunpack.c.l.b16 %v2696
    %v2733 = vunpack.c.l.b16 %v2697
    %v2734 = vunpack.c.l.b16 %v2698
    %v2735 = vpack.c.b16 %v2720, %v2719
    %v2736 = vpack.c.b16 %v2722, %v2721
    %v2737 = vpack.c.b16 %v2724, %v2723
    %v2738 = vpack.c.b16 %v2726, %v2725
    %v2739 = vpack.c.b16 %v2728, %v2727
    %v2740 = vpack.c.b16 %v2730, %v2729
    %v2741 = vpack.c.b16 %v2732, %v2731
    %v2742 = vpack.c.b16 %v2734, %v2733
    %2751 = vmatprep.subr.bf16.mxu0 0
    %2752 = vmatpush1.bf16.msra.mxu0 %v2735
    %2753 = vmatprep.subr.bf16.mxu0 0
    %2754 = vmatpush1.bf16.msra.mxu0 %v2736
    %2755 = vmatprep.subr.bf16.mxu0 0
    %2756 = vmatpush1.bf16.msra.mxu0 %v2737
    %2757 = vmatprep.subr.bf16.mxu0 0
    %2758 = vmatpush1.bf16.msra.mxu0 %v2738
    %2759 = vmatprep.subr.bf16.mxu0 0
    %2760 = vmatpush1.bf16.msra.mxu0 %v2739
    %2761 = vmatprep.subr.bf16.mxu0 0
    %2762 = vmatpush1.bf16.msra.mxu0 %v2740
    %2763 = vmatprep.subr.bf16.mxu0 0
    %2764 = vmatpush1.bf16.msra.mxu0 %v2741
    %2765 = vmatprep.subr.bf16.mxu0 0
    %2766 = vmatpush1.bf16.msra.mxu0 %v2742
    %2767 = vmatprep.subr.bf16.mxu0 0
    %2768 = vmatpush1.bf16.msra.mxu0 0
    %2769 = vmatprep.subr.bf16.mxu0 0
    %2770 = vmatpush1.bf16.msra.mxu0 0
    %2771 = vmatprep.subr.bf16.mxu0 0
    %2772 = vmatpush1.bf16.msra.mxu0 0
    %2773 = vmatprep.subr.bf16.mxu0 0
    %2774 = vmatpush1.bf16.msra.mxu0 0
    %2775 = vmatprep.subr.bf16.mxu0 0
    %2776 = vmatpush1.bf16.msra.mxu0 0
    %2777 = vmatprep.subr.bf16.mxu0 0
    %2778 = vmatpush1.bf16.msra.mxu0 0
    %2779 = vmatprep.subr.bf16.mxu0 0
    %2780 = vmatpush1.bf16.msra.mxu0 0
    %2781 = vmatprep.subr.bf16.mxu0 0
    %2782 = vmatpush1.bf16.msra.mxu0 0
    %2783 = vmatprep.mubr.bf16.mxu0 0
    %2784 = vmatmul.mubr.bf16.gmra.mrb[0].mxu0 %v2681
    %v2785 = vpop.f32.mrb[0].mxu0
    %v2786 = vadd.f32 %v2702, %v2785
    %v2787 = vpop.f32.mrb[0].mxu0
    %v2788 = vpop.f32.mrb[0].mxu0
    %v2789 = vadd.f32 %v2702, %v2788
    %v2790 = vpop.f32.mrb[0].mxu0
    %2791 = vdwg.mxu0
    %v2792 = vadd.f32 %v2595, %v2786
    %v2793 = vadd.f32 %v2596, %v2789
    %v2794 = vsel %vm136, %v2792, 0.0
    %2795 = vadd.xlane.f32.xlu0 %v2794
    %v2796 = vpop.xlane.xlu0 %2795
    %v2797 = vsel %vm136, %v2793, 0.0
    %2798 = vadd.xlane.f32.xlu0 %v2797
    %v2799 = vpop.xlane.xlu0 %2798
    %v2800 = vmul.f32 %v2796, %v143
    %v2801 = vmul.f32 %v2799, %v143
    %v2802 = vsub.f32 %v2792, %v2800
    %v2803 = vsub.f32 %v2793, %v2801
    %v2804 = vmul.f32 %v2802, %v2802
    %v2805 = vmul.f32 %v2803, %v2803
    %v2806 = vsel %vm136, %v2804, 0.0
    %2807 = vadd.xlane.f32.xlu0 %v2806
    %v2808 = vpop.xlane.xlu0 %2807
    %v2809 = vsel %vm136, %v2805, 0.0
    %2810 = vadd.xlane.f32.xlu0 %v2809
    %v2811 = vpop.xlane.xlu0 %2810
    %v2812 = vmul.f32 %v2808, %v143
    %v2813 = vmul.f32 %v2811, %v143
    %v2814 = vadd.f32 %v2812, 1e-12
    %v2815 = vadd.f32 %v2813, 1e-12
    %v2816 = vrsqrt.pop %v2814
    %v2817 = vrsqrt.pop %v2815
    %v2818 = vmul.f32 %v2802, %v2816
    %v2819 = vmul.f32 %v2803, %v2817
    %v2820 = vlaneseq
    %v2821 = vshrl.u32 %v2820, 7
    %v2822 = vsub.s32 0, %v2821
    %v2823 = vrot.slane %v39, %v2822
    %v2824 = vmul.f32 %v2818, %v2823
    %v2825 = vmul.f32 %v2819, %v2823
    %v2826 = vlaneseq
    %v2827 = vshrl.u32 %v2826, 7
    %v2828 = vsub.s32 1, %v2827
    %v2829 = vrot.slane %v39, %v2828
    %v2830 = vadd.f32 %v2824, %v2829
    %v2831 = vadd.f32 %v2825, %v2829
    %v2833 = vrot.slane %v2831, 7
    %v2835 = vsel %vm91, %v2830, %v2833
    %v2836 = vpack.c.bf16 %v2835, %v2835
    %v2837 = vld [vmem:[%s8] sm:$0xf]
    %v2838 = vld [vmem:[%s8 + $0x4] sm:$0xf]
    %v2839 = vld [vmem:[%s8 + $0x8] sm:$0xf]
    %v2840 = vld [vmem:[%s8 + $0xc] sm:$0xf]
    %v2841 = vlaneseq
    %v2842 = vshrl.u32 %v2841, 7
    %v2843 = vsub.s32 2, %v2842
    %v2844 = vrot.slane %v39, %v2843
    %v2849 = vunpack.c.l.b16 %v2837
    %v2850 = vunpack.c.l.b16 %v2838
    %v2851 = vunpack.c.l.b16 %v2839
    %v2852 = vunpack.c.l.b16 %v2840
    %v2853 = vpack.c.b16 %v2850, %v2849
    %v2854 = vpack.c.b16 %v2852, %v2851
    %v2858 = vsel %vm136, %v2836, 0
    %2860 = vmatprep.subr.bf16.mxu0 0
    %2861 = vmatpush1.bf16.msra.mxu0 %v2853
    %2862 = vmatprep.subr.bf16.mxu0 0
    %2863 = vmatpush1.bf16.msra.mxu0 %v2854
    %2864 = vmatprep.subr.bf16.mxu0 0
    %2865 = vmatpush1.bf16.msra.mxu0 0
    %2866 = vmatprep.subr.bf16.mxu0 0
    %2867 = vmatpush1.bf16.msra.mxu0 0
    %2868 = vmatprep.subr.bf16.mxu0 0
    %2869 = vmatpush1.bf16.msra.mxu0 0
    %2870 = vmatprep.subr.bf16.mxu0 0
    %2871 = vmatpush1.bf16.msra.mxu0 0
    %2872 = vmatprep.subr.bf16.mxu0 0
    %2873 = vmatpush1.bf16.msra.mxu0 0
    %2874 = vmatprep.subr.bf16.mxu0 0
    %2875 = vmatpush1.bf16.msra.mxu0 0
    %2876 = vmatprep.subr.bf16.mxu0 0
    %2877 = vmatpush1.bf16.msra.mxu0 0
    %2878 = vmatprep.subr.bf16.mxu0 0
    %2879 = vmatpush1.bf16.msra.mxu0 0
    %2880 = vmatprep.subr.bf16.mxu0 0
    %2881 = vmatpush1.bf16.msra.mxu0 0
    %2882 = vmatprep.subr.bf16.mxu0 0
    %2883 = vmatpush1.bf16.msra.mxu0 0
    %2884 = vmatprep.subr.bf16.mxu0 0
    %2885 = vmatpush1.bf16.msra.mxu0 0
    %2886 = vmatprep.subr.bf16.mxu0 0
    %2887 = vmatpush1.bf16.msra.mxu0 0
    %2888 = vmatprep.subr.bf16.mxu0 0
    %2889 = vmatpush1.bf16.msra.mxu0 0
    %2890 = vmatprep.subr.bf16.mxu0 0
    %2891 = vmatpush1.bf16.msra.mxu0 0
    %2892 = vmatprep.mubr.bf16.mxu0 0
    %2893 = vmatmul.mubr.bf16.gmra.mrb[0].mxu0 %v2858
    %v2894 = vpop.f32.mrb[0].mxu0
    %v2895 = vadd.f32 %v2844, %v2894
    %v2896 = vpop.f32.mrb[0].mxu0
    %v2897 = vpop.f32.mrb[0].mxu0
    %v2898 = vpop.f32.mrb[0].mxu0
    %2899 = vdwg.mxu0
    %v2900 = vtanh.pop %v2895
    %v2901 = vpack.c.bf16 %v2900, %v2900
    %v2902 = vld [vmem:[%s9] sm:$0xf]
    %v2903 = vld [vmem:[%s9 + $0x4] sm:$0xf]
    %v2904 = vld [vmem:[%s9 + $0x8] sm:$0xf]
    %v2905 = vld [vmem:[%s9 + $0xc] sm:$0xf]
    %v2906 = vlaneseq
    %v2907 = vshrl.u32 %v2906, 7
    %v2908 = vsub.s32 3, %v2907
    %v2909 = vrot.slane %v39, %v2908
    %v2914 = vunpack.c.l.b16 %v2902
    %v2915 = vunpack.c.l.b16 %v2903
    %v2916 = vunpack.c.l.b16 %v2904
    %v2917 = vunpack.c.l.b16 %v2905
    %v2918 = vpack.c.b16 %v2915, %v2914
    %v2919 = vpack.c.b16 %v2917, %v2916
    %v2923 = vsel %vm136, %v2901, 0
    %2925 = vmatprep.subr.bf16.mxu0 0
    %2926 = vmatpush1.bf16.msra.mxu0 %v2918
    %2927 = vmatprep.subr.bf16.mxu0 0
    %2928 = vmatpush1.bf16.msra.mxu0 %v2919
    %2929 = vmatprep.subr.bf16.mxu0 0
    %2930 = vmatpush1.bf16.msra.mxu0 0
    %2931 = vmatprep.subr.bf16.mxu0 0
    %2932 = vmatpush1.bf16.msra.mxu0 0
    %2933 = vmatprep.subr.bf16.mxu0 0
    %2934 = vmatpush1.bf16.msra.mxu0 0
    %2935 = vmatprep.subr.bf16.mxu0 0
    %2936 = vmatpush1.bf16.msra.mxu0 0
    %2937 = vmatprep.subr.bf16.mxu0 0
    %2938 = vmatpush1.bf16.msra.mxu0 0
    %2939 = vmatprep.subr.bf16.mxu0 0
    %2940 = vmatpush1.bf16.msra.mxu0 0
    %2941 = vmatprep.subr.bf16.mxu0 0
    %2942 = vmatpush1.bf16.msra.mxu0 0
    %2943 = vmatprep.subr.bf16.mxu0 0
    %2944 = vmatpush1.bf16.msra.mxu0 0
    %2945 = vmatprep.subr.bf16.mxu0 0
    %2946 = vmatpush1.bf16.msra.mxu0 0
    %2947 = vmatprep.subr.bf16.mxu0 0
    %2948 = vmatpush1.bf16.msra.mxu0 0
    %2949 = vmatprep.subr.bf16.mxu0 0
    %2950 = vmatpush1.bf16.msra.mxu0 0
    %2951 = vmatprep.subr.bf16.mxu0 0
    %2952 = vmatpush1.bf16.msra.mxu0 0
    %2953 = vmatprep.subr.bf16.mxu0 0
    %2954 = vmatpush1.bf16.msra.mxu0 0
    %2955 = vmatprep.subr.bf16.mxu0 0
    %2956 = vmatpush1.bf16.msra.mxu0 0
    %2957 = vmatprep.mubr.bf16.mxu0 0
    %2958 = vmatmul.mubr.bf16.gmra.mrb[0].mxu0 %v2923
    %v2959 = vpop.f32.mrb[0].mxu0
    %v2960 = vadd.f32 %v2909, %v2959
    %v2961 = vpop.f32.mrb[0].mxu0
    %v2962 = vpop.f32.mrb[0].mxu0
    %v2963 = vpop.f32.mrb[0].mxu0
    %2964 = vdwg.mxu0
    %vm2965 = vcmask 9216
    %2966 = vst.msk [vmem:[#allocation2] sm:$0x3] %vm2965, %v2960
    // Predicated region
    $region42: #{bert_for_sa_forward.1} parent=1 // pred_check
      _
    $region43: #{bert_for_sa_forward.1} parent=1 // pred_check_branch
      %2968 = sbr.rel (0) target = $region45
    $region44: #{bert_for_sa_forward.1} parent=1 // pred_region
      %s2970 = ssub.s32 32, 32
      %2971 = vsyncadd [#allocation3], %s2970
      %s2973 = sshll.u32 [#allocation2], 4
      %s2974 = int_to_ptr.vmem [resolvable:$true] %s2973
      %2976 = dma.vmem_to_hbm [thread:$0]  %s2974, 32, %s10, [#allocation3]
    $region45: #{bert_for_sa_forward.1} parent=1 // pred_fallthru
      _
    // Predicated region
    $region46: #{bert_for_sa_forward.1} parent=1 // pred_check
      _
    $region47: #{bert_for_sa_forward.1} parent=1 // pred_check_branch
      %2978 = sbr.rel (0) target = $region49
    $region48: #{bert_for_sa_forward.1} parent=1 // pred_region
      %2979 = dma.done [#allocation3], 32
    $region49: #{bert_for_sa_forward.1} parent=1 // pred_fallthru
      _
    %2980 = vsyncpa [#allocation3], 1

</llo_original>
